<compile_context>
chip_gen: v7x
topology: tpu7x:2x2x1
jax: 0.10.0
libtpu: 0.0.40
codegen_flags: <defaults>
</compile_context>

<pallas_src>
import functools

import jax
import jax.numpy as jnp
from jax.experimental import pallas as pl
from jax.experimental.pallas import tpu as pltpu


# ----------------------------- configuration ---------------------------------

def _choose_act_dtype():
    """bf16 matmul operands / HBM activations on v6e & v7x; f32 elsewhere (v5e has no bf16 VPU/EUP,
    and the epilogue stays f32 everywhere)."""
    try:
        kind = jax.devices()[0].device_kind.lower()
    except Exception:
        return jnp.float32
    if ("v6" in kind) or ("v7" in kind):
        return jnp.bfloat16
    return jnp.float32


def _pad_mult(dtype):
    # sublane packing: (8,128) native tiles for f32, (16,128) for bf16
    return 16 if dtype == jnp.bfloat16 else 8


def _padc(n, mult):
    return ((n + mult - 1) // mult) * mult


def _itemsize(dtype):
    return 2 if dtype == jnp.bfloat16 else 4


# ----------------------------- in-kernel helpers ------------------------------

def _leaky(y):
    # slope 0.1, as in the module (F.leaky_relu(x, 0.1)); maximum instead of where (one VALU op).
    return jnp.maximum(y, 0.1 * y)


def _conv_branch(acc, x, w_ref, halo_ref, *, K, L):
    """'same' conv of one concat branch, accumulated into `acc` (f32, (Cout_p, L)); acc=None -> init.

    x        : (Cin_p, L) value; cast to the weight dtype so the MXU runs bf16 where enabled
    w_ref    : (Cout_p, K*Cin_p) Ref, taps flattened k-major / ci-minor
    halo_ref : (Cin_p, L+K-1) VMEM scratch; halo built with ref stores (no lane-concat relayout)
    """
    cp = x.shape[0]
    x = x.astype(w_ref.dtype)

    def add(a, d):
        return d if a is None else a + d

    if K == 1:
        return add(acc, jnp.dot(w_ref[...], x, preferred_element_type=jnp.float32))

    pad = K // 2
    halo_ref[:, pl.ds(0, pad)] = jnp.zeros((cp, pad), w_ref.dtype)
    halo_ref[:, pl.ds(L + pad, K - 1 - pad)] = jnp.zeros((cp, K - 1 - pad), w_ref.dtype)
    halo_ref[:, pl.ds(pad, L)] = x

    if cp >= 128:
        # Contraction already saturates the MXU per tap: K accumulating matmuls instead of an
        # 11x unfolded activation copy (saves VMEM on v7x, vst slots on v5e).
        for k in range(K):
            acc = add(acc, jnp.dot(w_ref[:, pl.ds(k * cp, cp)],
                                   halo_ref[:, pl.ds(k, L)],
                                   preferred_element_type=jnp.float32))
        return acc

    # Shallow layers (Cin_p < 128): unfold the K taps along the contraction dim so ONE MXU matmul
    # gets contraction K*Cin_p instead of K tiny contraction-Cin_p matmuls.
    xunf = jnp.concatenate([halo_ref[:, pl.ds(k, L)] for k in range(K)], axis=0)
    return add(acc, jnp.dot(w_ref[...], xunf, preferred_element_type=jnp.float32))


# --------------------------------- kernels ------------------------------------

def _encoder_kernel(x_ref, w_ref, scale_ref, bias_ref, dmat_ref,
                    y_ref, ydec_ref, halo_ref, *, K, L):
    acc = _conv_branch(None, x_ref[0], w_ref, halo_ref, K=K, L=L)
    z = acc * scale_ref[...] + bias_ref[...]                       # folded BN (eval), f32 epilogue
    y = _leaky(z)
    y_ref[0] = y.astype(y_ref.dtype)                               # full-rate skip
    # Fused stride-2 decimation via a one-hot selection matmul: the half-rate activation never
    # round-trips HBM between pallas_calls.  TODO(synk): polyphase / strided store at large L.
    ydec_ref[0] = jnp.dot(y, dmat_ref[...],
                          preferred_element_type=jnp.float32).astype(ydec_ref.dtype)


def _conv_act_kernel(x_ref, w_ref, scale_ref, bias_ref, o_ref, halo_ref, *, K, L):
    acc = _conv_branch(None, x_ref[0], w_ref, halo_ref, K=K, L=L)
    z = acc * scale_ref[...] + bias_ref[...]
    o_ref[0] = _leaky(z).astype(o_ref.dtype)


def _decoder_kernel(xlow_ref, skip_ref, umat_ref, wup_ref, wskip_ref, scale_ref, bias_ref,
                    o_ref, up_halo_ref, skip_halo_ref, *, K, L):
    # Fused x2 linear upsample (align_corners=False) as a banded matmul on the low-rate input:
    # the 2x-length signal never round-trips HBM.  TODO(synk): polyphase form at large L.
    u = jnp.dot(xlow_ref[0].astype(jnp.float32), umat_ref[...],
                preferred_element_type=jnp.float32)                # (Cup_p, L)
    acc = _conv_branch(None, u, wup_ref, up_halo_ref, K=K, L=L)
    # Channel concat [upsampled, skip] fused via split weights (never materialized in HBM).
    acc = _conv_branch(acc, skip_ref[0], wskip_ref, skip_halo_ref, K=K, L=L)
    z = acc * scale_ref[...] + bias_ref[...]
    o_ref[0] = _leaky(z).astype(o_ref.dtype)


def _out_kernel(x_ref, xin_ref, wx_ref, win_ref, bias_ref, o_ref):
    acc = jnp.dot(wx_ref[...], x_ref[0].astype(wx_ref.dtype),
                  preferred_element_type=jnp.float32)
    acc = acc + jnp.dot(win_ref[...], xin_ref[0].astype(win_ref.dtype),
                        preferred_element_type=jnp.float32)
    o_ref[0] = jnp.tanh(acc + bias_ref[...]).astype(o_ref.dtype)


# ------------------------------ pallas_call wrappers ---------------------------

def _cost(flops, transcendentals, nbytes):
    return pl.CostEstimate(flops=int(flops), transcendentals=int(transcendentals),
                           bytes_accessed=int(nbytes))


def _in_bytes(*arrays):
    return sum(int(a.size) * int(a.dtype.itemsize) for a in arrays)


def encoder_layer(x, w, scale, bias, dmat, *, K=11):
    n, cin_p, l = x.shape
    cout_p = w.shape[0]
    kern = functools.partial(_encoder_kernel, K=K, L=l)
    flops = 2 * n * cout_p * l * (K * cin_p + l // 2)
    nbytes = _in_bytes(x, w, scale, bias, dmat) + n * cout_p * (l + l // 2) * _itemsize(x.dtype)
    return pl.pallas_call(
        kern,
        out_shape=(jax.ShapeDtypeStruct((n, cout_p, l), x.dtype),
                   jax.ShapeDtypeStruct((n, cout_p, l // 2), x.dtype)),
        grid=(n,),
        in_specs=[
            pl.BlockSpec((1, cin_p, l), lambda i: (i, 0, 0)),
            pl.BlockSpec(w.shape, lambda i: (0, 0)),
            pl.BlockSpec(scale.shape, lambda i: (0, 0)),
            pl.BlockSpec(bias.shape, lambda i: (0, 0)),
            pl.BlockSpec(dmat.shape, lambda i: (0, 0)),
        ],
        out_specs=(
            pl.BlockSpec((1, cout_p, l), lambda i: (i, 0, 0)),
            pl.BlockSpec((1, cout_p, l // 2), lambda i: (i, 0, 0)),
        ),
        scratch_shapes=[pltpu.VMEM((cin_p, l + K - 1), w.dtype)],
        compiler_params=pltpu.CompilerParams(dimension_semantics=("parallel",)),
        cost_estimate=_cost(flops, 0, nbytes),
    )(x, w, scale, bias, dmat)


def conv_act_layer(x, w, scale, bias, *, K=11):
    n, cin_p, l = x.shape
    cout_p = w.shape[0]
    kern = functools.partial(_conv_act_kernel, K=K, L=l)
    flops = 2 * n * cout_p * l * K * cin_p
    nbytes = _in_bytes(x, w, scale, bias) + n * cout_p * l * _itemsize(x.dtype)
    return pl.pallas_call(
        kern,
        out_shape=jax.ShapeDtypeStruct((n, cout_p, l), x.dtype),
        grid=(n,),
        in_specs=[
            pl.BlockSpec((1, cin_p, l), lambda i: (i, 0, 0)),
            pl.BlockSpec(w.shape, lambda i: (0, 0)),
            pl.BlockSpec(scale.shape, lambda i: (0, 0)),
            pl.BlockSpec(bias.shape, lambda i: (0, 0)),
        ],
        out_specs=pl.BlockSpec((1, cout_p, l), lambda i: (i, 0, 0)),
        scratch_shapes=[pltpu.VMEM((cin_p, l + K - 1), w.dtype)],
        compiler_params=pltpu.CompilerParams(dimension_semantics=("parallel",)),
        cost_estimate=_cost(flops, 0, nbytes),
    )(x, w, scale, bias)


def decoder_layer(xlow, skip, umat, w_up, w_skip, scale, bias, *, K=11):
    n, cup_p, llow = xlow.shape
    _, cskip_p, l = skip.shape                    # l == 2 * llow
    cout_p = w_up.shape[0]
    kern = functools.partial(_decoder_kernel, K=K, L=l)
    flops = 2 * n * (cup_p * llow * l + cout_p * l * K * (cup_p + cskip_p))
    nbytes = _in_bytes(xlow, skip, umat, w_up, w_skip, scale, bias) \
        + n * cout_p * l * _itemsize(xlow.dtype)
    return pl.pallas_call(
        kern,
        out_shape=jax.ShapeDtypeStruct((n, cout_p, l), xlow.dtype),
        grid=(n,),
        in_specs=[
            pl.BlockSpec((1, cup_p, llow), lambda i: (i, 0, 0)),
            pl.BlockSpec((1, cskip_p, l), lambda i: (i, 0, 0)),
            pl.BlockSpec(umat.shape, lambda i: (0, 0)),
            pl.BlockSpec(w_up.shape, lambda i: (0, 0)),
            pl.BlockSpec(w_skip.shape, lambda i: (0, 0)),
            pl.BlockSpec(scale.shape, lambda i: (0, 0)),
            pl.BlockSpec(bias.shape, lambda i: (0, 0)),
        ],
        out_specs=pl.BlockSpec((1, cout_p, l), lambda i: (i, 0, 0)),
        scratch_shapes=[pltpu.VMEM((cup_p, l + K - 1), w_up.dtype),
                        pltpu.VMEM((cskip_p, l + K - 1), w_skip.dtype)],
        compiler_params=pltpu.CompilerParams(dimension_semantics=("parallel",)),
        cost_estimate=_cost(flops, 0, nbytes),
    )(xlow, skip, umat, w_up, w_skip, scale, bias)


def out_layer(x, xin, w_x, w_in, bias):
    n, cx_p, l = x.shape
    _, cin_p, _ = xin.shape
    cout_p = w_x.shape[0]
    flops = 2 * n * cout_p * l * (cx_p + cin_p)
    nbytes = _in_bytes(x, xin, w_x, w_in, bias) + n * cout_p * l * 4
    return pl.pallas_call(
        _out_kernel,
        out_shape=jax.ShapeDtypeStruct((n, cout_p, l), jnp.float32),
        grid=(n,),
        in_specs=[
            pl.BlockSpec((1, cx_p, l), lambda i: (i, 0, 0)),
            pl.BlockSpec((1, cin_p, l), lambda i: (i, 0, 0)),
            pl.BlockSpec(w_x.shape, lambda i: (0, 0)),
            pl.BlockSpec(w_in.shape, lambda i: (0, 0)),
            pl.BlockSpec(bias.shape, lambda i: (0, 0)),
        ],
        out_specs=pl.BlockSpec((1, cout_p, l), lambda i: (i, 0, 0)),
        compiler_params=pltpu.CompilerParams(dimension_semantics=("parallel",)),
        cost_estimate=_cost(flops, n * cout_p * l, nbytes),
    )(x, xin, w_x, w_in, bias)


# --------------------------- parameter construction ---------------------------

def make_decimation_matrix(l):
    """x[:, ::2] == x @ D,  D: (l, l//2) one-hot."""
    d = jnp.zeros((l, l // 2), jnp.float32)
    m = jnp.arange(l // 2)
    return d.at[2 * m, m].set(1.0)


def make_upsample_matrix(l):
    """F.upsample(scale_factor=2, mode='linear', align_corners=False) == x @ U,  U: (l, 2l).

    out[2m]   = 0.75*x[m] + 0.25*x[max(m-1,0)]
    out[2m+1] = 0.75*x[m] + 0.25*x[min(m+1,l-1)]
    """
    u = jnp.zeros((l, 2 * l), jnp.float32)
    m = jnp.arange(l)
    u = u.at[m, 2 * m].add(0.75)
    u = u.at[jnp.maximum(m - 1, 0), 2 * m].add(0.25)
    u = u.at[m, 2 * m + 1].add(0.75)
    u = u.at[jnp.minimum(m + 1, l - 1), 2 * m + 1].add(0.25)
    return u


def make_conv_bn_params(key, cin_list, cout, ksize, *, cmult, w_dtype, with_bn=True):
    """Deterministic conv weight/bias + eval-mode BN folded into a per-channel scale/bias.

    The conv weight over the full (concatenated) input is split along Cin into one block per
    concat branch, each pre-padded (channels -> mult of cmult) and pre-flattened to
    (Cout_pad, K*Cin_pad), k-major / ci-minor, matching the kernel's unfold ordering.
    """
    cin_total = sum(cin_list)
    k = jax.random.split(key, 6)
    w = 0.05 * jax.random.normal(k[0], (ksize, cin_total, cout), jnp.float32)
    b_conv = 0.05 * jax.random.normal(k[1], (cout,), jnp.float32)
    if with_bn:
        gamma = 1.0 + 0.01 * jax.random.normal(k[2], (cout,), jnp.float32)
        beta = 0.01 * jax.random.normal(k[3], (cout,), jnp.float32)
        r_mean = 0.01 * jax.random.normal(k[4], (cout,), jnp.float32)
        r_var = 1.0 + 0.1 * jax.random.uniform(k[5], (cout,), jnp.float32)
        scale = gamma / jnp.sqrt(r_var + 1e-5)
        bias = (b_conv - r_mean) * scale + beta
    else:
        scale = jnp.ones((cout,), jnp.float32)
        bias = b_conv

    cout_p = _padc(cout, cmult)
    w_flats = []
    off = 0
    for cin in cin_list:
        wi = w[:, off:off + cin, :]
        off += cin
        cp = _padc(cin, cmult)
        wi = jnp.pad(wi, ((0, 0), (0, cp - cin), (0, cout_p - cout)))   # zero padded channels
        w_flats.append(wi.reshape(ksize * cp, cout_p).T.astype(w_dtype))
    # padded output rows get scale=0 / bias=0 -> they stay exactly 0 (leaky(0)=0, tanh(0)=0)
    scale_p = jnp.pad(scale, (0, cout_p - cout)).reshape(cout_p, 1)
    bias_p = jnp.pad(bias, (0, cout_p - cout)).reshape(cout_p, 1)
    return w_flats, scale_p, bias_p


def build_unet_params(nlayers, nefilters, seq_len, key, act_dtype):
    filter_size = 11
    merge_filter_size = 11
    cmult = _pad_mult(act_dtype)
    echannelin = [1] + [(i + 1) * nefilters for i in range(nlayers - 1)]
    echannelout = [(i + 1) * nefilters for i in range(nlayers)]
    dchannelout = echannelout[::-1]
    dec_in_splits = []
    for i in range(nlayers):
        up_c = echannelout[-1] if i == 0 else dchannelout[i - 1]
        skip_c = echannelout[nlayers - i - 1]
        dec_in_splits.append([up_c, skip_c])

    keys = jax.random.split(key, 2 * nlayers + 2)
    params = {"enc": [], "dec": [], "dmat": [], "umat": []}
    for i in range(nlayers):
        wf, s, b = make_conv_bn_params(keys[i], [echannelin[i]], echannelout[i], filter_size,
                                       cmult=cmult, w_dtype=act_dtype)
        params["enc"].append((wf[0], s, b))
        params["dmat"].append(make_decimation_matrix(seq_len // (2 ** i)))
    for i in range(nlayers):
        wf, s, b = make_conv_bn_params(keys[nlayers + i], dec_in_splits[i], dchannelout[i],
                                       merge_filter_size, cmult=cmult, w_dtype=act_dtype)
        params["dec"].append((wf[0], wf[1], s, b))
        params["umat"].append(make_upsample_matrix(seq_len // (2 ** (nlayers - i))))
    wf, s, b = make_conv_bn_params(keys[2 * nlayers], [echannelout[-1]], echannelout[-1],
                                   filter_size, cmult=cmult, w_dtype=act_dtype)
    params["middle"] = (wf[0], s, b)
    wf, _, b = make_conv_bn_params(keys[2 * nlayers + 1], [nefilters, 1], 1, 1,
                                   cmult=cmult, w_dtype=act_dtype, with_bn=False)
    params["out"] = (wf[0], wf[1], b)
    return params


# ------------------------------- forward pass ----------------------------------

def unet_forward(x_ncl, params, *, nlayers, act_dtype, cmult):
    """x_ncl: (N, 1, T) float32 (PyTorch NCL layout). Returns (N, 1, T) float32."""
    xin = jnp.pad(x_ncl, ((0, 0), (0, cmult - 1), (0, 0))).astype(act_dtype)
    x = xin
    skips = []
    for i in range(nlayers):
        w, s, b = params["enc"][i]
        skip, x = encoder_layer(x, w, s, b, params["dmat"][i], K=11)   # conv+BN+leaky, ::2 fused
        skips.append(skip)
    w, s, b = params["middle"]
    x = conv_act_layer(x, w, s, b, K=11)
    for i in range(nlayers):
        w_up, w_skip, s, b = params["dec"][i]
        x = decoder_layer(x, skips[nlayers - 1 - i], params["umat"][i],
                          w_up, w_skip, s, b, K=11)                     # upsample + concat fused
    w_x, w_in, b = params["out"]
    y = out_layer(x, xin, w_x, w_in, b)                                 # K=1 conv + tanh
    return y[:, :1, :].astype(jnp.float32)                              # drop padded channels


# ----------------------------------- main ---------------------------------------

if __name__ == "__main__":
    LayerNumber = 3            # small, consistent with the module
    NumberofFeatureChannel = 4
    B, T = 2, 128              # T divisible by 2**LayerNumber

    act_dtype = _choose_act_dtype()
    cmult = _pad_mult(act_dtype)

    root = jax.random.PRNGKey(0)
    k_x, k_p = jax.random.split(root)
    x = jax.random.normal(k_x, (B, 1, T), jnp.float32)      # PyTorch NCL input
    params = build_unet_params(LayerNumber, NumberofFeatureChannel, T, k_p, act_dtype)

    fwd = jax.jit(functools.partial(unet_forward, nlayers=LayerNumber,
                                    act_dtype=act_dtype, cmult=cmult))
    y = fwd(x, params)
    jax.block_until_ready(y)

    assert y.shape == (B, 1, T), y.shape
    assert bool(jnp.all(jnp.isfinite(y)))
    print("KERNEL_OK")
</pallas_src>

<mosaic_0001>
module attributes {stable_mosaic.version = 11 : i64} {
  func.func @_encoder_kernel(%arg0: i32, %arg1: memref<1x8x128xf32, #tpu.memory_space<vmem>>, %arg2: memref<8x88xf32, #tpu.memory_space<vmem>>, %arg3: memref<8x1xf32, #tpu.memory_space<vmem>>, %arg4: memref<8x1xf32, #tpu.memory_space<vmem>>, %arg5: memref<128x64xf32, #tpu.memory_space<vmem>>, %arg6: memref<1x8x128xf32, #tpu.memory_space<vmem>>, %arg7: memref<1x8x64xf32, #tpu.memory_space<vmem>>, %arg8: memref<8x138xf32, #tpu.memory_space<vmem>>) attributes {dimension_semantics = [#tpu.dimension_semantics<parallel>], iteration_bounds = array<i64: 2>, scalar_prefetch = 0 : i64, scratch_operands = 1 : i64, tpu.core_type = #tpu.core_type<tc>, window_params = [{transform_indices = @transform_0, window_bounds = array<i64: 1, 8, 128>}, {pipeline_mode = #tpu.pipeline_mode<synchronous>, transform_indices = @transform_1, window_bounds = array<i64: 8, 88>}, {pipeline_mode = #tpu.pipeline_mode<synchronous>, transform_indices = @transform_2, window_bounds = array<i64: 8, 1>}, {pipeline_mode = #tpu.pipeline_mode<synchronous>, transform_indices = @transform_3, window_bounds = array<i64: 8, 1>}, {pipeline_mode = #tpu.pipeline_mode<synchronous>, transform_indices = @transform_4, window_bounds = array<i64: 128, 64>}, {transform_indices = @transform_5, window_bounds = array<i64: 1, 8, 128>}, {transform_indices = @transform_6, window_bounds = array<i64: 1, 8, 64>}]} {
    %c0 = arith.constant 0 : index
    %c0_0 = arith.constant 0 : index
    %c0_1 = arith.constant 0 : index
    %0 = vector.load %arg1[%c0, %c0_0, %c0_1] : memref<1x8x128xf32, #tpu.memory_space<vmem>>, vector<1x8x128xf32>
    %1 = vector.shape_cast %0 : vector<1x8x128xf32> to vector<8x128xf32>
    %cst = arith.constant 0.000000e+00 : f32
    %2 = vector.broadcast %cst : f32 to vector<8x5xf32>
    %c0_2 = arith.constant 0 : index
    %c0_3 = arith.constant 0 : index
    %3 = vector.load %arg8[%c0_2, %c0_3] : memref<8x138xf32, #tpu.memory_space<vmem>>, vector<8x5xf32>
    tpu.vector_store %arg8[%c0_2, %c0_3], %2 {strides = array<i32>} : memref<8x138xf32, #tpu.memory_space<vmem>>, vector<8x5xf32>,
    %cst_4 = arith.constant 0.000000e+00 : f32
    %4 = vector.broadcast %cst_4 : f32 to vector<8x5xf32>
    %c0_5 = arith.constant 0 : index
    %c133 = arith.constant 133 : index
    %5 = vector.load %arg8[%c0_5, %c133] : memref<8x138xf32, #tpu.memory_space<vmem>>, vector<8x5xf32>
    tpu.vector_store %arg8[%c0_5, %c133], %4 {strides = array<i32>} : memref<8x138xf32, #tpu.memory_space<vmem>>, vector<8x5xf32>,
    %c0_6 = arith.constant 0 : index
    %c5 = arith.constant 5 : index
    %6 = vector.load %arg8[%c0_6, %c5] : memref<8x138xf32, #tpu.memory_space<vmem>>, vector<8x128xf32>
    tpu.vector_store %arg8[%c0_6, %c5], %1 {strides = array<i32>} : memref<8x138xf32, #tpu.memory_space<vmem>>, vector<8x128xf32>,
    %c0_7 = arith.constant 0 : index
    %c0_8 = arith.constant 0 : index
    %7 = vector.load %arg8[%c0_7, %c0_8] : memref<8x138xf32, #tpu.memory_space<vmem>>, vector<8x128xf32>
    %c0_9 = arith.constant 0 : index
    %c1 = arith.constant 1 : index
    %8 = vector.load %arg8[%c0_9, %c1] : memref<8x138xf32, #tpu.memory_space<vmem>>, vector<8x128xf32>
    %c0_10 = arith.constant 0 : index
    %c2 = arith.constant 2 : index
    %9 = vector.load %arg8[%c0_10, %c2] : memref<8x138xf32, #tpu.memory_space<vmem>>, vector<8x128xf32>
    %c0_11 = arith.constant 0 : index
    %c3 = arith.constant 3 : index
    %10 = vector.load %arg8[%c0_11, %c3] : memref<8x138xf32, #tpu.memory_space<vmem>>, vector<8x128xf32>
    %c0_12 = arith.constant 0 : index
    %c4 = arith.constant 4 : index
    %11 = vector.load %arg8[%c0_12, %c4] : memref<8x138xf32, #tpu.memory_space<vmem>>, vector<8x128xf32>
    %c0_13 = arith.constant 0 : index
    %c5_14 = arith.constant 5 : index
    %12 = vector.load %arg8[%c0_13, %c5_14] : memref<8x138xf32, #tpu.memory_space<vmem>>, vector<8x128xf32>
    %c0_15 = arith.constant 0 : index
    %c6 = arith.constant 6 : index
    %13 = vector.load %arg8[%c0_15, %c6] : memref<8x138xf32, #tpu.memory_space<vmem>>, vector<8x128xf32>
    %c0_16 = arith.constant 0 : index
    %c7 = arith.constant 7 : index
    %14 = vector.load %arg8[%c0_16, %c7] : memref<8x138xf32, #tpu.memory_space<vmem>>, vector<8x128xf32>
    %c0_17 = arith.constant 0 : index
    %c8 = arith.constant 8 : index
    %15 = vector.load %arg8[%c0_17, %c8] : memref<8x138xf32, #tpu.memory_space<vmem>>, vector<8x128xf32>
    %c0_18 = arith.constant 0 : index
    %c9 = arith.constant 9 : index
    %16 = vector.load %arg8[%c0_18, %c9] : memref<8x138xf32, #tpu.memory_space<vmem>>, vector<8x128xf32>
    %c0_19 = arith.constant 0 : index
    %c10 = arith.constant 10 : index
    %17 = vector.load %arg8[%c0_19, %c10] : memref<8x138xf32, #tpu.memory_space<vmem>>, vector<8x128xf32>
    %18 = tpu.concatenate %7, %8, %9, %10, %11, %12, %13, %14, %15, %16, %17 in 0 : vector<8x128xf32>, vector<8x128xf32>, vector<8x128xf32>, vector<8x128xf32>, vector<8x128xf32>, vector<8x128xf32>, vector<8x128xf32>, vector<8x128xf32>, vector<8x128xf32>, vector<8x128xf32>, vector<8x128xf32> -> vector<88x128xf32>
    %c0_20 = arith.constant 0 : index
    %c0_21 = arith.constant 0 : index
    %19 = vector.load %arg2[%c0_20, %c0_21] : memref<8x88xf32, #tpu.memory_space<vmem>>, vector<8x88xf32>
    %cst_22 = arith.constant dense<0.000000e+00> : vector<8x128xf32>
    %20 = tpu.matmul %19, %18, %cst_22 {dimension_numbers = #tpu.dot_dimension_numbers<[1], [0], [0], [1], [0, 0, 1, 1], [], []>} : vector<8x88xf32>, vector<88x128xf32>, vector<8x128xf32> -> vector<8x128xf32>
    %c0_23 = arith.constant 0 : index
    %c0_24 = arith.constant 0 : index
    %21 = vector.load %arg3[%c0_23, %c0_24] : memref<8x1xf32, #tpu.memory_space<vmem>>, vector<8x1xf32>
    %22 = vector.broadcast %21 : vector<8x1xf32> to vector<8x128xf32>
    %23 = arith.mulf %20, %22 : vector<8x128xf32>
    %c0_25 = arith.constant 0 : index
    %c0_26 = arith.constant 0 : index
    %24 = vector.load %arg4[%c0_25, %c0_26] : memref<8x1xf32, #tpu.memory_space<vmem>>, vector<8x1xf32>
    %25 = vector.broadcast %24 : vector<8x1xf32> to vector<8x128xf32>
    %26 = arith.addf %23, %25 : vector<8x128xf32>
    %cst_27 = arith.constant 1.000000e-01 : f32
    %27 = vector.broadcast %cst_27 : f32 to vector<8x128xf32>
    %28 = arith.mulf %27, %26 : vector<8x128xf32>
    %29 = arith.maximumf %26, %28 : vector<8x128xf32>
    %c0_28 = arith.constant 0 : index
    %c0_29 = arith.constant 0 : index
    %c0_30 = arith.constant 0 : index
    %30 = vector.load %arg6[%c0_28, %c0_29, %c0_30] : memref<1x8x128xf32, #tpu.memory_space<vmem>>, vector<1x8x128xf32>
    %31 = vector.shape_cast %30 : vector<1x8x128xf32> to vector<8x128xf32>
    %32 = vector.shape_cast %29 : vector<8x128xf32> to vector<1x8x128xf32>
    tpu.vector_store %arg6[%c0_28, %c0_29, %c0_30], %32 {strides = array<i32>} : memref<1x8x128xf32, #tpu.memory_space<vmem>>, vector<1x8x128xf32>,
    %c0_31 = arith.constant 0 : index
    %c0_32 = arith.constant 0 : index
    %33 = vector.load %arg5[%c0_31, %c0_32] : memref<128x64xf32, #tpu.memory_space<vmem>>, vector<128x64xf32>
    %cst_33 = arith.constant dense<0.000000e+00> : vector<8x64xf32>
    %34 = tpu.matmul %29, %33, %cst_33 {dimension_numbers = #tpu.dot_dimension_numbers<[1], [0], [0], [1], [0, 0, 1, 1], [], []>} : vector<8x128xf32>, vector<128x64xf32>, vector<8x64xf32> -> vector<8x64xf32>
    %c0_34 = arith.constant 0 : index
    %c0_35 = arith.constant 0 : index
    %c0_36 = arith.constant 0 : index
    %35 = vector.load %arg7[%c0_34, %c0_35, %c0_36] : memref<1x8x64xf32, #tpu.memory_space<vmem>>, vector<1x8x64xf32>
    %36 = vector.shape_cast %35 : vector<1x8x64xf32> to vector<8x64xf32>
    %37 = vector.shape_cast %34 : vector<8x64xf32> to vector<1x8x64xf32>
    tpu.vector_store %arg7[%c0_34, %c0_35, %c0_36], %37 {strides = array<i32>} : memref<1x8x64xf32, #tpu.memory_space<vmem>>, vector<1x8x64xf32>,
    return
  }
  func.func @transform_0(%arg0: i32) -> (i32, i32, i32) {
    %c0_i32 = arith.constant 0 : i32
    %c0_i32_0 = arith.constant 0 : i32
    %c0_i32_1 = arith.constant 0 : i32
    return %arg0, %c0_i32, %c0_i32_0 : i32, i32, i32
  }
  func.func @transform_1(%arg0: i32) -> (i32, i32) {
    %c0_i32 = arith.constant 0 : i32
    %c0_i32_0 = arith.constant 0 : i32
    %c0_i32_1 = arith.constant 0 : i32
    return %c0_i32, %c0_i32_0 : i32, i32
  }
  func.func @transform_2(%arg0: i32) -> (i32, i32) {
    %c0_i32 = arith.constant 0 : i32
    %c0_i32_0 = arith.constant 0 : i32
    %c0_i32_1 = arith.constant 0 : i32
    return %c0_i32, %c0_i32_0 : i32, i32
  }
  func.func @transform_3(%arg0: i32) -> (i32, i32) {
    %c0_i32 = arith.constant 0 : i32
    %c0_i32_0 = arith.constant 0 : i32
    %c0_i32_1 = arith.constant 0 : i32
    return %c0_i32, %c0_i32_0 : i32, i32
  }
  func.func @transform_4(%arg0: i32) -> (i32, i32) {
    %c0_i32 = arith.constant 0 : i32
    %c0_i32_0 = arith.constant 0 : i32
    %c0_i32_1 = arith.constant 0 : i32
    return %c0_i32, %c0_i32_0 : i32, i32
  }
  func.func @transform_5(%arg0: i32) -> (i32, i32, i32) {
    %c0_i32 = arith.constant 0 : i32
    %c0_i32_0 = arith.constant 0 : i32
    %c0_i32_1 = arith.constant 0 : i32
    return %arg0, %c0_i32, %c0_i32_0 : i32, i32, i32
  }
  func.func @transform_6(%arg0: i32) -> (i32, i32, i32) {
    %c0_i32 = arith.constant 0 : i32
    %c0_i32_0 = arith.constant 0 : i32
    %c0_i32_1 = arith.constant 0 : i32
    return %arg0, %c0_i32, %c0_i32_0 : i32, i32, i32
  }
}

module attributes {stable_mosaic.version = 11 : i64} {
  func.func @_encoder_kernel(%arg0: i32, %arg1: memref<1x8x64xf32, #tpu.memory_space<vmem>>, %arg2: memref<8x88xf32, #tpu.memory_space<vmem>>, %arg3: memref<8x1xf32, #tpu.memory_space<vmem>>, %arg4: memref<8x1xf32, #tpu.memory_space<vmem>>, %arg5: memref<64x32xf32, #tpu.memory_space<vmem>>, %arg6: memref<1x8x64xf32, #tpu.memory_space<vmem>>, %arg7: memref<1x8x32xf32, #tpu.memory_space<vmem>>, %arg8: memref<8x74xf32, #tpu.memory_space<vmem>>) attributes {dimension_semantics = [#tpu.dimension_semantics<parallel>], iteration_bounds = array<i64: 2>, scalar_prefetch = 0 : i64, scratch_operands = 1 : i64, tpu.core_type = #tpu.core_type<tc>, window_params = [{transform_indices = @transform_0, window_bounds = array<i64: 1, 8, 64>}, {pipeline_mode = #tpu.pipeline_mode<synchronous>, transform_indices = @transform_1, window_bounds = array<i64: 8, 88>}, {pipeline_mode = #tpu.pipeline_mode<synchronous>, transform_indices = @transform_2, window_bounds = array<i64: 8, 1>}, {pipeline_mode = #tpu.pipeline_mode<synchronous>, transform_indices = @transform_3, window_bounds = array<i64: 8, 1>}, {pipeline_mode = #tpu.pipeline_mode<synchronous>, transform_indices = @transform_4, window_bounds = array<i64: 64, 32>}, {transform_indices = @transform_5, window_bounds = array<i64: 1, 8, 64>}, {transform_indices = @transform_6, window_bounds = array<i64: 1, 8, 32>}]} {
    %c0 = arith.constant 0 : index
    %c0_0 = arith.constant 0 : index
    %c0_1 = arith.constant 0 : index
    %0 = vector.load %arg1[%c0, %c0_0, %c0_1] : memref<1x8x64xf32, #tpu.memory_space<vmem>>, vector<1x8x64xf32>
    %1 = vector.shape_cast %0 : vector<1x8x64xf32> to vector<8x64xf32>
    %cst = arith.constant 0.000000e+00 : f32
    %2 = vector.broadcast %cst : f32 to vector<8x5xf32>
    %c0_2 = arith.constant 0 : index
    %c0_3 = arith.constant 0 : index
    %3 = vector.load %arg8[%c0_2, %c0_3] : memref<8x74xf32, #tpu.memory_space<vmem>>, vector<8x5xf32>
    tpu.vector_store %arg8[%c0_2, %c0_3], %2 {strides = array<i32>} : memref<8x74xf32, #tpu.memory_space<vmem>>, vector<8x5xf32>,
    %cst_4 = arith.constant 0.000000e+00 : f32
    %4 = vector.broadcast %cst_4 : f32 to vector<8x5xf32>
    %c0_5 = arith.constant 0 : index
    %c69 = arith.constant 69 : index
    %5 = vector.load %arg8[%c0_5, %c69] : memref<8x74xf32, #tpu.memory_space<vmem>>, vector<8x5xf32>
    tpu.vector_store %arg8[%c0_5, %c69], %4 {strides = array<i32>} : memref<8x74xf32, #tpu.memory_space<vmem>>, vector<8x5xf32>,
    %c0_6 = arith.constant 0 : index
    %c5 = arith.constant 5 : index
    %6 = vector.load %arg8[%c0_6, %c5] : memref<8x74xf32, #tpu.memory_space<vmem>>, vector<8x64xf32>
    tpu.vector_store %arg8[%c0_6, %c5], %1 {strides = array<i32>} : memref<8x74xf32, #tpu.memory_space<vmem>>, vector<8x64xf32>,
    %c0_7 = arith.constant 0 : index
    %c0_8 = arith.constant 0 : index
    %7 = vector.load %arg8[%c0_7, %c0_8] : memref<8x74xf32, #tpu.memory_space<vmem>>, vector<8x64xf32>
    %c0_9 = arith.constant 0 : index
    %c1 = arith.constant 1 : index
    %8 = vector.load %arg8[%c0_9, %c1] : memref<8x74xf32, #tpu.memory_space<vmem>>, vector<8x64xf32>
    %c0_10 = arith.constant 0 : index
    %c2 = arith.constant 2 : index
    %9 = vector.load %arg8[%c0_10, %c2] : memref<8x74xf32, #tpu.memory_space<vmem>>, vector<8x64xf32>
    %c0_11 = arith.constant 0 : index
    %c3 = arith.constant 3 : index
    %10 = vector.load %arg8[%c0_11, %c3] : memref<8x74xf32, #tpu.memory_space<vmem>>, vector<8x64xf32>
    %c0_12 = arith.constant 0 : index
    %c4 = arith.constant 4 : index
    %11 = vector.load %arg8[%c0_12, %c4] : memref<8x74xf32, #tpu.memory_space<vmem>>, vector<8x64xf32>
    %c0_13 = arith.constant 0 : index
    %c5_14 = arith.constant 5 : index
    %12 = vector.load %arg8[%c0_13, %c5_14] : memref<8x74xf32, #tpu.memory_space<vmem>>, vector<8x64xf32>
    %c0_15 = arith.constant 0 : index
    %c6 = arith.constant 6 : index
    %13 = vector.load %arg8[%c0_15, %c6] : memref<8x74xf32, #tpu.memory_space<vmem>>, vector<8x64xf32>
    %c0_16 = arith.constant 0 : index
    %c7 = arith.constant 7 : index
    %14 = vector.load %arg8[%c0_16, %c7] : memref<8x74xf32, #tpu.memory_space<vmem>>, vector<8x64xf32>
    %c0_17 = arith.constant 0 : index
    %c8 = arith.constant 8 : index
    %15 = vector.load %arg8[%c0_17, %c8] : memref<8x74xf32, #tpu.memory_space<vmem>>, vector<8x64xf32>
    %c0_18 = arith.constant 0 : index
    %c9 = arith.constant 9 : index
    %16 = vector.load %arg8[%c0_18, %c9] : memref<8x74xf32, #tpu.memory_space<vmem>>, vector<8x64xf32>
    %c0_19 = arith.constant 0 : index
    %c10 = arith.constant 10 : index
    %17 = vector.load %arg8[%c0_19, %c10] : memref<8x74xf32, #tpu.memory_space<vmem>>, vector<8x64xf32>
    %18 = tpu.concatenate %7, %8, %9, %10, %11, %12, %13, %14, %15, %16, %17 in 0 : vector<8x64xf32>, vector<8x64xf32>, vector<8x64xf32>, vector<8x64xf32>, vector<8x64xf32>, vector<8x64xf32>, vector<8x64xf32>, vector<8x64xf32>, vector<8x64xf32>, vector<8x64xf32>, vector<8x64xf32> -> vector<88x64xf32>
    %c0_20 = arith.constant 0 : index
    %c0_21 = arith.constant 0 : index
    %19 = vector.load %arg2[%c0_20, %c0_21] : memref<8x88xf32, #tpu.memory_space<vmem>>, vector<8x88xf32>
    %cst_22 = arith.constant dense<0.000000e+00> : vector<8x64xf32>
    %20 = tpu.matmul %19, %18, %cst_22 {dimension_numbers = #tpu.dot_dimension_numbers<[1], [0], [0], [1], [0, 0, 1, 1], [], []>} : vector<8x88xf32>, vector<88x64xf32>, vector<8x64xf32> -> vector<8x64xf32>
    %c0_23 = arith.constant 0 : index
    %c0_24 = arith.constant 0 : index
    %21 = vector.load %arg3[%c0_23, %c0_24] : memref<8x1xf32, #tpu.memory_space<vmem>>, vector<8x1xf32>
    %22 = vector.broadcast %21 : vector<8x1xf32> to vector<8x64xf32>
    %23 = arith.mulf %20, %22 : vector<8x64xf32>
    %c0_25 = arith.constant 0 : index
    %c0_26 = arith.constant 0 : index
    %24 = vector.load %arg4[%c0_25, %c0_26] : memref<8x1xf32, #tpu.memory_space<vmem>>, vector<8x1xf32>
    %25 = vector.broadcast %24 : vector<8x1xf32> to vector<8x64xf32>
    %26 = arith.addf %23, %25 : vector<8x64xf32>
    %cst_27 = arith.constant 1.000000e-01 : f32
    %27 = vector.broadcast %cst_27 : f32 to vector<8x64xf32>
    %28 = arith.mulf %27, %26 : vector<8x64xf32>
    %29 = arith.maximumf %26, %28 : vector<8x64xf32>
    %c0_28 = arith.constant 0 : index
    %c0_29 = arith.constant 0 : index
    %c0_30 = arith.constant 0 : index
    %30 = vector.load %arg6[%c0_28, %c0_29, %c0_30] : memref<1x8x64xf32, #tpu.memory_space<vmem>>, vector<1x8x64xf32>
    %31 = vector.shape_cast %30 : vector<1x8x64xf32> to vector<8x64xf32>
    %32 = vector.shape_cast %29 : vector<8x64xf32> to vector<1x8x64xf32>
    tpu.vector_store %arg6[%c0_28, %c0_29, %c0_30], %32 {strides = array<i32>} : memref<1x8x64xf32, #tpu.memory_space<vmem>>, vector<1x8x64xf32>,
    %c0_31 = arith.constant 0 : index
    %c0_32 = arith.constant 0 : index
    %33 = vector.load %arg5[%c0_31, %c0_32] : memref<64x32xf32, #tpu.memory_space<vmem>>, vector<64x32xf32>
    %cst_33 = arith.constant dense<0.000000e+00> : vector<8x32xf32>
    %34 = tpu.matmul %29, %33, %cst_33 {dimension_numbers = #tpu.dot_dimension_numbers<[1], [0], [0], [1], [0, 0, 1, 1], [], []>} : vector<8x64xf32>, vector<64x32xf32>, vector<8x32xf32> -> vector<8x32xf32>
    %c0_34 = arith.constant 0 : index
    %c0_35 = arith.constant 0 : index
    %c0_36 = arith.constant 0 : index
    %35 = vector.load %arg7[%c0_34, %c0_35, %c0_36] : memref<1x8x32xf32, #tpu.memory_space<vmem>>, vector<1x8x32xf32>
    %36 = vector.shape_cast %35 : vector<1x8x32xf32> to vector<8x32xf32>
    %37 = vector.shape_cast %34 : vector<8x32xf32> to vector<1x8x32xf32>
    tpu.vector_store %arg7[%c0_34, %c0_35, %c0_36], %37 {strides = array<i32>} : memref<1x8x32xf32, #tpu.memory_space<vmem>>, vector<1x8x32xf32>,
    return
  }
  func.func @transform_0(%arg0: i32) -> (i32, i32, i32) {
    %c0_i32 = arith.constant 0 : i32
    %c0_i32_0 = arith.constant 0 : i32
    %c0_i32_1 = arith.constant 0 : i32
    return %arg0, %c0_i32, %c0_i32_0 : i32, i32, i32
  }
  func.func @transform_1(%arg0: i32) -> (i32, i32) {
    %c0_i32 = arith.constant 0 : i32
    %c0_i32_0 = arith.constant 0 : i32
    %c0_i32_1 = arith.constant 0 : i32
    return %c0_i32, %c0_i32_0 : i32, i32
  }
  func.func @transform_2(%arg0: i32) -> (i32, i32) {
    %c0_i32 = arith.constant 0 : i32
    %c0_i32_0 = arith.constant 0 : i32
    %c0_i32_1 = arith.constant 0 : i32
    return %c0_i32, %c0_i32_0 : i32, i32
  }
  func.func @transform_3(%arg0: i32) -> (i32, i32) {
    %c0_i32 = arith.constant 0 : i32
    %c0_i32_0 = arith.constant 0 : i32
    %c0_i32_1 = arith.constant 0 : i32
    return %c0_i32, %c0_i32_0 : i32, i32
  }
  func.func @transform_4(%arg0: i32) -> (i32, i32) {
    %c0_i32 = arith.constant 0 : i32
    %c0_i32_0 = arith.constant 0 : i32
    %c0_i32_1 = arith.constant 0 : i32
    return %c0_i32, %c0_i32_0 : i32, i32
  }
  func.func @transform_5(%arg0: i32) -> (i32, i32, i32) {
    %c0_i32 = arith.constant 0 : i32
    %c0_i32_0 = arith.constant 0 : i32
    %c0_i32_1 = arith.constant 0 : i32
    return %arg0, %c0_i32, %c0_i32_0 : i32, i32, i32
  }
  func.func @transform_6(%arg0: i32) -> (i32, i32, i32) {
    %c0_i32 = arith.constant 0 : i32
    %c0_i32_0 = arith.constant 0 : i32
    %c0_i32_1 = arith.constant 0 : i32
    return %arg0, %c0_i32, %c0_i32_0 : i32, i32, i32
  }
}

module attributes {stable_mosaic.version = 11 : i64} {
  func.func @_encoder_kernel(%arg0: i32, %arg1: memref<1x8x32xf32, #tpu.memory_space<vmem>>, %arg2: memref<16x88xf32, #tpu.memory_space<vmem>>, %arg3: memref<16x1xf32, #tpu.memory_space<vmem>>, %arg4: memref<16x1xf32, #tpu.memory_space<vmem>>, %arg5: memref<32x16xf32, #tpu.memory_space<vmem>>, %arg6: memref<1x16x32xf32, #tpu.memory_space<vmem>>, %arg7: memref<1x16x16xf32, #tpu.memory_space<vmem>>, %arg8: memref<8x42xf32, #tpu.memory_space<vmem>>) attributes {dimension_semantics = [#tpu.dimension_semantics<parallel>], iteration_bounds = array<i64: 2>, scalar_prefetch = 0 : i64, scratch_operands = 1 : i64, tpu.core_type = #tpu.core_type<tc>, window_params = [{transform_indices = @transform_0, window_bounds = array<i64: 1, 8, 32>}, {pipeline_mode = #tpu.pipeline_mode<synchronous>, transform_indices = @transform_1, window_bounds = array<i64: 16, 88>}, {pipeline_mode = #tpu.pipeline_mode<synchronous>, transform_indices = @transform_2, window_bounds = array<i64: 16, 1>}, {pipeline_mode = #tpu.pipeline_mode<synchronous>, transform_indices = @transform_3, window_bounds = array<i64: 16, 1>}, {pipeline_mode = #tpu.pipeline_mode<synchronous>, transform_indices = @transform_4, window_bounds = array<i64: 32, 16>}, {transform_indices = @transform_5, window_bounds = array<i64: 1, 16, 32>}, {transform_indices = @transform_6, window_bounds = array<i64: 1, 16, 16>}]} {
    %c0 = arith.constant 0 : index
    %c0_0 = arith.constant 0 : index
    %c0_1 = arith.constant 0 : index
    %0 = vector.load %arg1[%c0, %c0_0, %c0_1] : memref<1x8x32xf32, #tpu.memory_space<vmem>>, vector<1x8x32xf32>
    %1 = vector.shape_cast %0 : vector<1x8x32xf32> to vector<8x32xf32>
    %cst = arith.constant 0.000000e+00 : f32
    %2 = vector.broadcast %cst : f32 to vector<8x5xf32>
    %c0_2 = arith.constant 0 : index
    %c0_3 = arith.constant 0 : index
    %3 = vector.load %arg8[%c0_2, %c0_3] : memref<8x42xf32, #tpu.memory_space<vmem>>, vector<8x5xf32>
    tpu.vector_store %arg8[%c0_2, %c0_3], %2 {strides = array<i32>} : memref<8x42xf32, #tpu.memory_space<vmem>>, vector<8x5xf32>,
    %cst_4 = arith.constant 0.000000e+00 : f32
    %4 = vector.broadcast %cst_4 : f32 to vector<8x5xf32>
    %c0_5 = arith.constant 0 : index
    %c37 = arith.constant 37 : index
    %5 = vector.load %arg8[%c0_5, %c37] : memref<8x42xf32, #tpu.memory_space<vmem>>, vector<8x5xf32>
    tpu.vector_store %arg8[%c0_5, %c37], %4 {strides = array<i32>} : memref<8x42xf32, #tpu.memory_space<vmem>>, vector<8x5xf32>,
    %c0_6 = arith.constant 0 : index
    %c5 = arith.constant 5 : index
    %6 = vector.load %arg8[%c0_6, %c5] : memref<8x42xf32, #tpu.memory_space<vmem>>, vector<8x32xf32>
    tpu.vector_store %arg8[%c0_6, %c5], %1 {strides = array<i32>} : memref<8x42xf32, #tpu.memory_space<vmem>>, vector<8x32xf32>,
    %c0_7 = arith.constant 0 : index
    %c0_8 = arith.constant 0 : index
    %7 = vector.load %arg8[%c0_7, %c0_8] : memref<8x42xf32, #tpu.memory_space<vmem>>, vector<8x32xf32>
    %c0_9 = arith.constant 0 : index
    %c1 = arith.constant 1 : index
    %8 = vector.load %arg8[%c0_9, %c1] : memref<8x42xf32, #tpu.memory_space<vmem>>, vector<8x32xf32>
    %c0_10 = arith.constant 0 : index
    %c2 = arith.constant 2 : index
    %9 = vector.load %arg8[%c0_10, %c2] : memref<8x42xf32, #tpu.memory_space<vmem>>, vector<8x32xf32>
    %c0_11 = arith.constant 0 : index
    %c3 = arith.constant 3 : index
    %10 = vector.load %arg8[%c0_11, %c3] : memref<8x42xf32, #tpu.memory_space<vmem>>, vector<8x32xf32>
    %c0_12 = arith.constant 0 : index
    %c4 = arith.constant 4 : index
    %11 = vector.load %arg8[%c0_12, %c4] : memref<8x42xf32, #tpu.memory_space<vmem>>, vector<8x32xf32>
    %c0_13 = arith.constant 0 : index
    %c5_14 = arith.constant 5 : index
    %12 = vector.load %arg8[%c0_13, %c5_14] : memref<8x42xf32, #tpu.memory_space<vmem>>, vector<8x32xf32>
    %c0_15 = arith.constant 0 : index
    %c6 = arith.constant 6 : index
    %13 = vector.load %arg8[%c0_15, %c6] : memref<8x42xf32, #tpu.memory_space<vmem>>, vector<8x32xf32>
    %c0_16 = arith.constant 0 : index
    %c7 = arith.constant 7 : index
    %14 = vector.load %arg8[%c0_16, %c7] : memref<8x42xf32, #tpu.memory_space<vmem>>, vector<8x32xf32>
    %c0_17 = arith.constant 0 : index
    %c8 = arith.constant 8 : index
    %15 = vector.load %arg8[%c0_17, %c8] : memref<8x42xf32, #tpu.memory_space<vmem>>, vector<8x32xf32>
    %c0_18 = arith.constant 0 : index
    %c9 = arith.constant 9 : index
    %16 = vector.load %arg8[%c0_18, %c9] : memref<8x42xf32, #tpu.memory_space<vmem>>, vector<8x32xf32>
    %c0_19 = arith.constant 0 : index
    %c10 = arith.constant 10 : index
    %17 = vector.load %arg8[%c0_19, %c10] : memref<8x42xf32, #tpu.memory_space<vmem>>, vector<8x32xf32>
    %18 = tpu.concatenate %7, %8, %9, %10, %11, %12, %13, %14, %15, %16, %17 in 0 : vector<8x32xf32>, vector<8x32xf32>, vector<8x32xf32>, vector<8x32xf32>, vector<8x32xf32>, vector<8x32xf32>, vector<8x32xf32>, vector<8x32xf32>, vector<8x32xf32>, vector<8x32xf32>, vector<8x32xf32> -> vector<88x32xf32>
    %c0_20 = arith.constant 0 : index
    %c0_21 = arith.constant 0 : index
    %19 = vector.load %arg2[%c0_20, %c0_21] : memref<16x88xf32, #tpu.memory_space<vmem>>, vector<16x88xf32>
    %cst_22 = arith.constant dense<0.000000e+00> : vector<16x32xf32>
    %20 = tpu.matmul %19, %18, %cst_22 {dimension_numbers = #tpu.dot_dimension_numbers<[1], [0], [0], [1], [0, 0, 1, 1], [], []>} : vector<16x88xf32>, vector<88x32xf32>, vector<16x32xf32> -> vector<16x32xf32>
    %c0_23 = arith.constant 0 : index
    %c0_24 = arith.constant 0 : index
    %21 = vector.load %arg3[%c0_23, %c0_24] : memref<16x1xf32, #tpu.memory_space<vmem>>, vector<16x1xf32>
    %22 = vector.broadcast %21 : vector<16x1xf32> to vector<16x32xf32>
    %23 = arith.mulf %20, %22 : vector<16x32xf32>
    %c0_25 = arith.constant 0 : index
    %c0_26 = arith.constant 0 : index
    %24 = vector.load %arg4[%c0_25, %c0_26] : memref<16x1xf32, #tpu.memory_space<vmem>>, vector<16x1xf32>
    %25 = vector.broadcast %24 : vector<16x1xf32> to vector<16x32xf32>
    %26 = arith.addf %23, %25 : vector<16x32xf32>
    %cst_27 = arith.constant 1.000000e-01 : f32
    %27 = vector.broadcast %cst_27 : f32 to vector<16x32xf32>
    %28 = arith.mulf %27, %26 : vector<16x32xf32>
    %29 = arith.maximumf %26, %28 : vector<16x32xf32>
    %c0_28 = arith.constant 0 : index
    %c0_29 = arith.constant 0 : index
    %c0_30 = arith.constant 0 : index
    %30 = vector.load %arg6[%c0_28, %c0_29, %c0_30] : memref<1x16x32xf32, #tpu.memory_space<vmem>>, vector<1x16x32xf32>
    %31 = vector.shape_cast %30 : vector<1x16x32xf32> to vector<16x32xf32>
    %32 = vector.shape_cast %29 : vector<16x32xf32> to vector<1x16x32xf32>
    tpu.vector_store %arg6[%c0_28, %c0_29, %c0_30], %32 {strides = array<i32>} : memref<1x16x32xf32, #tpu.memory_space<vmem>>, vector<1x16x32xf32>,
    %c0_31 = arith.constant 0 : index
    %c0_32 = arith.constant 0 : index
    %33 = vector.load %arg5[%c0_31, %c0_32] : memref<32x16xf32, #tpu.memory_space<vmem>>, vector<32x16xf32>
    %cst_33 = arith.constant dense<0.000000e+00> : vector<16x16xf32>
    %34 = tpu.matmul %29, %33, %cst_33 {dimension_numbers = #tpu.dot_dimension_numbers<[1], [0], [0], [1], [0, 0, 1, 1], [], []>} : vector<16x32xf32>, vector<32x16xf32>, vector<16x16xf32> -> vector<16x16xf32>
    %c0_34 = arith.constant 0 : index
    %c0_35 = arith.constant 0 : index
    %c0_36 = arith.constant 0 : index
    %35 = vector.load %arg7[%c0_34, %c0_35, %c0_36] : memref<1x16x16xf32, #tpu.memory_space<vmem>>, vector<1x16x16xf32>
    %36 = vector.shape_cast %35 : vector<1x16x16xf32> to vector<16x16xf32>
    %37 = vector.shape_cast %34 : vector<16x16xf32> to vector<1x16x16xf32>
    tpu.vector_store %arg7[%c0_34, %c0_35, %c0_36], %37 {strides = array<i32>} : memref<1x16x16xf32, #tpu.memory_space<vmem>>, vector<1x16x16xf32>,
    return
  }
  func.func @transform_0(%arg0: i32) -> (i32, i32, i32) {
    %c0_i32 = arith.constant 0 : i32
    %c0_i32_0 = arith.constant 0 : i32
    %c0_i32_1 = arith.constant 0 : i32
    return %arg0, %c0_i32, %c0_i32_0 : i32, i32, i32
  }
  func.func @transform_1(%arg0: i32) -> (i32, i32) {
    %c0_i32 = arith.constant 0 : i32
    %c0_i32_0 = arith.constant 0 : i32
    %c0_i32_1 = arith.constant 0 : i32
    return %c0_i32, %c0_i32_0 : i32, i32
  }
  func.func @transform_2(%arg0: i32) -> (i32, i32) {
    %c0_i32 = arith.constant 0 : i32
    %c0_i32_0 = arith.constant 0 : i32
    %c0_i32_1 = arith.constant 0 : i32
    return %c0_i32, %c0_i32_0 : i32, i32
  }
  func.func @transform_3(%arg0: i32) -> (i32, i32) {
    %c0_i32 = arith.constant 0 : i32
    %c0_i32_0 = arith.constant 0 : i32
    %c0_i32_1 = arith.constant 0 : i32
    return %c0_i32, %c0_i32_0 : i32, i32
  }
  func.func @transform_4(%arg0: i32) -> (i32, i32) {
    %c0_i32 = arith.constant 0 : i32
    %c0_i32_0 = arith.constant 0 : i32
    %c0_i32_1 = arith.constant 0 : i32
    return %c0_i32, %c0_i32_0 : i32, i32
  }
  func.func @transform_5(%arg0: i32) -> (i32, i32, i32) {
    %c0_i32 = arith.constant 0 : i32
    %c0_i32_0 = arith.constant 0 : i32
    %c0_i32_1 = arith.constant 0 : i32
    return %arg0, %c0_i32, %c0_i32_0 : i32, i32, i32
  }
  func.func @transform_6(%arg0: i32) -> (i32, i32, i32) {
    %c0_i32 = arith.constant 0 : i32
    %c0_i32_0 = arith.constant 0 : i32
    %c0_i32_1 = arith.constant 0 : i32
    return %arg0, %c0_i32, %c0_i32_0 : i32, i32, i32
  }
}

module attributes {stable_mosaic.version = 11 : i64} {
  func.func @_conv_act_kernel(%arg0: i32, %arg1: memref<1x16x16xf32, #tpu.memory_space<vmem>>, %arg2: memref<16x176xf32, #tpu.memory_space<vmem>>, %arg3: memref<16x1xf32, #tpu.memory_space<vmem>>, %arg4: memref<16x1xf32, #tpu.memory_space<vmem>>, %arg5: memref<1x16x16xf32, #tpu.memory_space<vmem>>, %arg6: memref<16x26xf32, #tpu.memory_space<vmem>>) attributes {dimension_semantics = [#tpu.dimension_semantics<parallel>], iteration_bounds = array<i64: 2>, scalar_prefetch = 0 : i64, scratch_operands = 1 : i64, tpu.core_type = #tpu.core_type<tc>, window_params = [{transform_indices = @transform_0, window_bounds = array<i64: 1, 16, 16>}, {pipeline_mode = #tpu.pipeline_mode<synchronous>, transform_indices = @transform_1, window_bounds = array<i64: 16, 176>}, {pipeline_mode = #tpu.pipeline_mode<synchronous>, transform_indices = @transform_2, window_bounds = array<i64: 16, 1>}, {pipeline_mode = #tpu.pipeline_mode<synchronous>, transform_indices = @transform_3, window_bounds = array<i64: 16, 1>}, {transform_indices = @transform_4, window_bounds = array<i64: 1, 16, 16>}]} {
    %c0 = arith.constant 0 : index
    %c0_0 = arith.constant 0 : index
    %c0_1 = arith.constant 0 : index
    %0 = vector.load %arg1[%c0, %c0_0, %c0_1] : memref<1x16x16xf32, #tpu.memory_space<vmem>>, vector<1x16x16xf32>
    %1 = vector.shape_cast %0 : vector<1x16x16xf32> to vector<16x16xf32>
    %cst = arith.constant 0.000000e+00 : f32
    %2 = vector.broadcast %cst : f32 to vector<16x5xf32>
    %c0_2 = arith.constant 0 : index
    %c0_3 = arith.constant 0 : index
    %3 = vector.load %arg6[%c0_2, %c0_3] : memref<16x26xf32, #tpu.memory_space<vmem>>, vector<16x5xf32>
    tpu.vector_store %arg6[%c0_2, %c0_3], %2 {strides = array<i32>} : memref<16x26xf32, #tpu.memory_space<vmem>>, vector<16x5xf32>,
    %cst_4 = arith.constant 0.000000e+00 : f32
    %4 = vector.broadcast %cst_4 : f32 to vector<16x5xf32>
    %c0_5 = arith.constant 0 : index
    %c21 = arith.constant 21 : index
    %5 = vector.load %arg6[%c0_5, %c21] : memref<16x26xf32, #tpu.memory_space<vmem>>, vector<16x5xf32>
    tpu.vector_store %arg6[%c0_5, %c21], %4 {strides = array<i32>} : memref<16x26xf32, #tpu.memory_space<vmem>>, vector<16x5xf32>,
    %c0_6 = arith.constant 0 : index
    %c5 = arith.constant 5 : index
    %6 = vector.load %arg6[%c0_6, %c5] : memref<16x26xf32, #tpu.memory_space<vmem>>, vector<16x16xf32>
    tpu.vector_store %arg6[%c0_6, %c5], %1 {strides = array<i32>} : memref<16x26xf32, #tpu.memory_space<vmem>>, vector<16x16xf32>,
    %c0_7 = arith.constant 0 : index
    %c0_8 = arith.constant 0 : index
    %7 = vector.load %arg6[%c0_7, %c0_8] : memref<16x26xf32, #tpu.memory_space<vmem>>, vector<16x16xf32>
    %c0_9 = arith.constant 0 : index
    %c1 = arith.constant 1 : index
    %8 = vector.load %arg6[%c0_9, %c1] : memref<16x26xf32, #tpu.memory_space<vmem>>, vector<16x16xf32>
    %c0_10 = arith.constant 0 : index
    %c2 = arith.constant 2 : index
    %9 = vector.load %arg6[%c0_10, %c2] : memref<16x26xf32, #tpu.memory_space<vmem>>, vector<16x16xf32>
    %c0_11 = arith.constant 0 : index
    %c3 = arith.constant 3 : index
    %10 = vector.load %arg6[%c0_11, %c3] : memref<16x26xf32, #tpu.memory_space<vmem>>, vector<16x16xf32>
    %c0_12 = arith.constant 0 : index
    %c4 = arith.constant 4 : index
    %11 = vector.load %arg6[%c0_12, %c4] : memref<16x26xf32, #tpu.memory_space<vmem>>, vector<16x16xf32>
    %c0_13 = arith.constant 0 : index
    %c5_14 = arith.constant 5 : index
    %12 = vector.load %arg6[%c0_13, %c5_14] : memref<16x26xf32, #tpu.memory_space<vmem>>, vector<16x16xf32>
    %c0_15 = arith.constant 0 : index
    %c6 = arith.constant 6 : index
    %13 = vector.load %arg6[%c0_15, %c6] : memref<16x26xf32, #tpu.memory_space<vmem>>, vector<16x16xf32>
    %c0_16 = arith.constant 0 : index
    %c7 = arith.constant 7 : index
    %14 = vector.load %arg6[%c0_16, %c7] : memref<16x26xf32, #tpu.memory_space<vmem>>, vector<16x16xf32>
    %c0_17 = arith.constant 0 : index
    %c8 = arith.constant 8 : index
    %15 = vector.load %arg6[%c0_17, %c8] : memref<16x26xf32, #tpu.memory_space<vmem>>, vector<16x16xf32>
    %c0_18 = arith.constant 0 : index
    %c9 = arith.constant 9 : index
    %16 = vector.load %arg6[%c0_18, %c9] : memref<16x26xf32, #tpu.memory_space<vmem>>, vector<16x16xf32>
    %c0_19 = arith.constant 0 : index
    %c10 = arith.constant 10 : index
    %17 = vector.load %arg6[%c0_19, %c10] : memref<16x26xf32, #tpu.memory_space<vmem>>, vector<16x16xf32>
    %18 = tpu.concatenate %7, %8, %9, %10, %11, %12, %13, %14, %15, %16, %17 in 0 : vector<16x16xf32>, vector<16x16xf32>, vector<16x16xf32>, vector<16x16xf32>, vector<16x16xf32>, vector<16x16xf32>, vector<16x16xf32>, vector<16x16xf32>, vector<16x16xf32>, vector<16x16xf32>, vector<16x16xf32> -> vector<176x16xf32>
    %c0_20 = arith.constant 0 : index
    %c0_21 = arith.constant 0 : index
    %19 = vector.load %arg2[%c0_20, %c0_21] : memref<16x176xf32, #tpu.memory_space<vmem>>, vector<16x176xf32>
    %cst_22 = arith.constant dense<0.000000e+00> : vector<16x16xf32>
    %20 = tpu.matmul %19, %18, %cst_22 {dimension_numbers = #tpu.dot_dimension_numbers<[1], [0], [0], [1], [0, 0, 1, 1], [], []>} : vector<16x176xf32>, vector<176x16xf32>, vector<16x16xf32> -> vector<16x16xf32>
    %c0_23 = arith.constant 0 : index
    %c0_24 = arith.constant 0 : index
    %21 = vector.load %arg3[%c0_23, %c0_24] : memref<16x1xf32, #tpu.memory_space<vmem>>, vector<16x1xf32>
    %22 = vector.broadcast %21 : vector<16x1xf32> to vector<16x16xf32>
    %23 = arith.mulf %20, %22 : vector<16x16xf32>
    %c0_25 = arith.constant 0 : index
    %c0_26 = arith.constant 0 : index
    %24 = vector.load %arg4[%c0_25, %c0_26] : memref<16x1xf32, #tpu.memory_space<vmem>>, vector<16x1xf32>
    %25 = vector.broadcast %24 : vector<16x1xf32> to vector<16x16xf32>
    %26 = arith.addf %23, %25 : vector<16x16xf32>
    %cst_27 = arith.constant 1.000000e-01 : f32
    %27 = vector.broadcast %cst_27 : f32 to vector<16x16xf32>
    %28 = arith.mulf %27, %26 : vector<16x16xf32>
    %29 = arith.maximumf %26, %28 : vector<16x16xf32>
    %c0_28 = arith.constant 0 : index
    %c0_29 = arith.constant 0 : index
    %c0_30 = arith.constant 0 : index
    %30 = vector.load %arg5[%c0_28, %c0_29, %c0_30] : memref<1x16x16xf32, #tpu.memory_space<vmem>>, vector<1x16x16xf32>
    %31 = vector.shape_cast %30 : vector<1x16x16xf32> to vector<16x16xf32>
    %32 = vector.shape_cast %29 : vector<16x16xf32> to vector<1x16x16xf32>
    tpu.vector_store %arg5[%c0_28, %c0_29, %c0_30], %32 {strides = array<i32>} : memref<1x16x16xf32, #tpu.memory_space<vmem>>, vector<1x16x16xf32>,
    return
  }
  func.func @transform_0(%arg0: i32) -> (i32, i32, i32) {
    %c0_i32 = arith.constant 0 : i32
    %c0_i32_0 = arith.constant 0 : i32
    %c0_i32_1 = arith.constant 0 : i32
    return %arg0, %c0_i32, %c0_i32_0 : i32, i32, i32
  }
  func.func @transform_1(%arg0: i32) -> (i32, i32) {
    %c0_i32 = arith.constant 0 : i32
    %c0_i32_0 = arith.constant 0 : i32
    %c0_i32_1 = arith.constant 0 : i32
    return %c0_i32, %c0_i32_0 : i32, i32
  }
  func.func @transform_2(%arg0: i32) -> (i32, i32) {
    %c0_i32 = arith.constant 0 : i32
    %c0_i32_0 = arith.constant 0 : i32
    %c0_i32_1 = arith.constant 0 : i32
    return %c0_i32, %c0_i32_0 : i32, i32
  }
  func.func @transform_3(%arg0: i32) -> (i32, i32) {
    %c0_i32 = arith.constant 0 : i32
    %c0_i32_0 = arith.constant 0 : i32
    %c0_i32_1 = arith.constant 0 : i32
    return %c0_i32, %c0_i32_0 : i32, i32
  }
  func.func @transform_4(%arg0: i32) -> (i32, i32, i32) {
    %c0_i32 = arith.constant 0 : i32
    %c0_i32_0 = arith.constant 0 : i32
    %c0_i32_1 = arith.constant 0 : i32
    return %arg0, %c0_i32, %c0_i32_0 : i32, i32, i32
  }
}

module attributes {stable_mosaic.version = 11 : i64} {
  func.func @_decoder_kernel(%arg0: i32, %arg1: memref<1x16x16xf32, #tpu.memory_space<vmem>>, %arg2: memref<1x16x32xf32, #tpu.memory_space<vmem>>, %arg3: memref<16x32xf32, #tpu.memory_space<vmem>>, %arg4: memref<16x176xf32, #tpu.memory_space<vmem>>, %arg5: memref<16x176xf32, #tpu.memory_space<vmem>>, %arg6: memref<16x1xf32, #tpu.memory_space<vmem>>, %arg7: memref<16x1xf32, #tpu.memory_space<vmem>>, %arg8: memref<1x16x32xf32, #tpu.memory_space<vmem>>, %arg9: memref<16x42xf32, #tpu.memory_space<vmem>>, %arg10: memref<16x42xf32, #tpu.memory_space<vmem>>) attributes {dimension_semantics = [#tpu.dimension_semantics<parallel>], iteration_bounds = array<i64: 2>, scalar_prefetch = 0 : i64, scratch_operands = 2 : i64, tpu.core_type = #tpu.core_type<tc>, window_params = [{transform_indices = @transform_0, window_bounds = array<i64: 1, 16, 16>}, {transform_indices = @transform_1, window_bounds = array<i64: 1, 16, 32>}, {pipeline_mode = #tpu.pipeline_mode<synchronous>, transform_indices = @transform_2, window_bounds = array<i64: 16, 32>}, {pipeline_mode = #tpu.pipeline_mode<synchronous>, transform_indices = @transform_3, window_bounds = array<i64: 16, 176>}, {pipeline_mode = #tpu.pipeline_mode<synchronous>, transform_indices = @transform_4, window_bounds = array<i64: 16, 176>}, {pipeline_mode = #tpu.pipeline_mode<synchronous>, transform_indices = @transform_5, window_bounds = array<i64: 16, 1>}, {pipeline_mode = #tpu.pipeline_mode<synchronous>, transform_indices = @transform_6, window_bounds = array<i64: 16, 1>}, {transform_indices = @transform_7, window_bounds = array<i64: 1, 16, 32>}]} {
    %c0 = arith.constant 0 : index
    %c0_0 = arith.constant 0 : index
    %c0_1 = arith.constant 0 : index
    %0 = vector.load %arg1[%c0, %c0_0, %c0_1] : memref<1x16x16xf32, #tpu.memory_space<vmem>>, vector<1x16x16xf32>
    %1 = vector.shape_cast %0 : vector<1x16x16xf32> to vector<16x16xf32>
    %c0_2 = arith.constant 0 : index
    %c0_3 = arith.constant 0 : index
    %2 = vector.load %arg3[%c0_2, %c0_3] : memref<16x32xf32, #tpu.memory_space<vmem>>, vector<16x32xf32>
    %cst = arith.constant dense<0.000000e+00> : vector<16x32xf32>
    %3 = tpu.matmul %1, %2, %cst {dimension_numbers = #tpu.dot_dimension_numbers<[1], [0], [0], [1], [0, 0, 1, 1], [], []>} : vector<16x16xf32>, vector<16x32xf32>, vector<16x32xf32> -> vector<16x32xf32>
    %cst_4 = arith.constant 0.000000e+00 : f32
    %4 = vector.broadcast %cst_4 : f32 to vector<16x5xf32>
    %c0_5 = arith.constant 0 : index
    %c0_6 = arith.constant 0 : index
    %5 = vector.load %arg9[%c0_5, %c0_6] : memref<16x42xf32, #tpu.memory_space<vmem>>, vector<16x5xf32>
    tpu.vector_store %arg9[%c0_5, %c0_6], %4 {strides = array<i32>} : memref<16x42xf32, #tpu.memory_space<vmem>>, vector<16x5xf32>,
    %cst_7 = arith.constant 0.000000e+00 : f32
    %6 = vector.broadcast %cst_7 : f32 to vector<16x5xf32>
    %c0_8 = arith.constant 0 : index
    %c37 = arith.constant 37 : index
    %7 = vector.load %arg9[%c0_8, %c37] : memref<16x42xf32, #tpu.memory_space<vmem>>, vector<16x5xf32>
    tpu.vector_store %arg9[%c0_8, %c37], %6 {strides = array<i32>} : memref<16x42xf32, #tpu.memory_space<vmem>>, vector<16x5xf32>,
    %c0_9 = arith.constant 0 : index
    %c5 = arith.constant 5 : index
    %8 = vector.load %arg9[%c0_9, %c5] : memref<16x42xf32, #tpu.memory_space<vmem>>, vector<16x32xf32>
    tpu.vector_store %arg9[%c0_9, %c5], %3 {strides = array<i32>} : memref<16x42xf32, #tpu.memory_space<vmem>>, vector<16x32xf32>,
    %c0_10 = arith.constant 0 : index
    %c0_11 = arith.constant 0 : index
    %9 = vector.load %arg9[%c0_10, %c0_11] : memref<16x42xf32, #tpu.memory_space<vmem>>, vector<16x32xf32>
    %c0_12 = arith.constant 0 : index
    %c1 = arith.constant 1 : index
    %10 = vector.load %arg9[%c0_12, %c1] : memref<16x42xf32, #tpu.memory_space<vmem>>, vector<16x32xf32>
    %c0_13 = arith.constant 0 : index
    %c2 = arith.constant 2 : index
    %11 = vector.load %arg9[%c0_13, %c2] : memref<16x42xf32, #tpu.memory_space<vmem>>, vector<16x32xf32>
    %c0_14 = arith.constant 0 : index
    %c3 = arith.constant 3 : index
    %12 = vector.load %arg9[%c0_14, %c3] : memref<16x42xf32, #tpu.memory_space<vmem>>, vector<16x32xf32>
    %c0_15 = arith.constant 0 : index
    %c4 = arith.constant 4 : index
    %13 = vector.load %arg9[%c0_15, %c4] : memref<16x42xf32, #tpu.memory_space<vmem>>, vector<16x32xf32>
    %c0_16 = arith.constant 0 : index
    %c5_17 = arith.constant 5 : index
    %14 = vector.load %arg9[%c0_16, %c5_17] : memref<16x42xf32, #tpu.memory_space<vmem>>, vector<16x32xf32>
    %c0_18 = arith.constant 0 : index
    %c6 = arith.constant 6 : index
    %15 = vector.load %arg9[%c0_18, %c6] : memref<16x42xf32, #tpu.memory_space<vmem>>, vector<16x32xf32>
    %c0_19 = arith.constant 0 : index
    %c7 = arith.constant 7 : index
    %16 = vector.load %arg9[%c0_19, %c7] : memref<16x42xf32, #tpu.memory_space<vmem>>, vector<16x32xf32>
    %c0_20 = arith.constant 0 : index
    %c8 = arith.constant 8 : index
    %17 = vector.load %arg9[%c0_20, %c8] : memref<16x42xf32, #tpu.memory_space<vmem>>, vector<16x32xf32>
    %c0_21 = arith.constant 0 : index
    %c9 = arith.constant 9 : index
    %18 = vector.load %arg9[%c0_21, %c9] : memref<16x42xf32, #tpu.memory_space<vmem>>, vector<16x32xf32>
    %c0_22 = arith.constant 0 : index
    %c10 = arith.constant 10 : index
    %19 = vector.load %arg9[%c0_22, %c10] : memref<16x42xf32, #tpu.memory_space<vmem>>, vector<16x32xf32>
    %20 = tpu.concatenate %9, %10, %11, %12, %13, %14, %15, %16, %17, %18, %19 in 0 : vector<16x32xf32>, vector<16x32xf32>, vector<16x32xf32>, vector<16x32xf32>, vector<16x32xf32>, vector<16x32xf32>, vector<16x32xf32>, vector<16x32xf32>, vector<16x32xf32>, vector<16x32xf32>, vector<16x32xf32> -> vector<176x32xf32>
    %c0_23 = arith.constant 0 : index
    %c0_24 = arith.constant 0 : index
    %21 = vector.load %arg4[%c0_23, %c0_24] : memref<16x176xf32, #tpu.memory_space<vmem>>, vector<16x176xf32>
    %cst_25 = arith.constant dense<0.000000e+00> : vector<16x32xf32>
    %22 = tpu.matmul %21, %20, %cst_25 {dimension_numbers = #tpu.dot_dimension_numbers<[1], [0], [0], [1], [0, 0, 1, 1], [], []>} : vector<16x176xf32>, vector<176x32xf32>, vector<16x32xf32> -> vector<16x32xf32>
    %c0_26 = arith.constant 0 : index
    %c0_27 = arith.constant 0 : index
    %c0_28 = arith.constant 0 : index
    %23 = vector.load %arg2[%c0_26, %c0_27, %c0_28] : memref<1x16x32xf32, #tpu.memory_space<vmem>>, vector<1x16x32xf32>
    %24 = vector.shape_cast %23 : vector<1x16x32xf32> to vector<16x32xf32>
    %cst_29 = arith.constant 0.000000e+00 : f32
    %25 = vector.broadcast %cst_29 : f32 to vector<16x5xf32>
    %c0_30 = arith.constant 0 : index
    %c0_31 = arith.constant 0 : index
    %26 = vector.load %arg10[%c0_30, %c0_31] : memref<16x42xf32, #tpu.memory_space<vmem>>, vector<16x5xf32>
    tpu.vector_store %arg10[%c0_30, %c0_31], %25 {strides = array<i32>} : memref<16x42xf32, #tpu.memory_space<vmem>>, vector<16x5xf32>,
    %cst_32 = arith.constant 0.000000e+00 : f32
    %27 = vector.broadcast %cst_32 : f32 to vector<16x5xf32>
    %c0_33 = arith.constant 0 : index
    %c37_34 = arith.constant 37 : index
    %28 = vector.load %arg10[%c0_33, %c37_34] : memref<16x42xf32, #tpu.memory_space<vmem>>, vector<16x5xf32>
    tpu.vector_store %arg10[%c0_33, %c37_34], %27 {strides = array<i32>} : memref<16x42xf32, #tpu.memory_space<vmem>>, vector<16x5xf32>,
    %c0_35 = arith.constant 0 : index
    %c5_36 = arith.constant 5 : index
    %29 = vector.load %arg10[%c0_35, %c5_36] : memref<16x42xf32, #tpu.memory_space<vmem>>, vector<16x32xf32>
    tpu.vector_store %arg10[%c0_35, %c5_36], %24 {strides = array<i32>} : memref<16x42xf32, #tpu.memory_space<vmem>>, vector<16x32xf32>,
    %c0_37 = arith.constant 0 : index
    %c0_38 = arith.constant 0 : index
    %30 = vector.load %arg10[%c0_37, %c0_38] : memref<16x42xf32, #tpu.memory_space<vmem>>, vector<16x32xf32>
    %c0_39 = arith.constant 0 : index
    %c1_40 = arith.constant 1 : index
    %31 = vector.load %arg10[%c0_39, %c1_40] : memref<16x42xf32, #tpu.memory_space<vmem>>, vector<16x32xf32>
    %c0_41 = arith.constant 0 : index
    %c2_42 = arith.constant 2 : index
    %32 = vector.load %arg10[%c0_41, %c2_42] : memref<16x42xf32, #tpu.memory_space<vmem>>, vector<16x32xf32>
    %c0_43 = arith.constant 0 : index
    %c3_44 = arith.constant 3 : index
    %33 = vector.load %arg10[%c0_43, %c3_44] : memref<16x42xf32, #tpu.memory_space<vmem>>, vector<16x32xf32>
    %c0_45 = arith.constant 0 : index
    %c4_46 = arith.constant 4 : index
    %34 = vector.load %arg10[%c0_45, %c4_46] : memref<16x42xf32, #tpu.memory_space<vmem>>, vector<16x32xf32>
    %c0_47 = arith.constant 0 : index
    %c5_48 = arith.constant 5 : index
    %35 = vector.load %arg10[%c0_47, %c5_48] : memref<16x42xf32, #tpu.memory_space<vmem>>, vector<16x32xf32>
    %c0_49 = arith.constant 0 : index
    %c6_50 = arith.constant 6 : index
    %36 = vector.load %arg10[%c0_49, %c6_50] : memref<16x42xf32, #tpu.memory_space<vmem>>, vector<16x32xf32>
    %c0_51 = arith.constant 0 : index
    %c7_52 = arith.constant 7 : index
    %37 = vector.load %arg10[%c0_51, %c7_52] : memref<16x42xf32, #tpu.memory_space<vmem>>, vector<16x32xf32>
    %c0_53 = arith.constant 0 : index
    %c8_54 = arith.constant 8 : index
    %38 = vector.load %arg10[%c0_53, %c8_54] : memref<16x42xf32, #tpu.memory_space<vmem>>, vector<16x32xf32>
    %c0_55 = arith.constant 0 : index
    %c9_56 = arith.constant 9 : index
    %39 = vector.load %arg10[%c0_55, %c9_56] : memref<16x42xf32, #tpu.memory_space<vmem>>, vector<16x32xf32>
    %c0_57 = arith.constant 0 : index
    %c10_58 = arith.constant 10 : index
    %40 = vector.load %arg10[%c0_57, %c10_58] : memref<16x42xf32, #tpu.memory_space<vmem>>, vector<16x32xf32>
    %41 = tpu.concatenate %30, %31, %32, %33, %34, %35, %36, %37, %38, %39, %40 in 0 : vector<16x32xf32>, vector<16x32xf32>, vector<16x32xf32>, vector<16x32xf32>, vector<16x32xf32>, vector<16x32xf32>, vector<16x32xf32>, vector<16x32xf32>, vector<16x32xf32>, vector<16x32xf32>, vector<16x32xf32> -> vector<176x32xf32>
    %c0_59 = arith.constant 0 : index
    %c0_60 = arith.constant 0 : index
    %42 = vector.load %arg5[%c0_59, %c0_60] : memref<16x176xf32, #tpu.memory_space<vmem>>, vector<16x176xf32>
    %cst_61 = arith.constant dense<0.000000e+00> : vector<16x32xf32>
    %43 = tpu.matmul %42, %41, %cst_61 {dimension_numbers = #tpu.dot_dimension_numbers<[1], [0], [0], [1], [0, 0, 1, 1], [], []>} : vector<16x176xf32>, vector<176x32xf32>, vector<16x32xf32> -> vector<16x32xf32>
    %44 = arith.addf %22, %43 : vector<16x32xf32>
    %c0_62 = arith.constant 0 : index
    %c0_63 = arith.constant 0 : index
    %45 = vector.load %arg6[%c0_62, %c0_63] : memref<16x1xf32, #tpu.memory_space<vmem>>, vector<16x1xf32>
    %46 = vector.broadcast %45 : vector<16x1xf32> to vector<16x32xf32>
    %47 = arith.mulf %44, %46 : vector<16x32xf32>
    %c0_64 = arith.constant 0 : index
    %c0_65 = arith.constant 0 : index
    %48 = vector.load %arg7[%c0_64, %c0_65] : memref<16x1xf32, #tpu.memory_space<vmem>>, vector<16x1xf32>
    %49 = vector.broadcast %48 : vector<16x1xf32> to vector<16x32xf32>
    %50 = arith.addf %47, %49 : vector<16x32xf32>
    %cst_66 = arith.constant 1.000000e-01 : f32
    %51 = vector.broadcast %cst_66 : f32 to vector<16x32xf32>
    %52 = arith.mulf %51, %50 : vector<16x32xf32>
    %53 = arith.maximumf %50, %52 : vector<16x32xf32>
    %c0_67 = arith.constant 0 : index
    %c0_68 = arith.constant 0 : index
    %c0_69 = arith.constant 0 : index
    %54 = vector.load %arg8[%c0_67, %c0_68, %c0_69] : memref<1x16x32xf32, #tpu.memory_space<vmem>>, vector<1x16x32xf32>
    %55 = vector.shape_cast %54 : vector<1x16x32xf32> to vector<16x32xf32>
    %56 = vector.shape_cast %53 : vector<16x32xf32> to vector<1x16x32xf32>
    tpu.vector_store %arg8[%c0_67, %c0_68, %c0_69], %56 {strides = array<i32>} : memref<1x16x32xf32, #tpu.memory_space<vmem>>, vector<1x16x32xf32>,
    return
  }
  func.func @transform_0(%arg0: i32) -> (i32, i32, i32) {
    %c0_i32 = arith.constant 0 : i32
    %c0_i32_0 = arith.constant 0 : i32
    %c0_i32_1 = arith.constant 0 : i32
    return %arg0, %c0_i32, %c0_i32_0 : i32, i32, i32
  }
  func.func @transform_1(%arg0: i32) -> (i32, i32, i32) {
    %c0_i32 = arith.constant 0 : i32
    %c0_i32_0 = arith.constant 0 : i32
    %c0_i32_1 = arith.constant 0 : i32
    return %arg0, %c0_i32, %c0_i32_0 : i32, i32, i32
  }
  func.func @transform_2(%arg0: i32) -> (i32, i32) {
    %c0_i32 = arith.constant 0 : i32
    %c0_i32_0 = arith.constant 0 : i32
    %c0_i32_1 = arith.constant 0 : i32
    return %c0_i32, %c0_i32_0 : i32, i32
  }
  func.func @transform_3(%arg0: i32) -> (i32, i32) {
    %c0_i32 = arith.constant 0 : i32
    %c0_i32_0 = arith.constant 0 : i32
    %c0_i32_1 = arith.constant 0 : i32
    return %c0_i32, %c0_i32_0 : i32, i32
  }
  func.func @transform_4(%arg0: i32) -> (i32, i32) {
    %c0_i32 = arith.constant 0 : i32
    %c0_i32_0 = arith.constant 0 : i32
    %c0_i32_1 = arith.constant 0 : i32
    return %c0_i32, %c0_i32_0 : i32, i32
  }
  func.func @transform_5(%arg0: i32) -> (i32, i32) {
    %c0_i32 = arith.constant 0 : i32
    %c0_i32_0 = arith.constant 0 : i32
    %c0_i32_1 = arith.constant 0 : i32
    return %c0_i32, %c0_i32_0 : i32, i32
  }
  func.func @transform_6(%arg0: i32) -> (i32, i32) {
    %c0_i32 = arith.constant 0 : i32
    %c0_i32_0 = arith.constant 0 : i32
    %c0_i32_1 = arith.constant 0 : i32
    return %c0_i32, %c0_i32_0 : i32, i32
  }
  func.func @transform_7(%arg0: i32) -> (i32, i32, i32) {
    %c0_i32 = arith.constant 0 : i32
    %c0_i32_0 = arith.constant 0 : i32
    %c0_i32_1 = arith.constant 0 : i32
    return %arg0, %c0_i32, %c0_i32_0 : i32, i32, i32
  }
}

module attributes {stable_mosaic.version = 11 : i64} {
  func.func @_decoder_kernel(%arg0: i32, %arg1: memref<1x16x32xf32, #tpu.memory_space<vmem>>, %arg2: memref<1x8x64xf32, #tpu.memory_space<vmem>>, %arg3: memref<32x64xf32, #tpu.memory_space<vmem>>, %arg4: memref<8x176xf32, #tpu.memory_space<vmem>>, %arg5: memref<8x88xf32, #tpu.memory_space<vmem>>, %arg6: memref<8x1xf32, #tpu.memory_space<vmem>>, %arg7: memref<8x1xf32, #tpu.memory_space<vmem>>, %arg8: memref<1x8x64xf32, #tpu.memory_space<vmem>>, %arg9: memref<16x74xf32, #tpu.memory_space<vmem>>, %arg10: memref<8x74xf32, #tpu.memory_space<vmem>>) attributes {dimension_semantics = [#tpu.dimension_semantics<parallel>], iteration_bounds = array<i64: 2>, scalar_prefetch = 0 : i64, scratch_operands = 2 : i64, tpu.core_type = #tpu.core_type<tc>, window_params = [{transform_indices = @transform_0, window_bounds = array<i64: 1, 16, 32>}, {transform_indices = @transform_1, window_bounds = array<i64: 1, 8, 64>}, {pipeline_mode = #tpu.pipeline_mode<synchronous>, transform_indices = @transform_2, window_bounds = array<i64: 32, 64>}, {pipeline_mode = #tpu.pipeline_mode<synchronous>, transform_indices = @transform_3, window_bounds = array<i64: 8, 176>}, {pipeline_mode = #tpu.pipeline_mode<synchronous>, transform_indices = @transform_4, window_bounds = array<i64: 8, 88>}, {pipeline_mode = #tpu.pipeline_mode<synchronous>, transform_indices = @transform_5, window_bounds = array<i64: 8, 1>}, {pipeline_mode = #tpu.pipeline_mode<synchronous>, transform_indices = @transform_6, window_bounds = array<i64: 8, 1>}, {transform_indices = @transform_7, window_bounds = array<i64: 1, 8, 64>}]} {
    %c0 = arith.constant 0 : index
    %c0_0 = arith.constant 0 : index
    %c0_1 = arith.constant 0 : index
    %0 = vector.load %arg1[%c0, %c0_0, %c0_1] : memref<1x16x32xf32, #tpu.memory_space<vmem>>, vector<1x16x32xf32>
    %1 = vector.shape_cast %0 : vector<1x16x32xf32> to vector<16x32xf32>
    %c0_2 = arith.constant 0 : index
    %c0_3 = arith.constant 0 : index
    %2 = vector.load %arg3[%c0_2, %c0_3] : memref<32x64xf32, #tpu.memory_space<vmem>>, vector<32x64xf32>
    %cst = arith.constant dense<0.000000e+00> : vector<16x64xf32>
    %3 = tpu.matmul %1, %2, %cst {dimension_numbers = #tpu.dot_dimension_numbers<[1], [0], [0], [1], [0, 0, 1, 1], [], []>} : vector<16x32xf32>, vector<32x64xf32>, vector<16x64xf32> -> vector<16x64xf32>
    %cst_4 = arith.constant 0.000000e+00 : f32
    %4 = vector.broadcast %cst_4 : f32 to vector<16x5xf32>
    %c0_5 = arith.constant 0 : index
    %c0_6 = arith.constant 0 : index
    %5 = vector.load %arg9[%c0_5, %c0_6] : memref<16x74xf32, #tpu.memory_space<vmem>>, vector<16x5xf32>
    tpu.vector_store %arg9[%c0_5, %c0_6], %4 {strides = array<i32>} : memref<16x74xf32, #tpu.memory_space<vmem>>, vector<16x5xf32>,
    %cst_7 = arith.constant 0.000000e+00 : f32
    %6 = vector.broadcast %cst_7 : f32 to vector<16x5xf32>
    %c0_8 = arith.constant 0 : index
    %c69 = arith.constant 69 : index
    %7 = vector.load %arg9[%c0_8, %c69] : memref<16x74xf32, #tpu.memory_space<vmem>>, vector<16x5xf32>
    tpu.vector_store %arg9[%c0_8, %c69], %6 {strides = array<i32>} : memref<16x74xf32, #tpu.memory_space<vmem>>, vector<16x5xf32>,
    %c0_9 = arith.constant 0 : index
    %c5 = arith.constant 5 : index
    %8 = vector.load %arg9[%c0_9, %c5] : memref<16x74xf32, #tpu.memory_space<vmem>>, vector<16x64xf32>
    tpu.vector_store %arg9[%c0_9, %c5], %3 {strides = array<i32>} : memref<16x74xf32, #tpu.memory_space<vmem>>, vector<16x64xf32>,
    %c0_10 = arith.constant 0 : index
    %c0_11 = arith.constant 0 : index
    %9 = vector.load %arg9[%c0_10, %c0_11] : memref<16x74xf32, #tpu.memory_space<vmem>>, vector<16x64xf32>
    %c0_12 = arith.constant 0 : index
    %c1 = arith.constant 1 : index
    %10 = vector.load %arg9[%c0_12, %c1] : memref<16x74xf32, #tpu.memory_space<vmem>>, vector<16x64xf32>
    %c0_13 = arith.constant 0 : index
    %c2 = arith.constant 2 : index
    %11 = vector.load %arg9[%c0_13, %c2] : memref<16x74xf32, #tpu.memory_space<vmem>>, vector<16x64xf32>
    %c0_14 = arith.constant 0 : index
    %c3 = arith.constant 3 : index
    %12 = vector.load %arg9[%c0_14, %c3] : memref<16x74xf32, #tpu.memory_space<vmem>>, vector<16x64xf32>
    %c0_15 = arith.constant 0 : index
    %c4 = arith.constant 4 : index
    %13 = vector.load %arg9[%c0_15, %c4] : memref<16x74xf32, #tpu.memory_space<vmem>>, vector<16x64xf32>
    %c0_16 = arith.constant 0 : index
    %c5_17 = arith.constant 5 : index
    %14 = vector.load %arg9[%c0_16, %c5_17] : memref<16x74xf32, #tpu.memory_space<vmem>>, vector<16x64xf32>
    %c0_18 = arith.constant 0 : index
    %c6 = arith.constant 6 : index
    %15 = vector.load %arg9[%c0_18, %c6] : memref<16x74xf32, #tpu.memory_space<vmem>>, vector<16x64xf32>
    %c0_19 = arith.constant 0 : index
    %c7 = arith.constant 7 : index
    %16 = vector.load %arg9[%c0_19, %c7] : memref<16x74xf32, #tpu.memory_space<vmem>>, vector<16x64xf32>
    %c0_20 = arith.constant 0 : index
    %c8 = arith.constant 8 : index
    %17 = vector.load %arg9[%c0_20, %c8] : memref<16x74xf32, #tpu.memory_space<vmem>>, vector<16x64xf32>
    %c0_21 = arith.constant 0 : index
    %c9 = arith.constant 9 : index
    %18 = vector.load %arg9[%c0_21, %c9] : memref<16x74xf32, #tpu.memory_space<vmem>>, vector<16x64xf32>
    %c0_22 = arith.constant 0 : index
    %c10 = arith.constant 10 : index
    %19 = vector.load %arg9[%c0_22, %c10] : memref<16x74xf32, #tpu.memory_space<vmem>>, vector<16x64xf32>
    %20 = tpu.concatenate %9, %10, %11, %12, %13, %14, %15, %16, %17, %18, %19 in 0 : vector<16x64xf32>, vector<16x64xf32>, vector<16x64xf32>, vector<16x64xf32>, vector<16x64xf32>, vector<16x64xf32>, vector<16x64xf32>, vector<16x64xf32>, vector<16x64xf32>, vector<16x64xf32>, vector<16x64xf32> -> vector<176x64xf32>
    %c0_23 = arith.constant 0 : index
    %c0_24 = arith.constant 0 : index
    %21 = vector.load %arg4[%c0_23, %c0_24] : memref<8x176xf32, #tpu.memory_space<vmem>>, vector<8x176xf32>
    %cst_25 = arith.constant dense<0.000000e+00> : vector<8x64xf32>
    %22 = tpu.matmul %21, %20, %cst_25 {dimension_numbers = #tpu.dot_dimension_numbers<[1], [0], [0], [1], [0, 0, 1, 1], [], []>} : vector<8x176xf32>, vector<176x64xf32>, vector<8x64xf32> -> vector<8x64xf32>
    %c0_26 = arith.constant 0 : index
    %c0_27 = arith.constant 0 : index
    %c0_28 = arith.constant 0 : index
    %23 = vector.load %arg2[%c0_26, %c0_27, %c0_28] : memref<1x8x64xf32, #tpu.memory_space<vmem>>, vector<1x8x64xf32>
    %24 = vector.shape_cast %23 : vector<1x8x64xf32> to vector<8x64xf32>
    %cst_29 = arith.constant 0.000000e+00 : f32
    %25 = vector.broadcast %cst_29 : f32 to vector<8x5xf32>
    %c0_30 = arith.constant 0 : index
    %c0_31 = arith.constant 0 : index
    %26 = vector.load %arg10[%c0_30, %c0_31] : memref<8x74xf32, #tpu.memory_space<vmem>>, vector<8x5xf32>
    tpu.vector_store %arg10[%c0_30, %c0_31], %25 {strides = array<i32>} : memref<8x74xf32, #tpu.memory_space<vmem>>, vector<8x5xf32>,
    %cst_32 = arith.constant 0.000000e+00 : f32
    %27 = vector.broadcast %cst_32 : f32 to vector<8x5xf32>
    %c0_33 = arith.constant 0 : index
    %c69_34 = arith.constant 69 : index
    %28 = vector.load %arg10[%c0_33, %c69_34] : memref<8x74xf32, #tpu.memory_space<vmem>>, vector<8x5xf32>
    tpu.vector_store %arg10[%c0_33, %c69_34], %27 {strides = array<i32>} : memref<8x74xf32, #tpu.memory_space<vmem>>, vector<8x5xf32>,
    %c0_35 = arith.constant 0 : index
    %c5_36 = arith.constant 5 : index
    %29 = vector.load %arg10[%c0_35, %c5_36] : memref<8x74xf32, #tpu.memory_space<vmem>>, vector<8x64xf32>
    tpu.vector_store %arg10[%c0_35, %c5_36], %24 {strides = array<i32>} : memref<8x74xf32, #tpu.memory_space<vmem>>, vector<8x64xf32>,
    %c0_37 = arith.constant 0 : index
    %c0_38 = arith.constant 0 : index
    %30 = vector.load %arg10[%c0_37, %c0_38] : memref<8x74xf32, #tpu.memory_space<vmem>>, vector<8x64xf32>
    %c0_39 = arith.constant 0 : index
    %c1_40 = arith.constant 1 : index
    %31 = vector.load %arg10[%c0_39, %c1_40] : memref<8x74xf32, #tpu.memory_space<vmem>>, vector<8x64xf32>
    %c0_41 = arith.constant 0 : index
    %c2_42 = arith.constant 2 : index
    %32 = vector.load %arg10[%c0_41, %c2_42] : memref<8x74xf32, #tpu.memory_space<vmem>>, vector<8x64xf32>
    %c0_43 = arith.constant 0 : index
    %c3_44 = arith.constant 3 : index
    %33 = vector.load %arg10[%c0_43, %c3_44] : memref<8x74xf32, #tpu.memory_space<vmem>>, vector<8x64xf32>
    %c0_45 = arith.constant 0 : index
    %c4_46 = arith.constant 4 : index
    %34 = vector.load %arg10[%c0_45, %c4_46] : memref<8x74xf32, #tpu.memory_space<vmem>>, vector<8x64xf32>
    %c0_47 = arith.constant 0 : index
    %c5_48 = arith.constant 5 : index
    %35 = vector.load %arg10[%c0_47, %c5_48] : memref<8x74xf32, #tpu.memory_space<vmem>>, vector<8x64xf32>
    %c0_49 = arith.constant 0 : index
    %c6_50 = arith.constant 6 : index
    %36 = vector.load %arg10[%c0_49, %c6_50] : memref<8x74xf32, #tpu.memory_space<vmem>>, vector<8x64xf32>
    %c0_51 = arith.constant 0 : index
    %c7_52 = arith.constant 7 : index
    %37 = vector.load %arg10[%c0_51, %c7_52] : memref<8x74xf32, #tpu.memory_space<vmem>>, vector<8x64xf32>
    %c0_53 = arith.constant 0 : index
    %c8_54 = arith.constant 8 : index
    %38 = vector.load %arg10[%c0_53, %c8_54] : memref<8x74xf32, #tpu.memory_space<vmem>>, vector<8x64xf32>
    %c0_55 = arith.constant 0 : index
    %c9_56 = arith.constant 9 : index
    %39 = vector.load %arg10[%c0_55, %c9_56] : memref<8x74xf32, #tpu.memory_space<vmem>>, vector<8x64xf32>
    %c0_57 = arith.constant 0 : index
    %c10_58 = arith.constant 10 : index
    %40 = vector.load %arg10[%c0_57, %c10_58] : memref<8x74xf32, #tpu.memory_space<vmem>>, vector<8x64xf32>
    %41 = tpu.concatenate %30, %31, %32, %33, %34, %35, %36, %37, %38, %39, %40 in 0 : vector<8x64xf32>, vector<8x64xf32>, vector<8x64xf32>, vector<8x64xf32>, vector<8x64xf32>, vector<8x64xf32>, vector<8x64xf32>, vector<8x64xf32>, vector<8x64xf32>, vector<8x64xf32>, vector<8x64xf32> -> vector<88x64xf32>
    %c0_59 = arith.constant 0 : index
    %c0_60 = arith.constant 0 : index
    %42 = vector.load %arg5[%c0_59, %c0_60] : memref<8x88xf32, #tpu.memory_space<vmem>>, vector<8x88xf32>
    %cst_61 = arith.constant dense<0.000000e+00> : vector<8x64xf32>
    %43 = tpu.matmul %42, %41, %cst_61 {dimension_numbers = #tpu.dot_dimension_numbers<[1], [0], [0], [1], [0, 0, 1, 1], [], []>} : vector<8x88xf32>, vector<88x64xf32>, vector<8x64xf32> -> vector<8x64xf32>
    %44 = arith.addf %22, %43 : vector<8x64xf32>
    %c0_62 = arith.constant 0 : index
    %c0_63 = arith.constant 0 : index
    %45 = vector.load %arg6[%c0_62, %c0_63] : memref<8x1xf32, #tpu.memory_space<vmem>>, vector<8x1xf32>
    %46 = vector.broadcast %45 : vector<8x1xf32> to vector<8x64xf32>
    %47 = arith.mulf %44, %46 : vector<8x64xf32>
    %c0_64 = arith.constant 0 : index
    %c0_65 = arith.constant 0 : index
    %48 = vector.load %arg7[%c0_64, %c0_65] : memref<8x1xf32, #tpu.memory_space<vmem>>, vector<8x1xf32>
    %49 = vector.broadcast %48 : vector<8x1xf32> to vector<8x64xf32>
    %50 = arith.addf %47, %49 : vector<8x64xf32>
    %cst_66 = arith.constant 1.000000e-01 : f32
    %51 = vector.broadcast %cst_66 : f32 to vector<8x64xf32>
    %52 = arith.mulf %51, %50 : vector<8x64xf32>
    %53 = arith.maximumf %50, %52 : vector<8x64xf32>
    %c0_67 = arith.constant 0 : index
    %c0_68 = arith.constant 0 : index
    %c0_69 = arith.constant 0 : index
    %54 = vector.load %arg8[%c0_67, %c0_68, %c0_69] : memref<1x8x64xf32, #tpu.memory_space<vmem>>, vector<1x8x64xf32>
    %55 = vector.shape_cast %54 : vector<1x8x64xf32> to vector<8x64xf32>
    %56 = vector.shape_cast %53 : vector<8x64xf32> to vector<1x8x64xf32>
    tpu.vector_store %arg8[%c0_67, %c0_68, %c0_69], %56 {strides = array<i32>} : memref<1x8x64xf32, #tpu.memory_space<vmem>>, vector<1x8x64xf32>,
    return
  }
  func.func @transform_0(%arg0: i32) -> (i32, i32, i32) {
    %c0_i32 = arith.constant 0 : i32
    %c0_i32_0 = arith.constant 0 : i32
    %c0_i32_1 = arith.constant 0 : i32
    return %arg0, %c0_i32, %c0_i32_0 : i32, i32, i32
  }
  func.func @transform_1(%arg0: i32) -> (i32, i32, i32) {
    %c0_i32 = arith.constant 0 : i32
    %c0_i32_0 = arith.constant 0 : i32
    %c0_i32_1 = arith.constant 0 : i32
    return %arg0, %c0_i32, %c0_i32_0 : i32, i32, i32
  }
  func.func @transform_2(%arg0: i32) -> (i32, i32) {
    %c0_i32 = arith.constant 0 : i32
    %c0_i32_0 = arith.constant 0 : i32
    %c0_i32_1 = arith.constant 0 : i32
    return %c0_i32, %c0_i32_0 : i32, i32
  }
  func.func @transform_3(%arg0: i32) -> (i32, i32) {
    %c0_i32 = arith.constant 0 : i32
    %c0_i32_0 = arith.constant 0 : i32
    %c0_i32_1 = arith.constant 0 : i32
    return %c0_i32, %c0_i32_0 : i32, i32
  }
  func.func @transform_4(%arg0: i32) -> (i32, i32) {
    %c0_i32 = arith.constant 0 : i32
    %c0_i32_0 = arith.constant 0 : i32
    %c0_i32_1 = arith.constant 0 : i32
    return %c0_i32, %c0_i32_0 : i32, i32
  }
  func.func @transform_5(%arg0: i32) -> (i32, i32) {
    %c0_i32 = arith.constant 0 : i32
    %c0_i32_0 = arith.constant 0 : i32
    %c0_i32_1 = arith.constant 0 : i32
    return %c0_i32, %c0_i32_0 : i32, i32
  }
  func.func @transform_6(%arg0: i32) -> (i32, i32) {
    %c0_i32 = arith.constant 0 : i32
    %c0_i32_0 = arith.constant 0 : i32
    %c0_i32_1 = arith.constant 0 : i32
    return %c0_i32, %c0_i32_0 : i32, i32
  }
  func.func @transform_7(%arg0: i32) -> (i32, i32, i32) {
    %c0_i32 = arith.constant 0 : i32
    %c0_i32_0 = arith.constant 0 : i32
    %c0_i32_1 = arith.constant 0 : i32
    return %arg0, %c0_i32, %c0_i32_0 : i32, i32, i32
  }
}

module attributes {stable_mosaic.version = 11 : i64} {
  func.func @_out_kernel(%arg0: i32, %arg1: memref<1x8x128xf32, #tpu.memory_space<vmem>>, %arg2: memref<1x8x128xf32, #tpu.memory_space<vmem>>, %arg3: memref<8x8xf32, #tpu.memory_space<vmem>>, %arg4: memref<8x8xf32, #tpu.memory_space<vmem>>, %arg5: memref<8x1xf32, #tpu.memory_space<vmem>>, %arg6: memref<1x8x128xf32, #tpu.memory_space<vmem>>) attributes {dimension_semantics = [#tpu.dimension_semantics<parallel>], iteration_bounds = array<i64: 2>, scalar_prefetch = 0 : i64, scratch_operands = 0 : i64, tpu.core_type = #tpu.core_type<tc>, window_params = [{transform_indices = @transform_0, window_bounds = array<i64: 1, 8, 128>}, {transform_indices = @transform_1, window_bounds = array<i64: 1, 8, 128>}, {pipeline_mode = #tpu.pipeline_mode<synchronous>, transform_indices = @transform_2, window_bounds = array<i64: 8, 8>}, {pipeline_mode = #tpu.pipeline_mode<synchronous>, transform_indices = @transform_3, window_bounds = array<i64: 8, 8>}, {pipeline_mode = #tpu.pipeline_mode<synchronous>, transform_indices = @transform_4, window_bounds = array<i64: 8, 1>}, {transform_indices = @transform_5, window_bounds = array<i64: 1, 8, 128>}]} {
    %c0 = arith.constant 0 : index
    %c0_0 = arith.constant 0 : index
    %0 = vector.load %arg3[%c0, %c0_0] : memref<8x8xf32, #tpu.memory_space<vmem>>, vector<8x8xf32>
    %c0_1 = arith.constant 0 : index
    %c0_2 = arith.constant 0 : index
    %c0_3 = arith.constant 0 : index
    %1 = vector.load %arg1[%c0_1, %c0_2, %c0_3] : memref<1x8x128xf32, #tpu.memory_space<vmem>>, vector<1x8x128xf32>
    %2 = vector.shape_cast %1 : vector<1x8x128xf32> to vector<8x128xf32>
    %cst = arith.constant dense<0.000000e+00> : vector<8x128xf32>
    %3 = tpu.matmul %0, %2, %cst {dimension_numbers = #tpu.dot_dimension_numbers<[1], [0], [0], [1], [0, 0, 1, 1], [], []>} : vector<8x8xf32>, vector<8x128xf32>, vector<8x128xf32> -> vector<8x128xf32>
    %c0_4 = arith.constant 0 : index
    %c0_5 = arith.constant 0 : index
    %4 = vector.load %arg4[%c0_4, %c0_5] : memref<8x8xf32, #tpu.memory_space<vmem>>, vector<8x8xf32>
    %c0_6 = arith.constant 0 : index
    %c0_7 = arith.constant 0 : index
    %c0_8 = arith.constant 0 : index
    %5 = vector.load %arg2[%c0_6, %c0_7, %c0_8] : memref<1x8x128xf32, #tpu.memory_space<vmem>>, vector<1x8x128xf32>
    %6 = vector.shape_cast %5 : vector<1x8x128xf32> to vector<8x128xf32>
    %cst_9 = arith.constant dense<0.000000e+00> : vector<8x128xf32>
    %7 = tpu.matmul %4, %6, %cst_9 {dimension_numbers = #tpu.dot_dimension_numbers<[1], [0], [0], [1], [0, 0, 1, 1], [], []>} : vector<8x8xf32>, vector<8x128xf32>, vector<8x128xf32> -> vector<8x128xf32>
    %8 = arith.addf %3, %7 : vector<8x128xf32>
    %c0_10 = arith.constant 0 : index
    %c0_11 = arith.constant 0 : index
    %9 = vector.load %arg5[%c0_10, %c0_11] : memref<8x1xf32, #tpu.memory_space<vmem>>, vector<8x1xf32>
    %10 = vector.broadcast %9 : vector<8x1xf32> to vector<8x128xf32>
    %11 = arith.addf %8, %10 : vector<8x128xf32>
    %12 = math.tanh %11 : vector<8x128xf32>
    %c0_12 = arith.constant 0 : index
    %c0_13 = arith.constant 0 : index
    %c0_14 = arith.constant 0 : index
    %13 = vector.load %arg6[%c0_12, %c0_13, %c0_14] : memref<1x8x128xf32, #tpu.memory_space<vmem>>, vector<1x8x128xf32>
    %14 = vector.shape_cast %13 : vector<1x8x128xf32> to vector<8x128xf32>
    %15 = vector.shape_cast %12 : vector<8x128xf32> to vector<1x8x128xf32>
    tpu.vector_store %arg6[%c0_12, %c0_13, %c0_14], %15 {strides = array<i32>} : memref<1x8x128xf32, #tpu.memory_space<vmem>>, vector<1x8x128xf32>,
    return
  }
  func.func @transform_0(%arg0: i32) -> (i32, i32, i32) {
    %c0_i32 = arith.constant 0 : i32
    %c0_i32_0 = arith.constant 0 : i32
    %c0_i32_1 = arith.constant 0 : i32
    return %arg0, %c0_i32, %c0_i32_0 : i32, i32, i32
  }
  func.func @transform_1(%arg0: i32) -> (i32, i32, i32) {
    %c0_i32 = arith.constant 0 : i32
    %c0_i32_0 = arith.constant 0 : i32
    %c0_i32_1 = arith.constant 0 : i32
    return %arg0, %c0_i32, %c0_i32_0 : i32, i32, i32
  }
  func.func @transform_2(%arg0: i32) -> (i32, i32) {
    %c0_i32 = arith.constant 0 : i32
    %c0_i32_0 = arith.constant 0 : i32
    %c0_i32_1 = arith.constant 0 : i32
    return %c0_i32, %c0_i32_0 : i32, i32
  }
  func.func @transform_3(%arg0: i32) -> (i32, i32) {
    %c0_i32 = arith.constant 0 : i32
    %c0_i32_0 = arith.constant 0 : i32
    %c0_i32_1 = arith.constant 0 : i32
    return %c0_i32, %c0_i32_0 : i32, i32
  }
  func.func @transform_4(%arg0: i32) -> (i32, i32) {
    %c0_i32 = arith.constant 0 : i32
    %c0_i32_0 = arith.constant 0 : i32
    %c0_i32_1 = arith.constant 0 : i32
    return %c0_i32, %c0_i32_0 : i32, i32
  }
  func.func @transform_5(%arg0: i32) -> (i32, i32, i32) {
    %c0_i32 = arith.constant 0 : i32
    %c0_i32_0 = arith.constant 0 : i32
    %c0_i32_1 = arith.constant 0 : i32
    return %arg0, %c0_i32, %c0_i32_0 : i32, i32, i32
  }
}

module attributes {stable_mosaic.version = 11 : i64} {
  func.func @_decoder_kernel(%arg0: i32, %arg1: memref<1x8x64xf32, #tpu.memory_space<vmem>>, %arg2: memref<1x8x128xf32, #tpu.memory_space<vmem>>, %arg3: memref<64x128xf32, #tpu.memory_space<vmem>>, %arg4: memref<8x88xf32, #tpu.memory_space<vmem>>, %arg5: memref<8x88xf32, #tpu.memory_space<vmem>>, %arg6: memref<8x1xf32, #tpu.memory_space<vmem>>, %arg7: memref<8x1xf32, #tpu.memory_space<vmem>>, %arg8: memref<1x8x128xf32, #tpu.memory_space<vmem>>, %arg9: memref<8x138xf32, #tpu.memory_space<vmem>>, %arg10: memref<8x138xf32, #tpu.memory_space<vmem>>) attributes {dimension_semantics = [#tpu.dimension_semantics<parallel>], iteration_bounds = array<i64: 2>, scalar_prefetch = 0 : i64, scratch_operands = 2 : i64, tpu.core_type = #tpu.core_type<tc>, window_params = [{transform_indices = @transform_0, window_bounds = array<i64: 1, 8, 64>}, {transform_indices = @transform_1, window_bounds = array<i64: 1, 8, 128>}, {pipeline_mode = #tpu.pipeline_mode<synchronous>, transform_indices = @transform_2, window_bounds = array<i64: 64, 128>}, {pipeline_mode = #tpu.pipeline_mode<synchronous>, transform_indices = @transform_3, window_bounds = array<i64: 8, 88>}, {pipeline_mode = #tpu.pipeline_mode<synchronous>, transform_indices = @transform_4, window_bounds = array<i64: 8, 88>}, {pipeline_mode = #tpu.pipeline_mode<synchronous>, transform_indices = @transform_5, window_bounds = array<i64: 8, 1>}, {pipeline_mode = #tpu.pipeline_mode<synchronous>, transform_indices = @transform_6, window_bounds = array<i64: 8, 1>}, {transform_indices = @transform_7, window_bounds = array<i64: 1, 8, 128>}]} {
    %c0 = arith.constant 0 : index
    %c0_0 = arith.constant 0 : index
    %c0_1 = arith.constant 0 : index
    %0 = vector.load %arg1[%c0, %c0_0, %c0_1] : memref<1x8x64xf32, #tpu.memory_space<vmem>>, vector<1x8x64xf32>
    %1 = vector.shape_cast %0 : vector<1x8x64xf32> to vector<8x64xf32>
    %c0_2 = arith.constant 0 : index
    %c0_3 = arith.constant 0 : index
    %2 = vector.load %arg3[%c0_2, %c0_3] : memref<64x128xf32, #tpu.memory_space<vmem>>, vector<64x128xf32>
    %cst = arith.constant dense<0.000000e+00> : vector<8x128xf32>
    %3 = tpu.matmul %1, %2, %cst {dimension_numbers = #tpu.dot_dimension_numbers<[1], [0], [0], [1], [0, 0, 1, 1], [], []>} : vector<8x64xf32>, vector<64x128xf32>, vector<8x128xf32> -> vector<8x128xf32>
    %cst_4 = arith.constant 0.000000e+00 : f32
    %4 = vector.broadcast %cst_4 : f32 to vector<8x5xf32>
    %c0_5 = arith.constant 0 : index
    %c0_6 = arith.constant 0 : index
    %5 = vector.load %arg9[%c0_5, %c0_6] : memref<8x138xf32, #tpu.memory_space<vmem>>, vector<8x5xf32>
    tpu.vector_store %arg9[%c0_5, %c0_6], %4 {strides = array<i32>} : memref<8x138xf32, #tpu.memory_space<vmem>>, vector<8x5xf32>,
    %cst_7 = arith.constant 0.000000e+00 : f32
    %6 = vector.broadcast %cst_7 : f32 to vector<8x5xf32>
    %c0_8 = arith.constant 0 : index
    %c133 = arith.constant 133 : index
    %7 = vector.load %arg9[%c0_8, %c133] : memref<8x138xf32, #tpu.memory_space<vmem>>, vector<8x5xf32>
    tpu.vector_store %arg9[%c0_8, %c133], %6 {strides = array<i32>} : memref<8x138xf32, #tpu.memory_space<vmem>>, vector<8x5xf32>,
    %c0_9 = arith.constant 0 : index
    %c5 = arith.constant 5 : index
    %8 = vector.load %arg9[%c0_9, %c5] : memref<8x138xf32, #tpu.memory_space<vmem>>, vector<8x128xf32>
    tpu.vector_store %arg9[%c0_9, %c5], %3 {strides = array<i32>} : memref<8x138xf32, #tpu.memory_space<vmem>>, vector<8x128xf32>,
    %c0_10 = arith.constant 0 : index
    %c0_11 = arith.constant 0 : index
    %9 = vector.load %arg9[%c0_10, %c0_11] : memref<8x138xf32, #tpu.memory_space<vmem>>, vector<8x128xf32>
    %c0_12 = arith.constant 0 : index
    %c1 = arith.constant 1 : index
    %10 = vector.load %arg9[%c0_12, %c1] : memref<8x138xf32, #tpu.memory_space<vmem>>, vector<8x128xf32>
    %c0_13 = arith.constant 0 : index
    %c2 = arith.constant 2 : index
    %11 = vector.load %arg9[%c0_13, %c2] : memref<8x138xf32, #tpu.memory_space<vmem>>, vector<8x128xf32>
    %c0_14 = arith.constant 0 : index
    %c3 = arith.constant 3 : index
    %12 = vector.load %arg9[%c0_14, %c3] : memref<8x138xf32, #tpu.memory_space<vmem>>, vector<8x128xf32>
    %c0_15 = arith.constant 0 : index
    %c4 = arith.constant 4 : index
    %13 = vector.load %arg9[%c0_15, %c4] : memref<8x138xf32, #tpu.memory_space<vmem>>, vector<8x128xf32>
    %c0_16 = arith.constant 0 : index
    %c5_17 = arith.constant 5 : index
    %14 = vector.load %arg9[%c0_16, %c5_17] : memref<8x138xf32, #tpu.memory_space<vmem>>, vector<8x128xf32>
    %c0_18 = arith.constant 0 : index
    %c6 = arith.constant 6 : index
    %15 = vector.load %arg9[%c0_18, %c6] : memref<8x138xf32, #tpu.memory_space<vmem>>, vector<8x128xf32>
    %c0_19 = arith.constant 0 : index
    %c7 = arith.constant 7 : index
    %16 = vector.load %arg9[%c0_19, %c7] : memref<8x138xf32, #tpu.memory_space<vmem>>, vector<8x128xf32>
    %c0_20 = arith.constant 0 : index
    %c8 = arith.constant 8 : index
    %17 = vector.load %arg9[%c0_20, %c8] : memref<8x138xf32, #tpu.memory_space<vmem>>, vector<8x128xf32>
    %c0_21 = arith.constant 0 : index
    %c9 = arith.constant 9 : index
    %18 = vector.load %arg9[%c0_21, %c9] : memref<8x138xf32, #tpu.memory_space<vmem>>, vector<8x128xf32>
    %c0_22 = arith.constant 0 : index
    %c10 = arith.constant 10 : index
    %19 = vector.load %arg9[%c0_22, %c10] : memref<8x138xf32, #tpu.memory_space<vmem>>, vector<8x128xf32>
    %20 = tpu.concatenate %9, %10, %11, %12, %13, %14, %15, %16, %17, %18, %19 in 0 : vector<8x128xf32>, vector<8x128xf32>, vector<8x128xf32>, vector<8x128xf32>, vector<8x128xf32>, vector<8x128xf32>, vector<8x128xf32>, vector<8x128xf32>, vector<8x128xf32>, vector<8x128xf32>, vector<8x128xf32> -> vector<88x128xf32>
    %c0_23 = arith.constant 0 : index
    %c0_24 = arith.constant 0 : index
    %21 = vector.load %arg4[%c0_23, %c0_24] : memref<8x88xf32, #tpu.memory_space<vmem>>, vector<8x88xf32>
    %cst_25 = arith.constant dense<0.000000e+00> : vector<8x128xf32>
    %22 = tpu.matmul %21, %20, %cst_25 {dimension_numbers = #tpu.dot_dimension_numbers<[1], [0], [0], [1], [0, 0, 1, 1], [], []>} : vector<8x88xf32>, vector<88x128xf32>, vector<8x128xf32> -> vector<8x128xf32>
    %c0_26 = arith.constant 0 : index
    %c0_27 = arith.constant 0 : index
    %c0_28 = arith.constant 0 : index
    %23 = vector.load %arg2[%c0_26, %c0_27, %c0_28] : memref<1x8x128xf32, #tpu.memory_space<vmem>>, vector<1x8x128xf32>
    %24 = vector.shape_cast %23 : vector<1x8x128xf32> to vector<8x128xf32>
    %cst_29 = arith.constant 0.000000e+00 : f32
    %25 = vector.broadcast %cst_29 : f32 to vector<8x5xf32>
    %c0_30 = arith.constant 0 : index
    %c0_31 = arith.constant 0 : index
    %26 = vector.load %arg10[%c0_30, %c0_31] : memref<8x138xf32, #tpu.memory_space<vmem>>, vector<8x5xf32>
    tpu.vector_store %arg10[%c0_30, %c0_31], %25 {strides = array<i32>} : memref<8x138xf32, #tpu.memory_space<vmem>>, vector<8x5xf32>,
    %cst_32 = arith.constant 0.000000e+00 : f32
    %27 = vector.broadcast %cst_32 : f32 to vector<8x5xf32>
    %c0_33 = arith.constant 0 : index
    %c133_34 = arith.constant 133 : index
    %28 = vector.load %arg10[%c0_33, %c133_34] : memref<8x138xf32, #tpu.memory_space<vmem>>, vector<8x5xf32>
    tpu.vector_store %arg10[%c0_33, %c133_34], %27 {strides = array<i32>} : memref<8x138xf32, #tpu.memory_space<vmem>>, vector<8x5xf32>,
    %c0_35 = arith.constant 0 : index
    %c5_36 = arith.constant 5 : index
    %29 = vector.load %arg10[%c0_35, %c5_36] : memref<8x138xf32, #tpu.memory_space<vmem>>, vector<8x128xf32>
    tpu.vector_store %arg10[%c0_35, %c5_36], %24 {strides = array<i32>} : memref<8x138xf32, #tpu.memory_space<vmem>>, vector<8x128xf32>,
    %c0_37 = arith.constant 0 : index
    %c0_38 = arith.constant 0 : index
    %30 = vector.load %arg10[%c0_37, %c0_38] : memref<8x138xf32, #tpu.memory_space<vmem>>, vector<8x128xf32>
    %c0_39 = arith.constant 0 : index
    %c1_40 = arith.constant 1 : index
    %31 = vector.load %arg10[%c0_39, %c1_40] : memref<8x138xf32, #tpu.memory_space<vmem>>, vector<8x128xf32>
    %c0_41 = arith.constant 0 : index
    %c2_42 = arith.constant 2 : index
    %32 = vector.load %arg10[%c0_41, %c2_42] : memref<8x138xf32, #tpu.memory_space<vmem>>, vector<8x128xf32>
    %c0_43 = arith.constant 0 : index
    %c3_44 = arith.constant 3 : index
    %33 = vector.load %arg10[%c0_43, %c3_44] : memref<8x138xf32, #tpu.memory_space<vmem>>, vector<8x128xf32>
    %c0_45 = arith.constant 0 : index
    %c4_46 = arith.constant 4 : index
    %34 = vector.load %arg10[%c0_45, %c4_46] : memref<8x138xf32, #tpu.memory_space<vmem>>, vector<8x128xf32>
    %c0_47 = arith.constant 0 : index
    %c5_48 = arith.constant 5 : index
    %35 = vector.load %arg10[%c0_47, %c5_48] : memref<8x138xf32, #tpu.memory_space<vmem>>, vector<8x128xf32>
    %c0_49 = arith.constant 0 : index
    %c6_50 = arith.constant 6 : index
    %36 = vector.load %arg10[%c0_49, %c6_50] : memref<8x138xf32, #tpu.memory_space<vmem>>, vector<8x128xf32>
    %c0_51 = arith.constant 0 : index
    %c7_52 = arith.constant 7 : index
    %37 = vector.load %arg10[%c0_51, %c7_52] : memref<8x138xf32, #tpu.memory_space<vmem>>, vector<8x128xf32>
    %c0_53 = arith.constant 0 : index
    %c8_54 = arith.constant 8 : index
    %38 = vector.load %arg10[%c0_53, %c8_54] : memref<8x138xf32, #tpu.memory_space<vmem>>, vector<8x128xf32>
    %c0_55 = arith.constant 0 : index
    %c9_56 = arith.constant 9 : index
    %39 = vector.load %arg10[%c0_55, %c9_56] : memref<8x138xf32, #tpu.memory_space<vmem>>, vector<8x128xf32>
    %c0_57 = arith.constant 0 : index
    %c10_58 = arith.constant 10 : index
    %40 = vector.load %arg10[%c0_57, %c10_58] : memref<8x138xf32, #tpu.memory_space<vmem>>, vector<8x128xf32>
    %41 = tpu.concatenate %30, %31, %32, %33, %34, %35, %36, %37, %38, %39, %40 in 0 : vector<8x128xf32>, vector<8x128xf32>, vector<8x128xf32>, vector<8x128xf32>, vector<8x128xf32>, vector<8x128xf32>, vector<8x128xf32>, vector<8x128xf32>, vector<8x128xf32>, vector<8x128xf32>, vector<8x128xf32> -> vector<88x128xf32>
    %c0_59 = arith.constant 0 : index
    %c0_60 = arith.constant 0 : index
    %42 = vector.load %arg5[%c0_59, %c0_60] : memref<8x88xf32, #tpu.memory_space<vmem>>, vector<8x88xf32>
    %cst_61 = arith.constant dense<0.000000e+00> : vector<8x128xf32>
    %43 = tpu.matmul %42, %41, %cst_61 {dimension_numbers = #tpu.dot_dimension_numbers<[1], [0], [0], [1], [0, 0, 1, 1], [], []>} : vector<8x88xf32>, vector<88x128xf32>, vector<8x128xf32> -> vector<8x128xf32>
    %44 = arith.addf %22, %43 : vector<8x128xf32>
    %c0_62 = arith.constant 0 : index
    %c0_63 = arith.constant 0 : index
    %45 = vector.load %arg6[%c0_62, %c0_63] : memref<8x1xf32, #tpu.memory_space<vmem>>, vector<8x1xf32>
    %46 = vector.broadcast %45 : vector<8x1xf32> to vector<8x128xf32>
    %47 = arith.mulf %44, %46 : vector<8x128xf32>
    %c0_64 = arith.constant 0 : index
    %c0_65 = arith.constant 0 : index
    %48 = vector.load %arg7[%c0_64, %c0_65] : memref<8x1xf32, #tpu.memory_space<vmem>>, vector<8x1xf32>
    %49 = vector.broadcast %48 : vector<8x1xf32> to vector<8x128xf32>
    %50 = arith.addf %47, %49 : vector<8x128xf32>
    %cst_66 = arith.constant 1.000000e-01 : f32
    %51 = vector.broadcast %cst_66 : f32 to vector<8x128xf32>
    %52 = arith.mulf %51, %50 : vector<8x128xf32>
    %53 = arith.maximumf %50, %52 : vector<8x128xf32>
    %c0_67 = arith.constant 0 : index
    %c0_68 = arith.constant 0 : index
    %c0_69 = arith.constant 0 : index
    %54 = vector.load %arg8[%c0_67, %c0_68, %c0_69] : memref<1x8x128xf32, #tpu.memory_space<vmem>>, vector<1x8x128xf32>
    %55 = vector.shape_cast %54 : vector<1x8x128xf32> to vector<8x128xf32>
    %56 = vector.shape_cast %53 : vector<8x128xf32> to vector<1x8x128xf32>
    tpu.vector_store %arg8[%c0_67, %c0_68, %c0_69], %56 {strides = array<i32>} : memref<1x8x128xf32, #tpu.memory_space<vmem>>, vector<1x8x128xf32>,
    return
  }
  func.func @transform_0(%arg0: i32) -> (i32, i32, i32) {
    %c0_i32 = arith.constant 0 : i32
    %c0_i32_0 = arith.constant 0 : i32
    %c0_i32_1 = arith.constant 0 : i32
    return %arg0, %c0_i32, %c0_i32_0 : i32, i32, i32
  }
  func.func @transform_1(%arg0: i32) -> (i32, i32, i32) {
    %c0_i32 = arith.constant 0 : i32
    %c0_i32_0 = arith.constant 0 : i32
    %c0_i32_1 = arith.constant 0 : i32
    return %arg0, %c0_i32, %c0_i32_0 : i32, i32, i32
  }
  func.func @transform_2(%arg0: i32) -> (i32, i32) {
    %c0_i32 = arith.constant 0 : i32
    %c0_i32_0 = arith.constant 0 : i32
    %c0_i32_1 = arith.constant 0 : i32
    return %c0_i32, %c0_i32_0 : i32, i32
  }
  func.func @transform_3(%arg0: i32) -> (i32, i32) {
    %c0_i32 = arith.constant 0 : i32
    %c0_i32_0 = arith.constant 0 : i32
    %c0_i32_1 = arith.constant 0 : i32
    return %c0_i32, %c0_i32_0 : i32, i32
  }
  func.func @transform_4(%arg0: i32) -> (i32, i32) {
    %c0_i32 = arith.constant 0 : i32
    %c0_i32_0 = arith.constant 0 : i32
    %c0_i32_1 = arith.constant 0 : i32
    return %c0_i32, %c0_i32_0 : i32, i32
  }
  func.func @transform_5(%arg0: i32) -> (i32, i32) {
    %c0_i32 = arith.constant 0 : i32
    %c0_i32_0 = arith.constant 0 : i32
    %c0_i32_1 = arith.constant 0 : i32
    return %c0_i32, %c0_i32_0 : i32, i32
  }
  func.func @transform_6(%arg0: i32) -> (i32, i32) {
    %c0_i32 = arith.constant 0 : i32
    %c0_i32_0 = arith.constant 0 : i32
    %c0_i32_1 = arith.constant 0 : i32
    return %c0_i32, %c0_i32_0 : i32, i32
  }
  func.func @transform_7(%arg0: i32) -> (i32, i32, i32) {
    %c0_i32 = arith.constant 0 : i32
    %c0_i32_0 = arith.constant 0 : i32
    %c0_i32_1 = arith.constant 0 : i32
    return %arg0, %c0_i32, %c0_i32_0 : i32, i32, i32
  }
}

</mosaic_0001>

<llo_original>
// kernel: unet_forward.9
$region0: #{unet_forward.9}
  #allocation0 [shape = 'u32[]', space=smem, size = 0x4, offset = 0x4, fixed_abs, tag = 'smem constant byte address 0x4 - core index']
  #allocation1 [shape = 'u32[144,128]{1,0:T(1,128)}', space=vmem, size = 0x12000, scoped, tag = 'internal scratch']
  #allocation2 [shape = 'f32[8,74]{1,0:T(8,128)}', space=vmem, size = 0x1000, scoped, tag = 'scratch operand']
  %s0 = inlined_call_operand.vmem [shape: f32[2,8,64], index: 0, kind: input, shape index: {}]
  %s1 = inlined_call_operand.vmem [shape: f32[8,88], index: 1, kind: input, shape index: {}]
  %s2 = inlined_call_operand.vmem [shape: f32[8,1], index: 2, kind: input, shape index: {}]
  %s3 = inlined_call_operand.vmem [shape: f32[8,1], index: 3, kind: input, shape index: {}]
  %s4 = inlined_call_operand.vmem [shape: f32[64,32], index: 4, kind: input, shape index: {}]
  %s5 = inlined_call_operand.vmem [shape: f32[2,8,64], index: 5, kind: output, shape index: {0}]
  %s6 = inlined_call_operand.vmem [shape: f32[2,8,32], index: 6, kind: output, shape index: {1}]
  %7 = xla_tuple %s5, %s6
  %s8 = sld [smem:[#allocation0]]
  $region61: #{unet_forward.9} parent=0
    _
  %s10 = ssub.s32 1, %s8
  %s11 = scalar_select 0, %s10, %s8
  loop: start=0, step=1, limit=4
  $region2: #{unet_forward.9} parent=0 // loop_pre_header
    _
  $region3: #{unet_forward.9} parent=0 // loop_header
    %s13 = sphi 0, %s17
    %p14 = scmp.ge.s32.totalorder %s13, 4
    %s23 = sphi 0, %s25
    %s26 = sphi 0, %s23
    %s27 = sphi 0, %s26
    %s43 = sphi 0, %s27
    %s47 = sphi 0, %s47
    %s49 = sphi 0, %s47
    %s50 = sphi 0, %s49
    %s64 = sphi 0, %s50
    %s68 = sphi 0, %s68
    %s70 = sphi 0, %s68
    %s71 = sphi 0, %s70
    %s85 = sphi 0, %s71
    %s89 = sphi 0, %s89
    %s91 = sphi 0, %s89
    %s92 = sphi 0, %s91
    %s106 = sphi 0, %s92
    %s110 = sphi 0, %s110
    %s112 = sphi 0, %s110
    %s113 = sphi 0, %s112
    %s127 = sphi 0, %s113
    %s133 = sphi 0, %s135
    %s136 = sphi 0, %s133
    %s137 = sphi 0, %s136
    %s153 = sphi 0, %s137
    %s159 = sphi 0, %s161
    %s162 = sphi 0, %s159
    %s163 = sphi 0, %s162
    %s179 = sphi 0, %s163
  $region4: #{unet_forward.9} parent=0 // loop_header_branch
    %16 = sbr.rel (%p14) target = $region8
  $region5: #{unet_forward.9} parent=0 // loop_body
    %s18 = ssub.s32 %s13, 1
    %s19 = ssub.s32 %s13, 2
    %s20 = sadd.s32 %s13, 1
    %s21 = ssub.s32 %s13, %s20
    %p22 = scmp.eq.s32.totalorder %s21, 0
    %s24 = sadd.s32 %s23, 1
    %s25 = scalar_select %p22, %s23, %s24
    %p28 = pneg %p22
    %p29 = scmp.eq.s32.totalorder %s13, 1
    %p30 = por %p28, %p29
    %p31 = scmp.ne.s32.totalorder %s23, %s26
    %p32 = scmp.eq.s32.totalorder %s13, 0
    %p33 = por %p31, %p32
    %p34 = scmp.ne.s32.totalorder %s23, %s26
    %p35 = scmp.eq.s32.totalorder %s18, 1
    %p36 = por %p34, %p35
    %p37 = scmp.ne.s32.totalorder %s26, %s27
    %p38 = scmp.eq.s32.totalorder %s18, 0
    %p39 = por %p37, %p38
    %p40 = scmp.ne.s32.totalorder %s26, %s27
    %p41 = scmp.eq.s32.totalorder %s19, 1
    %p42 = por %p40, %p41
    %p44 = scmp.ne.s32.totalorder %s27, %s43
    %p45 = scmp.eq.s32.totalorder %s19, 0
    %p46 = por %p44, %p45
    %s48 = sadd.s32 %s47, 1
    %p51 = scmp.eq.s32.totalorder %s13, 1
    %p52 = scmp.ne.s32.totalorder %s47, %s49
    %p53 = scmp.eq.s32.totalorder %s13, 0
    %p54 = por %p52, %p53
    %p55 = scmp.ne.s32.totalorder %s47, %s49
    %p56 = scmp.eq.s32.totalorder %s18, 1
    %p57 = por %p55, %p56
    %p58 = scmp.ne.s32.totalorder %s49, %s50
    %p59 = scmp.eq.s32.totalorder %s18, 0
    %p60 = por %p58, %p59
    %p61 = scmp.ne.s32.totalorder %s49, %s50
    %p62 = scmp.eq.s32.totalorder %s19, 1
    %p63 = por %p61, %p62
    %p65 = scmp.ne.s32.totalorder %s50, %s64
    %p66 = scmp.eq.s32.totalorder %s19, 0
    %p67 = por %p65, %p66
    %s69 = sadd.s32 %s68, 1
    %p72 = scmp.eq.s32.totalorder %s13, 1
    %p73 = scmp.ne.s32.totalorder %s68, %s70
    %p74 = scmp.eq.s32.totalorder %s13, 0
    %p75 = por %p73, %p74
    %p76 = scmp.ne.s32.totalorder %s68, %s70
    %p77 = scmp.eq.s32.totalorder %s18, 1
    %p78 = por %p76, %p77
    %p79 = scmp.ne.s32.totalorder %s70, %s71
    %p80 = scmp.eq.s32.totalorder %s18, 0
    %p81 = por %p79, %p80
    %p82 = scmp.ne.s32.totalorder %s70, %s71
    %p83 = scmp.eq.s32.totalorder %s19, 1
    %p84 = por %p82, %p83
    %p86 = scmp.ne.s32.totalorder %s71, %s85
    %p87 = scmp.eq.s32.totalorder %s19, 0
    %p88 = por %p86, %p87
    %s90 = sadd.s32 %s89, 1
    %p93 = scmp.eq.s32.totalorder %s13, 1
    %p94 = scmp.ne.s32.totalorder %s89, %s91
    %p95 = scmp.eq.s32.totalorder %s13, 0
    %p96 = por %p94, %p95
    %p97 = scmp.ne.s32.totalorder %s89, %s91
    %p98 = scmp.eq.s32.totalorder %s18, 1
    %p99 = por %p97, %p98
    %p100 = scmp.ne.s32.totalorder %s91, %s92
    %p101 = scmp.eq.s32.totalorder %s18, 0
    %p102 = por %p100, %p101
    %p103 = scmp.ne.s32.totalorder %s91, %s92
    %p104 = scmp.eq.s32.totalorder %s19, 1
    %p105 = por %p103, %p104
    %p107 = scmp.ne.s32.totalorder %s92, %s106
    %p108 = scmp.eq.s32.totalorder %s19, 0
    %p109 = por %p107, %p108
    %s111 = sadd.s32 %s110, 1
    %p114 = scmp.eq.s32.totalorder %s13, 1
    %p115 = scmp.ne.s32.totalorder %s110, %s112
    %p116 = scmp.eq.s32.totalorder %s13, 0
    %p117 = por %p115, %p116
    %p118 = scmp.ne.s32.totalorder %s110, %s112
    %p119 = scmp.eq.s32.totalorder %s18, 1
    %p120 = por %p118, %p119
    %p121 = scmp.ne.s32.totalorder %s112, %s113
    %p122 = scmp.eq.s32.totalorder %s18, 0
    %p123 = por %p121, %p122
    %p124 = scmp.ne.s32.totalorder %s112, %s113
    %p125 = scmp.eq.s32.totalorder %s19, 1
    %p126 = por %p124, %p125
    %p128 = scmp.ne.s32.totalorder %s113, %s127
    %p129 = scmp.eq.s32.totalorder %s19, 0
    %p130 = por %p128, %p129
    %s131 = ssub.s32 %s13, %s20
    %p132 = scmp.eq.s32.totalorder %s131, 0
    %s134 = sadd.s32 %s133, 1
    %s135 = scalar_select %p132, %s133, %s134
    %p138 = pneg %p132
    %p139 = scmp.eq.s32.totalorder %s13, 1
    %p140 = por %p138, %p139
    %p141 = scmp.ne.s32.totalorder %s133, %s136
    %p142 = scmp.eq.s32.totalorder %s13, 0
    %p143 = por %p141, %p142
    %p144 = scmp.ne.s32.totalorder %s133, %s136
    %p145 = scmp.eq.s32.totalorder %s18, 1
    %p146 = por %p144, %p145
    %p147 = scmp.ne.s32.totalorder %s136, %s137
    %p148 = scmp.eq.s32.totalorder %s18, 0
    %p149 = por %p147, %p148
    %p150 = scmp.ne.s32.totalorder %s136, %s137
    %p151 = scmp.eq.s32.totalorder %s19, 1
    %p152 = por %p150, %p151
    %p154 = scmp.ne.s32.totalorder %s137, %s153
    %p155 = scmp.eq.s32.totalorder %s19, 0
    %p156 = por %p154, %p155
    %s157 = ssub.s32 %s13, %s20
    %p158 = scmp.eq.s32.totalorder %s157, 0
    %s160 = sadd.s32 %s159, 1
    %s161 = scalar_select %p158, %s159, %s160
    %p164 = pneg %p158
    %p165 = scmp.eq.s32.totalorder %s13, 1
    %p166 = por %p164, %p165
    %p167 = scmp.ne.s32.totalorder %s159, %s162
    %p168 = scmp.eq.s32.totalorder %s13, 0
    %p169 = por %p167, %p168
    %p170 = scmp.ne.s32.totalorder %s159, %s162
    %p171 = scmp.eq.s32.totalorder %s18, 1
    %p172 = por %p170, %p171
    %p173 = scmp.ne.s32.totalorder %s162, %s163
    %p174 = scmp.eq.s32.totalorder %s18, 0
    %p175 = por %p173, %p174
    %p176 = scmp.ne.s32.totalorder %s162, %s163
    %p177 = scmp.eq.s32.totalorder %s19, 1
    %p178 = por %p176, %p177
    %p180 = scmp.ne.s32.totalorder %s163, %s179
    %p181 = scmp.eq.s32.totalorder %s19, 0
    %p182 = por %p180, %p181
    %p183 = scmp.le.s32.totalorder 1, %s13
    %p184 = scmp.lt.s32.totalorder %s13, 3
    %p185 = pnand %p183, %p184
    %p186 = pneg %p185
    // Predicated region
    $region9: #{unet_forward.9} parent=5 // pred_check
      _
    $region10: #{unet_forward.9} parent=5 // pred_check_branch
      %188 = sbr.rel (%p185) target = $region12
    $region11: #{unet_forward.9} parent=5 // pred_region
      %s189 = ssub.s32 %s13, 1
      // Predicated region
      $region13: #{unet_forward.9} parent=11 // pred_check
        %p190 = pneg %p60
      $region14: #{unet_forward.9} parent=11 // pred_check_branch
        %192 = sbr.rel (%p190) target = $region16
      $region15: #{unet_forward.9} parent=11 // pred_region
        _
      $region16: #{unet_forward.9} parent=11 // pred_fallthru
        _
      // Predicated region
      $region17: #{unet_forward.9} parent=11 // pred_check
        %p193 = pneg %p81
      $region18: #{unet_forward.9} parent=11 // pred_check_branch
        %195 = sbr.rel (%p193) target = $region20
      $region19: #{unet_forward.9} parent=11 // pred_region
        _
      $region20: #{unet_forward.9} parent=11 // pred_fallthru
        _
      // Predicated region
      $region21: #{unet_forward.9} parent=11 // pred_check
        %p196 = pneg %p102
      $region22: #{unet_forward.9} parent=11 // pred_check_branch
        %198 = sbr.rel (%p196) target = $region24
      $region23: #{unet_forward.9} parent=11 // pred_region
        _
      $region24: #{unet_forward.9} parent=11 // pred_fallthru
        _
      // Predicated region
      $region25: #{unet_forward.9} parent=11 // pred_check
        %p199 = pneg %p123
      $region26: #{unet_forward.9} parent=11 // pred_check_branch
        %201 = sbr.rel (%p199) target = $region28
      $region27: #{unet_forward.9} parent=11 // pred_region
        _
      $region28: #{unet_forward.9} parent=11 // pred_fallthru
        _
    $region12: #{unet_forward.9} parent=5 // pred_fallthru
      _
    %p202 = scmp.lt.s32.totalorder %s13, 2
    // Predicated region
    $region29: #{unet_forward.9} parent=5 // pred_check
      %p203 = pneg %p202
    $region30: #{unet_forward.9} parent=5 // pred_check_branch
      %205 = sbr.rel (%p203) target = $region32
    $region31: #{unet_forward.9} parent=5 // pred_region
      // Predicated region
      $region33: #{unet_forward.9} parent=31 // pred_check
        %p206 = pneg %p33
      $region34: #{unet_forward.9} parent=31 // pred_check_branch
        %208 = sbr.rel (%p206) target = $region36
      $region35: #{unet_forward.9} parent=31 // pred_region
        %p209 = scmp.lt.s32.totalorder %s13, 1
        %s210 = scalar_select %p209, %s13, 1
        %s211 = smul.addr %s210, 8
        %s212 = scalar_lea.vmem %s0, %s211
      $region36: #{unet_forward.9} parent=31 // pred_fallthru
        _
    $region32: #{unet_forward.9} parent=5 // pred_fallthru
      _
    %p213 = scmp.le.s32.totalorder 1, %s13
    %p214 = scmp.lt.s32.totalorder %s13, 3
    %p215 = pnand %p213, %p214
    %p216 = pneg %p215
    // Predicated region
    $region37: #{unet_forward.9} parent=5 // pred_check
      _
    $region38: #{unet_forward.9} parent=5 // pred_check_branch
      %218 = sbr.rel (%p215) target = $region40
    $region39: #{unet_forward.9} parent=5 // pred_region
      %s219 = ssub.s32 %s13, 1
      %p220 = scmp.lt.s32.totalorder %s18, 1
      %s221 = scalar_select %p220, %s18, 1
      %s222 = smul.addr %s221, 8
      %s223 = scalar_lea.vmem %s0, %s222
      %p224 = pneg %p39
      %p225 = pneg %p36
      %p226 = pneg %p60
      %p227 = pneg %p57
      %p228 = pneg %p81
      %p229 = pneg %p78
      %p230 = pneg %p102
      %p231 = pneg %p99
      %p232 = pneg %p123
      %p233 = pneg %p120
      %p234 = pneg %p149
      %p235 = pneg %p146
      %p236 = scmp.lt.s32.totalorder %s18, 1
      %s237 = scalar_select %p236, %s18, 1
      %s238 = smul.addr %s237, 8
      %s239 = scalar_lea.vmem %s5, %s238
      %p240 = pneg %p175
      %p241 = pneg %p172
      %p242 = scmp.lt.s32.totalorder %s18, 1
      %s243 = scalar_select %p242, %s18, 1
      %s244 = smul.addr %s243, 8
      %s245 = scalar_lea.vmem %s6, %s244
      %p246 = scmp.lt.s32.totalorder %s18, 1
      %s247 = scalar_select %p246, %s18, 1
      %s248 = smul.addr %s247, 8
      %s249 = scalar_lea.vmem %s0, %s248
      %p250 = scmp.lt.s32.totalorder %s18, 1
      %s251 = scalar_select %p250, %s18, 1
      %s252 = smul.addr %s251, 8
      %s253 = scalar_lea.vmem %s5, %s252
      %p254 = scmp.lt.s32.totalorder %s18, 1
      %s255 = scalar_select %p254, %s18, 1
      %s256 = smul.addr %s255, 8
      %s257 = scalar_lea.vmem %s6, %s256
      %v258 = vld [vmem:[%s249] sm:$0xff]
      %vm259 = vcmask 39936
      %260 = vst.msk [vmem:[#allocation2] sm:$0xff] %vm259, 0.0
      %vm261 = vcmask 605736
      %262 = vst.msk [vmem:[#allocation2] sm:$0xff] %vm261, 0.0
      %264 = vrot.lane.b32.xlu0 %v258, 5
      %v265 = vpop.permute.xlu0 %264
      %vm267 = vcmask 564264
      %268 = vst.msk [vmem:[#allocation2] sm:$0xff] %vm267, %v265
      %v269 = vld [vmem:[#allocation2] sm:$0xff]
      %271 = vrot.lane.b32.xlu0 %v269, 127
      %v272 = vpop.permute.xlu0 %271
      %274 = vrot.lane.b32.xlu0 %v269, 126
      %v275 = vpop.permute.xlu0 %274
      %277 = vrot.lane.b32.xlu0 %v269, 125
      %v278 = vpop.permute.xlu0 %277
      %280 = vrot.lane.b32.xlu0 %v269, 124
      %v281 = vpop.permute.xlu0 %280
      %283 = vrot.lane.b32.xlu0 %v269, 123
      %v284 = vpop.permute.xlu0 %283
      %286 = vrot.lane.b32.xlu0 %v269, 122
      %v287 = vpop.permute.xlu0 %286
      %289 = vrot.lane.b32.xlu0 %v269, 121
      %v290 = vpop.permute.xlu0 %289
      %292 = vrot.lane.b32.xlu0 %v269, 120
      %v293 = vpop.permute.xlu0 %292
      %295 = vrot.lane.b32.xlu0 %v269, 119
      %v296 = vpop.permute.xlu0 %295
      %298 = vrot.lane.b32.xlu0 %v269, 118
      %v299 = vpop.permute.xlu0 %298
      %v301 = vld [vmem:[%s1] sm:$0xff]
      %vm302 = vcmask 719872
      %v304 = vsel %vm302, %v301, 0
      %306 = vmatprep.subr.mxu0 0.0
      %307 = vmatpush1.msra.mxu0 %v269
      %308 = vmatprep.subr.mxu0 0.0
      %309 = vmatpush1.msra.mxu0 %v272
      %310 = vmatprep.subr.mxu0 0.0
      %311 = vmatpush1.msra.mxu0 %v275
      %312 = vmatprep.subr.mxu0 0.0
      %313 = vmatpush1.msra.mxu0 %v278
      %314 = vmatprep.subr.mxu0 0.0
      %315 = vmatpush1.msra.mxu0 %v281
      %316 = vmatprep.subr.mxu0 0.0
      %317 = vmatpush1.msra.mxu0 %v284
      %318 = vmatprep.subr.mxu0 0.0
      %319 = vmatpush1.msra.mxu0 %v287
      %320 = vmatprep.subr.mxu0 0.0
      %321 = vmatpush1.msra.mxu0 %v290
      %322 = vmatprep.subr.mxu0 0.0
      %323 = vmatpush1.msra.mxu0 %v293
      %324 = vmatprep.subr.mxu0 0.0
      %325 = vmatpush1.msra.mxu0 %v296
      %326 = vmatprep.subr.mxu0 0.0
      %327 = vmatpush1.msra.mxu0 %v299
      %328 = vmatprep.subr.mxu0 0.0
      %329 = vmatpush1.msra.mxu0 0.0
      %330 = vmatprep.subr.mxu0 0.0
      %331 = vmatpush1.msra.mxu0 0.0
      %332 = vmatprep.subr.mxu0 0.0
      %333 = vmatpush1.msra.mxu0 0.0
      %334 = vmatprep.subr.mxu0 0.0
      %335 = vmatpush1.msra.mxu0 0.0
      %336 = vmatprep.subr.mxu0 0.0
      %337 = vmatpush1.msra.mxu0 0.0
      %338 = vmatprep.subr.mxu0 0.0
      %339 = vmatpush1.msra.mxu0 0.0
      %340 = vmatprep.subr.mxu0 0.0
      %341 = vmatpush1.msra.mxu0 0.0
      %342 = vmatprep.subr.mxu0 0.0
      %343 = vmatpush1.msra.mxu0 0.0
      %344 = vmatprep.subr.mxu0 0.0
      %345 = vmatpush1.msra.mxu0 0.0
      %346 = vmatprep.subr.mxu0 0.0
      %347 = vmatpush1.msra.mxu0 0.0
      %348 = vmatprep.subr.mxu0 0.0
      %349 = vmatpush1.msra.mxu0 0.0
      %350 = vmatprep.subr.mxu0 0.0
      %351 = vmatpush1.msra.mxu0 0.0
      %352 = vmatprep.subr.mxu0 0.0
      %353 = vmatpush1.msra.mxu0 0.0
      %354 = vmatprep.subr.mxu0 0.0
      %355 = vmatpush1.msra.mxu0 0.0
      %356 = vmatprep.subr.mxu0 0.0
      %357 = vmatpush1.msra.mxu0 0.0
      %358 = vmatprep.subr.mxu0 0.0
      %359 = vmatpush1.msra.mxu0 0.0
      %360 = vmatprep.subr.mxu0 0.0
      %361 = vmatpush1.msra.mxu0 0.0
      %362 = vmatprep.subr.mxu0 0.0
      %363 = vmatpush1.msra.mxu0 0.0
      %364 = vmatprep.subr.mxu0 0.0
      %365 = vmatpush1.msra.mxu0 0.0
      %366 = vmatprep.subr.mxu0 0.0
      %367 = vmatpush1.msra.mxu0 0.0
      %368 = vmatprep.subr.mxu0 0.0
      %369 = vmatpush1.msra.mxu0 0.0
      %370 = vmatprep.mubr.f32.mxu0 0.0
      %371 = vmatmul.mubr.f32.gmra.mrb[0].mxu0 %v304
      %v372 = vpop.f32.mrb[0].mxu0
      %v373 = vadd.f32 0.0, %v372
      %v374 = vpop.f32.mrb[0].mxu0
      %375 = vdwg.mxu0
      %v376 = vld [vmem:[%s2] sm:$0xff]
      %378 = vset.pattern.permute.xlu0 0
      %379 = vperm.xlu0 %378, %v376
      %v380 = vpop.permute.xlu0 %379
      %v382 = vmul.f32 %v373, %v380
      %v383 = vld [vmem:[%s3] sm:$0xff]
      %385 = vset.pattern.permute.xlu0 0
      %386 = vperm.xlu0 %385, %v383
      %v387 = vpop.permute.xlu0 %386
      %v389 = vadd.f32 %v382, %v387
      %v390 = vmul.f32 %v389, 0.1
      %v391 = vmax.f32 %v389, %v390
      %vm392 = vcmask 523264
      %393 = vst.msk [vmem:[%s253] sm:$0xff] %vm392, %v391
      %v394 = vld [vmem:[%s4] sm:$0xff]
      %v395 = vld [vmem:[%s4 + $0x8] sm:$0xff]
      %v396 = vld [vmem:[%s4 + $0x10] sm:$0xff]
      %v397 = vld [vmem:[%s4 + $0x18] sm:$0xff]
      %v398 = vld [vmem:[%s4 + $0x20] sm:$0xff]
      %v399 = vld [vmem:[%s4 + $0x28] sm:$0xff]
      %v400 = vld [vmem:[%s4 + $0x30] sm:$0xff]
      %v401 = vld [vmem:[%s4 + $0x38] sm:$0xff]
      %v403 = vsel %vm392, %v391, 0
      %405 = vmatprep.subr.mxu0 0.0
      %406 = vmatpush1.msra.mxu0 %v394
      %407 = vmatprep.subr.mxu0 0.0
      %408 = vmatpush1.msra.mxu0 %v395
      %409 = vmatprep.subr.mxu0 0.0
      %410 = vmatpush1.msra.mxu0 %v396
      %411 = vmatprep.subr.mxu0 0.0
      %412 = vmatpush1.msra.mxu0 %v397
      %413 = vmatprep.subr.mxu0 0.0
      %414 = vmatpush1.msra.mxu0 %v398
      %415 = vmatprep.subr.mxu0 0.0
      %416 = vmatpush1.msra.mxu0 %v399
      %417 = vmatprep.subr.mxu0 0.0
      %418 = vmatpush1.msra.mxu0 %v400
      %419 = vmatprep.subr.mxu0 0.0
      %420 = vmatpush1.msra.mxu0 %v401
      %421 = vmatprep.subr.mxu0 0.0
      %422 = vmatpush1.msra.mxu0 0.0
      %423 = vmatprep.subr.mxu0 0.0
      %424 = vmatpush1.msra.mxu0 0.0
      %425 = vmatprep.subr.mxu0 0.0
      %426 = vmatpush1.msra.mxu0 0.0
      %427 = vmatprep.subr.mxu0 0.0
      %428 = vmatpush1.msra.mxu0 0.0
      %429 = vmatprep.subr.mxu0 0.0
      %430 = vmatpush1.msra.mxu0 0.0
      %431 = vmatprep.subr.mxu0 0.0
      %432 = vmatpush1.msra.mxu0 0.0
      %433 = vmatprep.subr.mxu0 0.0
      %434 = vmatpush1.msra.mxu0 0.0
      %435 = vmatprep.subr.mxu0 0.0
      %436 = vmatpush1.msra.mxu0 0.0
      %437 = vmatprep.subr.mxu0 0.0
      %438 = vmatpush1.msra.mxu0 0.0
      %439 = vmatprep.subr.mxu0 0.0
      %440 = vmatpush1.msra.mxu0 0.0
      %441 = vmatprep.subr.mxu0 0.0
      %442 = vmatpush1.msra.mxu0 0.0
      %443 = vmatprep.subr.mxu0 0.0
      %444 = vmatpush1.msra.mxu0 0.0
      %445 = vmatprep.subr.mxu0 0.0
      %446 = vmatpush1.msra.mxu0 0.0
      %447 = vmatprep.subr.mxu0 0.0
      %448 = vmatpush1.msra.mxu0 0.0
      %449 = vmatprep.subr.mxu0 0.0
      %450 = vmatpush1.msra.mxu0 0.0
      %451 = vmatprep.subr.mxu0 0.0
      %452 = vmatpush1.msra.mxu0 0.0
      %453 = vmatprep.subr.mxu0 0.0
      %454 = vmatpush1.msra.mxu0 0.0
      %455 = vmatprep.subr.mxu0 0.0
      %456 = vmatpush1.msra.mxu0 0.0
      %457 = vmatprep.subr.mxu0 0.0
      %458 = vmatpush1.msra.mxu0 0.0
      %459 = vmatprep.subr.mxu0 0.0
      %460 = vmatpush1.msra.mxu0 0.0
      %461 = vmatprep.subr.mxu0 0.0
      %462 = vmatpush1.msra.mxu0 0.0
      %463 = vmatprep.subr.mxu0 0.0
      %464 = vmatpush1.msra.mxu0 0.0
      %465 = vmatprep.subr.mxu0 0.0
      %466 = vmatpush1.msra.mxu0 0.0
      %467 = vmatprep.subr.mxu0 0.0
      %468 = vmatpush1.msra.mxu0 0.0
      %469 = vmatprep.mubr.f32.mxu0 0.0
      %470 = vmatmul.mubr.f32.gmra.mrb[0].mxu0 %v403
      %v471 = vpop.f32.mrb[0].mxu0
      %v472 = vadd.f32 0.0, %v471
      %v473 = vpop.f32.mrb[0].mxu0
      %474 = vdwg.mxu0
      %vm475 = vcmask 261120
      %476 = vst.msk [vmem:[%s257] sm:$0xff] %vm475, %v472
      %p477 = scmp.lt.s32.totalorder %s18, 1
      %s478 = scalar_select %p477, %s18, 1
      %s479 = smul.addr %s478, 8
      %s480 = scalar_lea.vmem %s5, %s479
      %p481 = scmp.lt.s32.totalorder %s18, 1
      %s482 = scalar_select %p481, %s18, 1
      %s483 = smul.addr %s482, 8
      %s484 = scalar_lea.vmem %s6, %s483
      // Predicated region
      $region41: #{unet_forward.9} parent=39 // pred_check
        %p485 = pneg %p146
      $region42: #{unet_forward.9} parent=39 // pred_check_branch
        %487 = sbr.rel (%p485) target = $region44
      $region43: #{unet_forward.9} parent=39 // pred_region
        _
      $region44: #{unet_forward.9} parent=39 // pred_fallthru
        _
      // Predicated region
      $region45: #{unet_forward.9} parent=39 // pred_check
        %p488 = pneg %p172
      $region46: #{unet_forward.9} parent=39 // pred_check_branch
        %490 = sbr.rel (%p488) target = $region48
      $region47: #{unet_forward.9} parent=39 // pred_region
        _
      $region48: #{unet_forward.9} parent=39 // pred_fallthru
        _
    $region40: #{unet_forward.9} parent=5 // pred_fallthru
      _
    %p491 = scmp.le.s32.totalorder 2, %s13
    // Predicated region
    $region49: #{unet_forward.9} parent=5 // pred_check
      %p492 = pneg %p491
    $region50: #{unet_forward.9} parent=5 // pred_check_branch
      %494 = sbr.rel (%p492) target = $region52
    $region51: #{unet_forward.9} parent=5 // pred_region
      %s495 = ssub.s32 %s13, 2
      // Predicated region
      $region53: #{unet_forward.9} parent=51 // pred_check
        %p496 = pneg %p152
      $region54: #{unet_forward.9} parent=51 // pred_check_branch
        %498 = sbr.rel (%p496) target = $region56
      $region55: #{unet_forward.9} parent=51 // pred_region
        %p499 = scmp.lt.s32.totalorder %s19, 1
        %s500 = scalar_select %p499, %s19, 1
        %s501 = smul.addr %s500, 8
        %s502 = scalar_lea.vmem %s5, %s501
      $region56: #{unet_forward.9} parent=51 // pred_fallthru
        _
      // Predicated region
      $region57: #{unet_forward.9} parent=51 // pred_check
        %p503 = pneg %p178
      $region58: #{unet_forward.9} parent=51 // pred_check_branch
        %505 = sbr.rel (%p503) target = $region60
      $region59: #{unet_forward.9} parent=51 // pred_region
        %p506 = scmp.lt.s32.totalorder %s19, 1
        %s507 = scalar_select %p506, %s19, 1
        %s508 = smul.addr %s507, 8
        %s509 = scalar_lea.vmem %s6, %s508
      $region60: #{unet_forward.9} parent=51 // pred_fallthru
        _
    $region52: #{unet_forward.9} parent=5 // pred_fallthru
      _
  $region6: #{unet_forward.9} parent=0 // loop_footer
    %s17 = sadd.s32 1, %s13
  $region7: #{unet_forward.9} parent=0 // loop_footer_branch
    %12 = sbr.rel target = $region3
  $region8: #{unet_forward.9} parent=0 // loop_exit
    _

// kernel: unet_forward.8
$region0: #{unet_forward.8}
  #allocation0 [shape = 'u32[]', space=smem, size = 0x4, offset = 0x4, fixed_abs, tag = 'smem constant byte address 0x4 - core index']
  #allocation1 [shape = 'u32[144,128]{1,0:T(1,128)}', space=vmem, size = 0x12000, scoped, tag = 'internal scratch']
  #allocation2 [shape = 'f32[8,138]{1,0:T(8,128)}', space=vmem, size = 0x2000, scoped, tag = 'scratch operand']
  %s0 = inlined_call_operand.vmem [shape: f32[2,8,128], index: 0, kind: input, shape index: {}]
  %s1 = inlined_call_operand.vmem [shape: f32[8,88], index: 1, kind: input, shape index: {}]
  %s2 = inlined_call_operand.vmem [shape: f32[8,1], index: 2, kind: input, shape index: {}]
  %s3 = inlined_call_operand.vmem [shape: f32[8,1], index: 3, kind: input, shape index: {}]
  %s4 = inlined_call_operand.vmem [shape: f32[128,64], index: 4, kind: input, shape index: {}]
  %s5 = inlined_call_operand.vmem [shape: f32[2,8,128], index: 5, kind: output, shape index: {0}]
  %s6 = inlined_call_operand.vmem [shape: f32[2,8,64], index: 6, kind: output, shape index: {1}]
  %7 = xla_tuple %s5, %s6
  %s8 = sld [smem:[#allocation0]]
  $region61: #{unet_forward.8} parent=0
    _
  %s10 = ssub.s32 1, %s8
  %s11 = scalar_select 0, %s10, %s8
  loop: start=0, step=1, limit=4
  $region2: #{unet_forward.8} parent=0 // loop_pre_header
    _
  $region3: #{unet_forward.8} parent=0 // loop_header
    %s13 = sphi 0, %s17
    %p14 = scmp.ge.s32.totalorder %s13, 4
    %s23 = sphi 0, %s25
    %s26 = sphi 0, %s23
    %s27 = sphi 0, %s26
    %s43 = sphi 0, %s27
    %s47 = sphi 0, %s47
    %s49 = sphi 0, %s47
    %s50 = sphi 0, %s49
    %s64 = sphi 0, %s50
    %s68 = sphi 0, %s68
    %s70 = sphi 0, %s68
    %s71 = sphi 0, %s70
    %s85 = sphi 0, %s71
    %s89 = sphi 0, %s89
    %s91 = sphi 0, %s89
    %s92 = sphi 0, %s91
    %s106 = sphi 0, %s92
    %s110 = sphi 0, %s110
    %s112 = sphi 0, %s110
    %s113 = sphi 0, %s112
    %s127 = sphi 0, %s113
    %s133 = sphi 0, %s135
    %s136 = sphi 0, %s133
    %s137 = sphi 0, %s136
    %s153 = sphi 0, %s137
    %s159 = sphi 0, %s161
    %s162 = sphi 0, %s159
    %s163 = sphi 0, %s162
    %s179 = sphi 0, %s163
  $region4: #{unet_forward.8} parent=0 // loop_header_branch
    %16 = sbr.rel (%p14) target = $region8
  $region5: #{unet_forward.8} parent=0 // loop_body
    %s18 = ssub.s32 %s13, 1
    %s19 = ssub.s32 %s13, 2
    %s20 = sadd.s32 %s13, 1
    %s21 = ssub.s32 %s13, %s20
    %p22 = scmp.eq.s32.totalorder %s21, 0
    %s24 = sadd.s32 %s23, 1
    %s25 = scalar_select %p22, %s23, %s24
    %p28 = pneg %p22
    %p29 = scmp.eq.s32.totalorder %s13, 1
    %p30 = por %p28, %p29
    %p31 = scmp.ne.s32.totalorder %s23, %s26
    %p32 = scmp.eq.s32.totalorder %s13, 0
    %p33 = por %p31, %p32
    %p34 = scmp.ne.s32.totalorder %s23, %s26
    %p35 = scmp.eq.s32.totalorder %s18, 1
    %p36 = por %p34, %p35
    %p37 = scmp.ne.s32.totalorder %s26, %s27
    %p38 = scmp.eq.s32.totalorder %s18, 0
    %p39 = por %p37, %p38
    %p40 = scmp.ne.s32.totalorder %s26, %s27
    %p41 = scmp.eq.s32.totalorder %s19, 1
    %p42 = por %p40, %p41
    %p44 = scmp.ne.s32.totalorder %s27, %s43
    %p45 = scmp.eq.s32.totalorder %s19, 0
    %p46 = por %p44, %p45
    %s48 = sadd.s32 %s47, 1
    %p51 = scmp.eq.s32.totalorder %s13, 1
    %p52 = scmp.ne.s32.totalorder %s47, %s49
    %p53 = scmp.eq.s32.totalorder %s13, 0
    %p54 = por %p52, %p53
    %p55 = scmp.ne.s32.totalorder %s47, %s49
    %p56 = scmp.eq.s32.totalorder %s18, 1
    %p57 = por %p55, %p56
    %p58 = scmp.ne.s32.totalorder %s49, %s50
    %p59 = scmp.eq.s32.totalorder %s18, 0
    %p60 = por %p58, %p59
    %p61 = scmp.ne.s32.totalorder %s49, %s50
    %p62 = scmp.eq.s32.totalorder %s19, 1
    %p63 = por %p61, %p62
    %p65 = scmp.ne.s32.totalorder %s50, %s64
    %p66 = scmp.eq.s32.totalorder %s19, 0
    %p67 = por %p65, %p66
    %s69 = sadd.s32 %s68, 1
    %p72 = scmp.eq.s32.totalorder %s13, 1
    %p73 = scmp.ne.s32.totalorder %s68, %s70
    %p74 = scmp.eq.s32.totalorder %s13, 0
    %p75 = por %p73, %p74
    %p76 = scmp.ne.s32.totalorder %s68, %s70
    %p77 = scmp.eq.s32.totalorder %s18, 1
    %p78 = por %p76, %p77
    %p79 = scmp.ne.s32.totalorder %s70, %s71
    %p80 = scmp.eq.s32.totalorder %s18, 0
    %p81 = por %p79, %p80
    %p82 = scmp.ne.s32.totalorder %s70, %s71
    %p83 = scmp.eq.s32.totalorder %s19, 1
    %p84 = por %p82, %p83
    %p86 = scmp.ne.s32.totalorder %s71, %s85
    %p87 = scmp.eq.s32.totalorder %s19, 0
    %p88 = por %p86, %p87
    %s90 = sadd.s32 %s89, 1
    %p93 = scmp.eq.s32.totalorder %s13, 1
    %p94 = scmp.ne.s32.totalorder %s89, %s91
    %p95 = scmp.eq.s32.totalorder %s13, 0
    %p96 = por %p94, %p95
    %p97 = scmp.ne.s32.totalorder %s89, %s91
    %p98 = scmp.eq.s32.totalorder %s18, 1
    %p99 = por %p97, %p98
    %p100 = scmp.ne.s32.totalorder %s91, %s92
    %p101 = scmp.eq.s32.totalorder %s18, 0
    %p102 = por %p100, %p101
    %p103 = scmp.ne.s32.totalorder %s91, %s92
    %p104 = scmp.eq.s32.totalorder %s19, 1
    %p105 = por %p103, %p104
    %p107 = scmp.ne.s32.totalorder %s92, %s106
    %p108 = scmp.eq.s32.totalorder %s19, 0
    %p109 = por %p107, %p108
    %s111 = sadd.s32 %s110, 1
    %p114 = scmp.eq.s32.totalorder %s13, 1
    %p115 = scmp.ne.s32.totalorder %s110, %s112
    %p116 = scmp.eq.s32.totalorder %s13, 0
    %p117 = por %p115, %p116
    %p118 = scmp.ne.s32.totalorder %s110, %s112
    %p119 = scmp.eq.s32.totalorder %s18, 1
    %p120 = por %p118, %p119
    %p121 = scmp.ne.s32.totalorder %s112, %s113
    %p122 = scmp.eq.s32.totalorder %s18, 0
    %p123 = por %p121, %p122
    %p124 = scmp.ne.s32.totalorder %s112, %s113
    %p125 = scmp.eq.s32.totalorder %s19, 1
    %p126 = por %p124, %p125
    %p128 = scmp.ne.s32.totalorder %s113, %s127
    %p129 = scmp.eq.s32.totalorder %s19, 0
    %p130 = por %p128, %p129
    %s131 = ssub.s32 %s13, %s20
    %p132 = scmp.eq.s32.totalorder %s131, 0
    %s134 = sadd.s32 %s133, 1
    %s135 = scalar_select %p132, %s133, %s134
    %p138 = pneg %p132
    %p139 = scmp.eq.s32.totalorder %s13, 1
    %p140 = por %p138, %p139
    %p141 = scmp.ne.s32.totalorder %s133, %s136
    %p142 = scmp.eq.s32.totalorder %s13, 0
    %p143 = por %p141, %p142
    %p144 = scmp.ne.s32.totalorder %s133, %s136
    %p145 = scmp.eq.s32.totalorder %s18, 1
    %p146 = por %p144, %p145
    %p147 = scmp.ne.s32.totalorder %s136, %s137
    %p148 = scmp.eq.s32.totalorder %s18, 0
    %p149 = por %p147, %p148
    %p150 = scmp.ne.s32.totalorder %s136, %s137
    %p151 = scmp.eq.s32.totalorder %s19, 1
    %p152 = por %p150, %p151
    %p154 = scmp.ne.s32.totalorder %s137, %s153
    %p155 = scmp.eq.s32.totalorder %s19, 0
    %p156 = por %p154, %p155
    %s157 = ssub.s32 %s13, %s20
    %p158 = scmp.eq.s32.totalorder %s157, 0
    %s160 = sadd.s32 %s159, 1
    %s161 = scalar_select %p158, %s159, %s160
    %p164 = pneg %p158
    %p165 = scmp.eq.s32.totalorder %s13, 1
    %p166 = por %p164, %p165
    %p167 = scmp.ne.s32.totalorder %s159, %s162
    %p168 = scmp.eq.s32.totalorder %s13, 0
    %p169 = por %p167, %p168
    %p170 = scmp.ne.s32.totalorder %s159, %s162
    %p171 = scmp.eq.s32.totalorder %s18, 1
    %p172 = por %p170, %p171
    %p173 = scmp.ne.s32.totalorder %s162, %s163
    %p174 = scmp.eq.s32.totalorder %s18, 0
    %p175 = por %p173, %p174
    %p176 = scmp.ne.s32.totalorder %s162, %s163
    %p177 = scmp.eq.s32.totalorder %s19, 1
    %p178 = por %p176, %p177
    %p180 = scmp.ne.s32.totalorder %s163, %s179
    %p181 = scmp.eq.s32.totalorder %s19, 0
    %p182 = por %p180, %p181
    %p183 = scmp.le.s32.totalorder 1, %s13
    %p184 = scmp.lt.s32.totalorder %s13, 3
    %p185 = pnand %p183, %p184
    %p186 = pneg %p185
    // Predicated region
    $region9: #{unet_forward.8} parent=5 // pred_check
      _
    $region10: #{unet_forward.8} parent=5 // pred_check_branch
      %188 = sbr.rel (%p185) target = $region12
    $region11: #{unet_forward.8} parent=5 // pred_region
      %s189 = ssub.s32 %s13, 1
      // Predicated region
      $region13: #{unet_forward.8} parent=11 // pred_check
        %p190 = pneg %p60
      $region14: #{unet_forward.8} parent=11 // pred_check_branch
        %192 = sbr.rel (%p190) target = $region16
      $region15: #{unet_forward.8} parent=11 // pred_region
        _
      $region16: #{unet_forward.8} parent=11 // pred_fallthru
        _
      // Predicated region
      $region17: #{unet_forward.8} parent=11 // pred_check
        %p193 = pneg %p81
      $region18: #{unet_forward.8} parent=11 // pred_check_branch
        %195 = sbr.rel (%p193) target = $region20
      $region19: #{unet_forward.8} parent=11 // pred_region
        _
      $region20: #{unet_forward.8} parent=11 // pred_fallthru
        _
      // Predicated region
      $region21: #{unet_forward.8} parent=11 // pred_check
        %p196 = pneg %p102
      $region22: #{unet_forward.8} parent=11 // pred_check_branch
        %198 = sbr.rel (%p196) target = $region24
      $region23: #{unet_forward.8} parent=11 // pred_region
        _
      $region24: #{unet_forward.8} parent=11 // pred_fallthru
        _
      // Predicated region
      $region25: #{unet_forward.8} parent=11 // pred_check
        %p199 = pneg %p123
      $region26: #{unet_forward.8} parent=11 // pred_check_branch
        %201 = sbr.rel (%p199) target = $region28
      $region27: #{unet_forward.8} parent=11 // pred_region
        _
      $region28: #{unet_forward.8} parent=11 // pred_fallthru
        _
    $region12: #{unet_forward.8} parent=5 // pred_fallthru
      _
    %p202 = scmp.lt.s32.totalorder %s13, 2
    // Predicated region
    $region29: #{unet_forward.8} parent=5 // pred_check
      %p203 = pneg %p202
    $region30: #{unet_forward.8} parent=5 // pred_check_branch
      %205 = sbr.rel (%p203) target = $region32
    $region31: #{unet_forward.8} parent=5 // pred_region
      // Predicated region
      $region33: #{unet_forward.8} parent=31 // pred_check
        %p206 = pneg %p33
      $region34: #{unet_forward.8} parent=31 // pred_check_branch
        %208 = sbr.rel (%p206) target = $region36
      $region35: #{unet_forward.8} parent=31 // pred_region
        %p209 = scmp.lt.s32.totalorder %s13, 1
        %s210 = scalar_select %p209, %s13, 1
        %s211 = smul.addr %s210, 8
        %s212 = scalar_lea.vmem %s0, %s211
      $region36: #{unet_forward.8} parent=31 // pred_fallthru
        _
    $region32: #{unet_forward.8} parent=5 // pred_fallthru
      _
    %p213 = scmp.le.s32.totalorder 1, %s13
    %p214 = scmp.lt.s32.totalorder %s13, 3
    %p215 = pnand %p213, %p214
    %p216 = pneg %p215
    // Predicated region
    $region37: #{unet_forward.8} parent=5 // pred_check
      _
    $region38: #{unet_forward.8} parent=5 // pred_check_branch
      %218 = sbr.rel (%p215) target = $region40
    $region39: #{unet_forward.8} parent=5 // pred_region
      %s219 = ssub.s32 %s13, 1
      %p220 = scmp.lt.s32.totalorder %s18, 1
      %s221 = scalar_select %p220, %s18, 1
      %s222 = smul.addr %s221, 8
      %s223 = scalar_lea.vmem %s0, %s222
      %p224 = pneg %p39
      %p225 = pneg %p36
      %p226 = pneg %p60
      %p227 = pneg %p57
      %p228 = pneg %p81
      %p229 = pneg %p78
      %p230 = pneg %p102
      %p231 = pneg %p99
      %p232 = pneg %p123
      %p233 = pneg %p120
      %p234 = pneg %p149
      %p235 = pneg %p146
      %p236 = scmp.lt.s32.totalorder %s18, 1
      %s237 = scalar_select %p236, %s18, 1
      %s238 = smul.addr %s237, 8
      %s239 = scalar_lea.vmem %s5, %s238
      %p240 = pneg %p175
      %p241 = pneg %p172
      %p242 = scmp.lt.s32.totalorder %s18, 1
      %s243 = scalar_select %p242, %s18, 1
      %s244 = smul.addr %s243, 8
      %s245 = scalar_lea.vmem %s6, %s244
      %p246 = scmp.lt.s32.totalorder %s18, 1
      %s247 = scalar_select %p246, %s18, 1
      %s248 = smul.addr %s247, 8
      %s249 = scalar_lea.vmem %s0, %s248
      %p250 = scmp.lt.s32.totalorder %s18, 1
      %s251 = scalar_select %p250, %s18, 1
      %s252 = smul.addr %s251, 8
      %s253 = scalar_lea.vmem %s5, %s252
      %p254 = scmp.lt.s32.totalorder %s18, 1
      %s255 = scalar_select %p254, %s18, 1
      %s256 = smul.addr %s255, 8
      %s257 = scalar_lea.vmem %s6, %s256
      %v258 = vld [vmem:[%s249] sm:$0xff]
      %vm259 = vcmask 39936
      %260 = vst.msk [vmem:[#allocation2] sm:$0xff] %vm259, 0.0
      %vm261 = vcmask 80936
      %262 = vst.msk [vmem:[#allocation2 + $0x8] sm:$0xff] %vm261, 0.0
      %264 = vrot.lane.b32.xlu0 %v258, 5
      %v265 = vpop.permute.xlu0 %264
      %vm267 = vcmask 1047592
      %268 = vst.msk [vmem:[#allocation2] sm:$0xff] %vm267, %v265
      %269 = vst.msk [vmem:[#allocation2 + $0x8] sm:$0xff] %vm259, %v265
      %v270 = vld [vmem:[#allocation2] sm:$0xff]
      %v271 = vld [vmem:[#allocation2 + $0x8] sm:$0xff]
      %274 = vrot.lane.b32.xlu0 %v270, 127
      %v275 = vpop.permute.xlu0 %274
      %276 = vrot.lane.b32.xlu0 %v271, 127
      %v277 = vpop.permute.xlu0 %276
      %vm278 = vcmask 1039360
      %v279 = vsel %vm278, %v275, %v277
      %281 = vrot.lane.b32.xlu0 %v270, 126
      %v282 = vpop.permute.xlu0 %281
      %283 = vrot.lane.b32.xlu0 %v271, 126
      %v284 = vpop.permute.xlu0 %283
      %vm285 = vcmask 1031168
      %v286 = vsel %vm285, %v282, %v284
      %288 = vrot.lane.b32.xlu0 %v270, 125
      %v289 = vpop.permute.xlu0 %288
      %290 = vrot.lane.b32.xlu0 %v271, 125
      %v291 = vpop.permute.xlu0 %290
      %vm292 = vcmask 1022976
      %v293 = vsel %vm292, %v289, %v291
      %295 = vrot.lane.b32.xlu0 %v270, 124
      %v296 = vpop.permute.xlu0 %295
      %297 = vrot.lane.b32.xlu0 %v271, 124
      %v298 = vpop.permute.xlu0 %297
      %vm299 = vcmask 1014784
      %v300 = vsel %vm299, %v296, %v298
      %302 = vrot.lane.b32.xlu0 %v270, 123
      %v303 = vpop.permute.xlu0 %302
      %304 = vrot.lane.b32.xlu0 %v271, 123
      %v305 = vpop.permute.xlu0 %304
      %vm306 = vcmask 1006592
      %v307 = vsel %vm306, %v303, %v305
      %309 = vrot.lane.b32.xlu0 %v270, 122
      %v310 = vpop.permute.xlu0 %309
      %311 = vrot.lane.b32.xlu0 %v271, 122
      %v312 = vpop.permute.xlu0 %311
      %vm313 = vcmask 998400
      %v314 = vsel %vm313, %v310, %v312
      %316 = vrot.lane.b32.xlu0 %v270, 121
      %v317 = vpop.permute.xlu0 %316
      %318 = vrot.lane.b32.xlu0 %v271, 121
      %v319 = vpop.permute.xlu0 %318
      %vm320 = vcmask 990208
      %v321 = vsel %vm320, %v317, %v319
      %323 = vrot.lane.b32.xlu0 %v270, 120
      %v324 = vpop.permute.xlu0 %323
      %325 = vrot.lane.b32.xlu0 %v271, 120
      %v326 = vpop.permute.xlu0 %325
      %vm327 = vcmask 982016
      %v328 = vsel %vm327, %v324, %v326
      %330 = vrot.lane.b32.xlu0 %v270, 119
      %v331 = vpop.permute.xlu0 %330
      %332 = vrot.lane.b32.xlu0 %v271, 119
      %v333 = vpop.permute.xlu0 %332
      %vm334 = vcmask 973824
      %v335 = vsel %vm334, %v331, %v333
      %337 = vrot.lane.b32.xlu0 %v270, 118
      %v338 = vpop.permute.xlu0 %337
      %339 = vrot.lane.b32.xlu0 %v271, 118
      %v340 = vpop.permute.xlu0 %339
      %vm341 = vcmask 965632
      %v342 = vsel %vm341, %v338, %v340
      %v344 = vld [vmem:[%s1] sm:$0xff]
      %vm345 = vcmask 719872
      %v347 = vsel %vm345, %v344, 0
      %349 = vmatprep.subr.mxu0 0.0
      %350 = vmatpush1.msra.mxu0 %v270
      %351 = vmatprep.subr.mxu0 0.0
      %352 = vmatpush1.msra.mxu0 %v279
      %353 = vmatprep.subr.mxu0 0.0
      %354 = vmatpush1.msra.mxu0 %v286
      %355 = vmatprep.subr.mxu0 0.0
      %356 = vmatpush1.msra.mxu0 %v293
      %357 = vmatprep.subr.mxu0 0.0
      %358 = vmatpush1.msra.mxu0 %v300
      %359 = vmatprep.subr.mxu0 0.0
      %360 = vmatpush1.msra.mxu0 %v307
      %361 = vmatprep.subr.mxu0 0.0
      %362 = vmatpush1.msra.mxu0 %v314
      %363 = vmatprep.subr.mxu0 0.0
      %364 = vmatpush1.msra.mxu0 %v321
      %365 = vmatprep.subr.mxu0 0.0
      %366 = vmatpush1.msra.mxu0 %v328
      %367 = vmatprep.subr.mxu0 0.0
      %368 = vmatpush1.msra.mxu0 %v335
      %369 = vmatprep.subr.mxu0 0.0
      %370 = vmatpush1.msra.mxu0 %v342
      %371 = vmatprep.subr.mxu0 0.0
      %372 = vmatpush1.msra.mxu0 0.0
      %373 = vmatprep.subr.mxu0 0.0
      %374 = vmatpush1.msra.mxu0 0.0
      %375 = vmatprep.subr.mxu0 0.0
      %376 = vmatpush1.msra.mxu0 0.0
      %377 = vmatprep.subr.mxu0 0.0
      %378 = vmatpush1.msra.mxu0 0.0
      %379 = vmatprep.subr.mxu0 0.0
      %380 = vmatpush1.msra.mxu0 0.0
      %381 = vmatprep.subr.mxu0 0.0
      %382 = vmatpush1.msra.mxu0 0.0
      %383 = vmatprep.subr.mxu0 0.0
      %384 = vmatpush1.msra.mxu0 0.0
      %385 = vmatprep.subr.mxu0 0.0
      %386 = vmatpush1.msra.mxu0 0.0
      %387 = vmatprep.subr.mxu0 0.0
      %388 = vmatpush1.msra.mxu0 0.0
      %389 = vmatprep.subr.mxu0 0.0
      %390 = vmatpush1.msra.mxu0 0.0
      %391 = vmatprep.subr.mxu0 0.0
      %392 = vmatpush1.msra.mxu0 0.0
      %393 = vmatprep.subr.mxu0 0.0
      %394 = vmatpush1.msra.mxu0 0.0
      %395 = vmatprep.subr.mxu0 0.0
      %396 = vmatpush1.msra.mxu0 0.0
      %397 = vmatprep.subr.mxu0 0.0
      %398 = vmatpush1.msra.mxu0 0.0
      %399 = vmatprep.subr.mxu0 0.0
      %400 = vmatpush1.msra.mxu0 0.0
      %401 = vmatprep.subr.mxu0 0.0
      %402 = vmatpush1.msra.mxu0 0.0
      %403 = vmatprep.subr.mxu0 0.0
      %404 = vmatpush1.msra.mxu0 0.0
      %405 = vmatprep.subr.mxu0 0.0
      %406 = vmatpush1.msra.mxu0 0.0
      %407 = vmatprep.subr.mxu0 0.0
      %408 = vmatpush1.msra.mxu0 0.0
      %409 = vmatprep.subr.mxu0 0.0
      %410 = vmatpush1.msra.mxu0 0.0
      %411 = vmatprep.subr.mxu0 0.0
      %412 = vmatpush1.msra.mxu0 0.0
      %413 = vmatprep.mubr.f32.mxu0 0.0
      %414 = vmatmul.mubr.f32.gmra.mrb[0].mxu0 %v347
      %v415 = vpop.f32.mrb[0].mxu0
      %v416 = vadd.f32 0.0, %v415
      %v417 = vpop.f32.mrb[0].mxu0
      %418 = vdwg.mxu0
      %v419 = vld [vmem:[%s2] sm:$0xff]
      %421 = vset.pattern.permute.xlu0 0
      %422 = vperm.xlu0 %421, %v419
      %v423 = vpop.permute.xlu0 %422
      %v425 = vmul.f32 %v416, %v423
      %v426 = vld [vmem:[%s3] sm:$0xff]
      %428 = vset.pattern.permute.xlu0 0
      %429 = vperm.xlu0 %428, %v426
      %v430 = vpop.permute.xlu0 %429
      %v432 = vadd.f32 %v425, %v430
      %v433 = vmul.f32 %v432, 0.1
      %v434 = vmax.f32 %v432, %v433
      %435 = vst [vmem:[%s253] sm:$0xff] %v434
      %v436 = vld [vmem:[%s4] sm:$0xff]
      %v437 = vld [vmem:[%s4 + $0x8] sm:$0xff]
      %v438 = vld [vmem:[%s4 + $0x10] sm:$0xff]
      %v439 = vld [vmem:[%s4 + $0x18] sm:$0xff]
      %v440 = vld [vmem:[%s4 + $0x20] sm:$0xff]
      %v441 = vld [vmem:[%s4 + $0x28] sm:$0xff]
      %v442 = vld [vmem:[%s4 + $0x30] sm:$0xff]
      %v443 = vld [vmem:[%s4 + $0x38] sm:$0xff]
      %v444 = vld [vmem:[%s4 + $0x40] sm:$0xff]
      %v445 = vld [vmem:[%s4 + $0x48] sm:$0xff]
      %v446 = vld [vmem:[%s4 + $0x50] sm:$0xff]
      %v447 = vld [vmem:[%s4 + $0x58] sm:$0xff]
      %v448 = vld [vmem:[%s4 + $0x60] sm:$0xff]
      %v449 = vld [vmem:[%s4 + $0x68] sm:$0xff]
      %v450 = vld [vmem:[%s4 + $0x70] sm:$0xff]
      %v451 = vld [vmem:[%s4 + $0x78] sm:$0xff]
      %452 = vmatprep.subr.mxu0 0.0
      %453 = vmatpush1.msra.mxu0 %v436
      %454 = vmatprep.subr.mxu0 0.0
      %455 = vmatpush1.msra.mxu0 %v437
      %456 = vmatprep.subr.mxu0 0.0
      %457 = vmatpush1.msra.mxu0 %v438
      %458 = vmatprep.subr.mxu0 0.0
      %459 = vmatpush1.msra.mxu0 %v439
      %460 = vmatprep.subr.mxu0 0.0
      %461 = vmatpush1.msra.mxu0 %v440
      %462 = vmatprep.subr.mxu0 0.0
      %463 = vmatpush1.msra.mxu0 %v441
      %464 = vmatprep.subr.mxu0 0.0
      %465 = vmatpush1.msra.mxu0 %v442
      %466 = vmatprep.subr.mxu0 0.0
      %467 = vmatpush1.msra.mxu0 %v443
      %468 = vmatprep.subr.mxu0 0.0
      %469 = vmatpush1.msra.mxu0 %v444
      %470 = vmatprep.subr.mxu0 0.0
      %471 = vmatpush1.msra.mxu0 %v445
      %472 = vmatprep.subr.mxu0 0.0
      %473 = vmatpush1.msra.mxu0 %v446
      %474 = vmatprep.subr.mxu0 0.0
      %475 = vmatpush1.msra.mxu0 %v447
      %476 = vmatprep.subr.mxu0 0.0
      %477 = vmatpush1.msra.mxu0 %v448
      %478 = vmatprep.subr.mxu0 0.0
      %479 = vmatpush1.msra.mxu0 %v449
      %480 = vmatprep.subr.mxu0 0.0
      %481 = vmatpush1.msra.mxu0 %v450
      %482 = vmatprep.subr.mxu0 0.0
      %483 = vmatpush1.msra.mxu0 %v451
      %484 = vmatprep.subr.mxu0 0.0
      %485 = vmatpush1.msra.mxu0 0.0
      %486 = vmatprep.subr.mxu0 0.0
      %487 = vmatpush1.msra.mxu0 0.0
      %488 = vmatprep.subr.mxu0 0.0
      %489 = vmatpush1.msra.mxu0 0.0
      %490 = vmatprep.subr.mxu0 0.0
      %491 = vmatpush1.msra.mxu0 0.0
      %492 = vmatprep.subr.mxu0 0.0
      %493 = vmatpush1.msra.mxu0 0.0
      %494 = vmatprep.subr.mxu0 0.0
      %495 = vmatpush1.msra.mxu0 0.0
      %496 = vmatprep.subr.mxu0 0.0
      %497 = vmatpush1.msra.mxu0 0.0
      %498 = vmatprep.subr.mxu0 0.0
      %499 = vmatpush1.msra.mxu0 0.0
      %500 = vmatprep.subr.mxu0 0.0
      %501 = vmatpush1.msra.mxu0 0.0
      %502 = vmatprep.subr.mxu0 0.0
      %503 = vmatpush1.msra.mxu0 0.0
      %504 = vmatprep.subr.mxu0 0.0
      %505 = vmatpush1.msra.mxu0 0.0
      %506 = vmatprep.subr.mxu0 0.0
      %507 = vmatpush1.msra.mxu0 0.0
      %508 = vmatprep.subr.mxu0 0.0
      %509 = vmatpush1.msra.mxu0 0.0
      %510 = vmatprep.subr.mxu0 0.0
      %511 = vmatpush1.msra.mxu0 0.0
      %512 = vmatprep.subr.mxu0 0.0
      %513 = vmatpush1.msra.mxu0 0.0
      %514 = vmatprep.subr.mxu0 0.0
      %515 = vmatpush1.msra.mxu0 0.0
      %516 = vmatprep.mubr.f32.mxu0 0.0
      %517 = vmatmul.mubr.f32.gmra.mrb[0].mxu0 %v434
      %v518 = vpop.f32.mrb[0].mxu0
      %v519 = vadd.f32 0.0, %v518
      %v520 = vpop.f32.mrb[0].mxu0
      %521 = vdwg.mxu0
      %vm522 = vcmask 523264
      %523 = vst.msk [vmem:[%s257] sm:$0xff] %vm522, %v519
      %p524 = scmp.lt.s32.totalorder %s18, 1
      %s525 = scalar_select %p524, %s18, 1
      %s526 = smul.addr %s525, 8
      %s527 = scalar_lea.vmem %s5, %s526
      %p528 = scmp.lt.s32.totalorder %s18, 1
      %s529 = scalar_select %p528, %s18, 1
      %s530 = smul.addr %s529, 8
      %s531 = scalar_lea.vmem %s6, %s530
      // Predicated region
      $region41: #{unet_forward.8} parent=39 // pred_check
        %p532 = pneg %p146
      $region42: #{unet_forward.8} parent=39 // pred_check_branch
        %534 = sbr.rel (%p532) target = $region44
      $region43: #{unet_forward.8} parent=39 // pred_region
        _
      $region44: #{unet_forward.8} parent=39 // pred_fallthru
        _
      // Predicated region
      $region45: #{unet_forward.8} parent=39 // pred_check
        %p535 = pneg %p172
      $region46: #{unet_forward.8} parent=39 // pred_check_branch
        %537 = sbr.rel (%p535) target = $region48
      $region47: #{unet_forward.8} parent=39 // pred_region
        _
      $region48: #{unet_forward.8} parent=39 // pred_fallthru
        _
    $region40: #{unet_forward.8} parent=5 // pred_fallthru
      _
    %p538 = scmp.le.s32.totalorder 2, %s13
    // Predicated region
    $region49: #{unet_forward.8} parent=5 // pred_check
      %p539 = pneg %p538
    $region50: #{unet_forward.8} parent=5 // pred_check_branch
      %541 = sbr.rel (%p539) target = $region52
    $region51: #{unet_forward.8} parent=5 // pred_region
      %s542 = ssub.s32 %s13, 2
      // Predicated region
      $region53: #{unet_forward.8} parent=51 // pred_check
        %p543 = pneg %p152
      $region54: #{unet_forward.8} parent=51 // pred_check_branch
        %545 = sbr.rel (%p543) target = $region56
      $region55: #{unet_forward.8} parent=51 // pred_region
        %p546 = scmp.lt.s32.totalorder %s19, 1
        %s547 = scalar_select %p546, %s19, 1
        %s548 = smul.addr %s547, 8
        %s549 = scalar_lea.vmem %s5, %s548
      $region56: #{unet_forward.8} parent=51 // pred_fallthru
        _
      // Predicated region
      $region57: #{unet_forward.8} parent=51 // pred_check
        %p550 = pneg %p178
      $region58: #{unet_forward.8} parent=51 // pred_check_branch
        %552 = sbr.rel (%p550) target = $region60
      $region59: #{unet_forward.8} parent=51 // pred_region
        %p553 = scmp.lt.s32.totalorder %s19, 1
        %s554 = scalar_select %p553, %s19, 1
        %s555 = smul.addr %s554, 8
        %s556 = scalar_lea.vmem %s6, %s555
      $region60: #{unet_forward.8} parent=51 // pred_fallthru
        _
    $region52: #{unet_forward.8} parent=5 // pred_fallthru
      _
  $region6: #{unet_forward.8} parent=0 // loop_footer
    %s17 = sadd.s32 1, %s13
  $region7: #{unet_forward.8} parent=0 // loop_footer_branch
    %12 = sbr.rel target = $region3
  $region8: #{unet_forward.8} parent=0 // loop_exit
    _

// kernel: unet_forward.11
$region0: #{unet_forward.11}
  #allocation0 [shape = 'u32[]', space=smem, size = 0x4, offset = 0x4, fixed_abs, tag = 'smem constant byte address 0x4 - core index']
  #allocation1 [shape = 'u32[144,128]{1,0:T(1,128)}', space=vmem, size = 0x12000, scoped, tag = 'internal scratch']
  #allocation2 [shape = 'f32[16,26]{1,0:T(8,128)}', space=vmem, size = 0x2000, scoped, tag = 'scratch operand']
  %s0 = inlined_call_operand.vmem [shape: f32[2,16,16], index: 0, kind: input, shape index: {}]
  %s1 = inlined_call_operand.vmem [shape: f32[16,176], index: 1, kind: input, shape index: {}]
  %s2 = inlined_call_operand.vmem [shape: f32[16,1], index: 2, kind: input, shape index: {}]
  %s3 = inlined_call_operand.vmem [shape: f32[16,1], index: 3, kind: input, shape index: {}]
  %s4 = inlined_call_operand.vmem [shape: f32[2,16,16], index: 4, kind: output, shape index: {}]
  %s5 = sld [smem:[#allocation0]]
  $region49: #{unet_forward.11} parent=0
    _
  %s7 = ssub.s32 1, %s5
  %s8 = scalar_select 0, %s7, %s5
  loop: start=0, step=1, limit=4
  $region2: #{unet_forward.11} parent=0 // loop_pre_header
    _
  $region3: #{unet_forward.11} parent=0 // loop_header
    %s10 = sphi 0, %s14
    %p11 = scmp.ge.s32.totalorder %s10, 4
    %s20 = sphi 0, %s22
    %s23 = sphi 0, %s20
    %s24 = sphi 0, %s23
    %s40 = sphi 0, %s24
    %s44 = sphi 0, %s44
    %s46 = sphi 0, %s44
    %s47 = sphi 0, %s46
    %s61 = sphi 0, %s47
    %s65 = sphi 0, %s65
    %s67 = sphi 0, %s65
    %s68 = sphi 0, %s67
    %s82 = sphi 0, %s68
    %s86 = sphi 0, %s86
    %s88 = sphi 0, %s86
    %s89 = sphi 0, %s88
    %s103 = sphi 0, %s89
    %s109 = sphi 0, %s111
    %s112 = sphi 0, %s109
    %s113 = sphi 0, %s112
    %s129 = sphi 0, %s113
  $region4: #{unet_forward.11} parent=0 // loop_header_branch
    %13 = sbr.rel (%p11) target = $region8
  $region5: #{unet_forward.11} parent=0 // loop_body
    %s15 = ssub.s32 %s10, 1
    %s16 = ssub.s32 %s10, 2
    %s17 = sadd.s32 %s10, 1
    %s18 = ssub.s32 %s10, %s17
    %p19 = scmp.eq.s32.totalorder %s18, 0
    %s21 = sadd.s32 %s20, 1
    %s22 = scalar_select %p19, %s20, %s21
    %p25 = pneg %p19
    %p26 = scmp.eq.s32.totalorder %s10, 1
    %p27 = por %p25, %p26
    %p28 = scmp.ne.s32.totalorder %s20, %s23
    %p29 = scmp.eq.s32.totalorder %s10, 0
    %p30 = por %p28, %p29
    %p31 = scmp.ne.s32.totalorder %s20, %s23
    %p32 = scmp.eq.s32.totalorder %s15, 1
    %p33 = por %p31, %p32
    %p34 = scmp.ne.s32.totalorder %s23, %s24
    %p35 = scmp.eq.s32.totalorder %s15, 0
    %p36 = por %p34, %p35
    %p37 = scmp.ne.s32.totalorder %s23, %s24
    %p38 = scmp.eq.s32.totalorder %s16, 1
    %p39 = por %p37, %p38
    %p41 = scmp.ne.s32.totalorder %s24, %s40
    %p42 = scmp.eq.s32.totalorder %s16, 0
    %p43 = por %p41, %p42
    %s45 = sadd.s32 %s44, 1
    %p48 = scmp.eq.s32.totalorder %s10, 1
    %p49 = scmp.ne.s32.totalorder %s44, %s46
    %p50 = scmp.eq.s32.totalorder %s10, 0
    %p51 = por %p49, %p50
    %p52 = scmp.ne.s32.totalorder %s44, %s46
    %p53 = scmp.eq.s32.totalorder %s15, 1
    %p54 = por %p52, %p53
    %p55 = scmp.ne.s32.totalorder %s46, %s47
    %p56 = scmp.eq.s32.totalorder %s15, 0
    %p57 = por %p55, %p56
    %p58 = scmp.ne.s32.totalorder %s46, %s47
    %p59 = scmp.eq.s32.totalorder %s16, 1
    %p60 = por %p58, %p59
    %p62 = scmp.ne.s32.totalorder %s47, %s61
    %p63 = scmp.eq.s32.totalorder %s16, 0
    %p64 = por %p62, %p63
    %s66 = sadd.s32 %s65, 1
    %p69 = scmp.eq.s32.totalorder %s10, 1
    %p70 = scmp.ne.s32.totalorder %s65, %s67
    %p71 = scmp.eq.s32.totalorder %s10, 0
    %p72 = por %p70, %p71
    %p73 = scmp.ne.s32.totalorder %s65, %s67
    %p74 = scmp.eq.s32.totalorder %s15, 1
    %p75 = por %p73, %p74
    %p76 = scmp.ne.s32.totalorder %s67, %s68
    %p77 = scmp.eq.s32.totalorder %s15, 0
    %p78 = por %p76, %p77
    %p79 = scmp.ne.s32.totalorder %s67, %s68
    %p80 = scmp.eq.s32.totalorder %s16, 1
    %p81 = por %p79, %p80
    %p83 = scmp.ne.s32.totalorder %s68, %s82
    %p84 = scmp.eq.s32.totalorder %s16, 0
    %p85 = por %p83, %p84
    %s87 = sadd.s32 %s86, 1
    %p90 = scmp.eq.s32.totalorder %s10, 1
    %p91 = scmp.ne.s32.totalorder %s86, %s88
    %p92 = scmp.eq.s32.totalorder %s10, 0
    %p93 = por %p91, %p92
    %p94 = scmp.ne.s32.totalorder %s86, %s88
    %p95 = scmp.eq.s32.totalorder %s15, 1
    %p96 = por %p94, %p95
    %p97 = scmp.ne.s32.totalorder %s88, %s89
    %p98 = scmp.eq.s32.totalorder %s15, 0
    %p99 = por %p97, %p98
    %p100 = scmp.ne.s32.totalorder %s88, %s89
    %p101 = scmp.eq.s32.totalorder %s16, 1
    %p102 = por %p100, %p101
    %p104 = scmp.ne.s32.totalorder %s89, %s103
    %p105 = scmp.eq.s32.totalorder %s16, 0
    %p106 = por %p104, %p105
    %s107 = ssub.s32 %s10, %s17
    %p108 = scmp.eq.s32.totalorder %s107, 0
    %s110 = sadd.s32 %s109, 1
    %s111 = scalar_select %p108, %s109, %s110
    %p114 = pneg %p108
    %p115 = scmp.eq.s32.totalorder %s10, 1
    %p116 = por %p114, %p115
    %p117 = scmp.ne.s32.totalorder %s109, %s112
    %p118 = scmp.eq.s32.totalorder %s10, 0
    %p119 = por %p117, %p118
    %p120 = scmp.ne.s32.totalorder %s109, %s112
    %p121 = scmp.eq.s32.totalorder %s15, 1
    %p122 = por %p120, %p121
    %p123 = scmp.ne.s32.totalorder %s112, %s113
    %p124 = scmp.eq.s32.totalorder %s15, 0
    %p125 = por %p123, %p124
    %p126 = scmp.ne.s32.totalorder %s112, %s113
    %p127 = scmp.eq.s32.totalorder %s16, 1
    %p128 = por %p126, %p127
    %p130 = scmp.ne.s32.totalorder %s113, %s129
    %p131 = scmp.eq.s32.totalorder %s16, 0
    %p132 = por %p130, %p131
    %p133 = scmp.le.s32.totalorder 1, %s10
    %p134 = scmp.lt.s32.totalorder %s10, 3
    %p135 = pnand %p133, %p134
    %p136 = pneg %p135
    // Predicated region
    $region9: #{unet_forward.11} parent=5 // pred_check
      _
    $region10: #{unet_forward.11} parent=5 // pred_check_branch
      %138 = sbr.rel (%p135) target = $region12
    $region11: #{unet_forward.11} parent=5 // pred_region
      %s139 = ssub.s32 %s10, 1
      // Predicated region
      $region13: #{unet_forward.11} parent=11 // pred_check
        %p140 = pneg %p57
      $region14: #{unet_forward.11} parent=11 // pred_check_branch
        %142 = sbr.rel (%p140) target = $region16
      $region15: #{unet_forward.11} parent=11 // pred_region
        _
      $region16: #{unet_forward.11} parent=11 // pred_fallthru
        _
      // Predicated region
      $region17: #{unet_forward.11} parent=11 // pred_check
        %p143 = pneg %p78
      $region18: #{unet_forward.11} parent=11 // pred_check_branch
        %145 = sbr.rel (%p143) target = $region20
      $region19: #{unet_forward.11} parent=11 // pred_region
        _
      $region20: #{unet_forward.11} parent=11 // pred_fallthru
        _
      // Predicated region
      $region21: #{unet_forward.11} parent=11 // pred_check
        %p146 = pneg %p99
      $region22: #{unet_forward.11} parent=11 // pred_check_branch
        %148 = sbr.rel (%p146) target = $region24
      $region23: #{unet_forward.11} parent=11 // pred_region
        _
      $region24: #{unet_forward.11} parent=11 // pred_fallthru
        _
    $region12: #{unet_forward.11} parent=5 // pred_fallthru
      _
    %p149 = scmp.lt.s32.totalorder %s10, 2
    // Predicated region
    $region25: #{unet_forward.11} parent=5 // pred_check
      %p150 = pneg %p149
    $region26: #{unet_forward.11} parent=5 // pred_check_branch
      %152 = sbr.rel (%p150) target = $region28
    $region27: #{unet_forward.11} parent=5 // pred_region
      // Predicated region
      $region29: #{unet_forward.11} parent=27 // pred_check
        %p153 = pneg %p30
      $region30: #{unet_forward.11} parent=27 // pred_check_branch
        %155 = sbr.rel (%p153) target = $region32
      $region31: #{unet_forward.11} parent=27 // pred_region
        %p156 = scmp.lt.s32.totalorder %s10, 1
        %s157 = scalar_select %p156, %s10, 1
        %s158 = smul.addr %s157, 2
        %s159 = smul.addr %s158, 8
        %s160 = scalar_lea.vmem %s0, %s159
      $region32: #{unet_forward.11} parent=27 // pred_fallthru
        _
    $region28: #{unet_forward.11} parent=5 // pred_fallthru
      _
    %p161 = scmp.le.s32.totalorder 1, %s10
    %p162 = scmp.lt.s32.totalorder %s10, 3
    %p163 = pnand %p161, %p162
    %p164 = pneg %p163
    // Predicated region
    $region33: #{unet_forward.11} parent=5 // pred_check
      _
    $region34: #{unet_forward.11} parent=5 // pred_check_branch
      %166 = sbr.rel (%p163) target = $region36
    $region35: #{unet_forward.11} parent=5 // pred_region
      %s167 = ssub.s32 %s10, 1
      %p168 = scmp.lt.s32.totalorder %s15, 1
      %s169 = scalar_select %p168, %s15, 1
      %s170 = smul.addr %s169, 2
      %s171 = smul.addr %s170, 8
      %s172 = scalar_lea.vmem %s0, %s171
      %p173 = pneg %p36
      %p174 = pneg %p33
      %p175 = pneg %p57
      %p176 = pneg %p54
      %p177 = pneg %p78
      %p178 = pneg %p75
      %p179 = pneg %p99
      %p180 = pneg %p96
      %p181 = pneg %p125
      %p182 = pneg %p122
      %p183 = scmp.lt.s32.totalorder %s15, 1
      %s184 = scalar_select %p183, %s15, 1
      %s185 = smul.addr %s184, 2
      %s186 = smul.addr %s185, 8
      %s187 = scalar_lea.vmem %s4, %s186
      %p188 = scmp.lt.s32.totalorder %s15, 1
      %s189 = scalar_select %p188, %s15, 1
      %s190 = smul.addr %s189, 2
      %s191 = smul.addr %s190, 8
      %s192 = scalar_lea.vmem %s0, %s191
      %p193 = scmp.lt.s32.totalorder %s15, 1
      %s194 = scalar_select %p193, %s15, 1
      %s195 = smul.addr %s194, 2
      %s196 = smul.addr %s195, 8
      %s197 = scalar_lea.vmem %s4, %s196
      %v198 = vld [vmem:[%s192] sm:$0xff]
      %v199 = vld [vmem:[%s192 + $0x8] sm:$0xff]
      %vm200 = vcmask 39936
      %201 = vst.msk [vmem:[#allocation2] sm:$0xff] %vm200, 0.0
      %202 = vst.msk [vmem:[#allocation2 + $0x8] sm:$0xff] %vm200, 0.0
      %vm203 = vcmask 212136
      %204 = vst.msk [vmem:[#allocation2] sm:$0xff] %vm203, 0.0
      %205 = vst.msk [vmem:[#allocation2 + $0x8] sm:$0xff] %vm203, 0.0
      %208 = vrot.lane.b32.xlu0 %v198, 5
      %v209 = vpop.permute.xlu0 %208
      %210 = vrot.lane.b32.xlu0 %v199, 5
      %v211 = vpop.permute.xlu0 %210
      %vm214 = vcmask 171048
      %215 = vst.msk [vmem:[#allocation2] sm:$0xff] %vm214, %v209
      %216 = vst.msk [vmem:[#allocation2 + $0x8] sm:$0xff] %vm214, %v211
      %v217 = vld [vmem:[#allocation2] sm:$0xff]
      %v218 = vld [vmem:[#allocation2 + $0x8] sm:$0xff]
      %221 = vrot.lane.b32.xlu0 %v217, 127
      %v222 = vpop.permute.xlu0 %221
      %223 = vrot.lane.b32.xlu0 %v218, 127
      %v224 = vpop.permute.xlu0 %223
      %227 = vrot.lane.b32.xlu0 %v217, 126
      %v228 = vpop.permute.xlu0 %227
      %229 = vrot.lane.b32.xlu0 %v218, 126
      %v230 = vpop.permute.xlu0 %229
      %233 = vrot.lane.b32.xlu0 %v217, 125
      %v234 = vpop.permute.xlu0 %233
      %235 = vrot.lane.b32.xlu0 %v218, 125
      %v236 = vpop.permute.xlu0 %235
      %239 = vrot.lane.b32.xlu0 %v217, 124
      %v240 = vpop.permute.xlu0 %239
      %241 = vrot.lane.b32.xlu0 %v218, 124
      %v242 = vpop.permute.xlu0 %241
      %245 = vrot.lane.b32.xlu0 %v217, 123
      %v246 = vpop.permute.xlu0 %245
      %247 = vrot.lane.b32.xlu0 %v218, 123
      %v248 = vpop.permute.xlu0 %247
      %251 = vrot.lane.b32.xlu0 %v217, 122
      %v252 = vpop.permute.xlu0 %251
      %253 = vrot.lane.b32.xlu0 %v218, 122
      %v254 = vpop.permute.xlu0 %253
      %257 = vrot.lane.b32.xlu0 %v217, 121
      %v258 = vpop.permute.xlu0 %257
      %259 = vrot.lane.b32.xlu0 %v218, 121
      %v260 = vpop.permute.xlu0 %259
      %263 = vrot.lane.b32.xlu0 %v217, 120
      %v264 = vpop.permute.xlu0 %263
      %265 = vrot.lane.b32.xlu0 %v218, 120
      %v266 = vpop.permute.xlu0 %265
      %269 = vrot.lane.b32.xlu0 %v217, 119
      %v270 = vpop.permute.xlu0 %269
      %271 = vrot.lane.b32.xlu0 %v218, 119
      %v272 = vpop.permute.xlu0 %271
      %275 = vrot.lane.b32.xlu0 %v217, 118
      %v276 = vpop.permute.xlu0 %275
      %277 = vrot.lane.b32.xlu0 %v218, 118
      %v278 = vpop.permute.xlu0 %277
      %v281 = vld [vmem:[%s1] sm:$0xff]
      %v282 = vld [vmem:[%s1 + $0x8] sm:$0xff]
      %v283 = vld [vmem:[%s1 + $0x10] sm:$0xff]
      %v284 = vld [vmem:[%s1 + $0x18] sm:$0xff]
      %vm285 = vcmask 392192
      %v287 = vsel %vm285, %v282, 0
      %v290 = vsel %vm285, %v284, 0
      %292 = vmatprep.subr.mxu0 0.0
      %293 = vmatpush1.msra.mxu0 %v217
      %294 = vmatprep.subr.mxu0 0.0
      %295 = vmatpush1.msra.mxu0 %v218
      %296 = vmatprep.subr.mxu0 0.0
      %297 = vmatpush1.msra.mxu0 %v222
      %298 = vmatprep.subr.mxu0 0.0
      %299 = vmatpush1.msra.mxu0 %v224
      %300 = vmatprep.subr.mxu0 0.0
      %301 = vmatpush1.msra.mxu0 %v228
      %302 = vmatprep.subr.mxu0 0.0
      %303 = vmatpush1.msra.mxu0 %v230
      %304 = vmatprep.subr.mxu0 0.0
      %305 = vmatpush1.msra.mxu0 %v234
      %306 = vmatprep.subr.mxu0 0.0
      %307 = vmatpush1.msra.mxu0 %v236
      %308 = vmatprep.subr.mxu0 0.0
      %309 = vmatpush1.msra.mxu0 %v240
      %310 = vmatprep.subr.mxu0 0.0
      %311 = vmatpush1.msra.mxu0 %v242
      %312 = vmatprep.subr.mxu0 0.0
      %313 = vmatpush1.msra.mxu0 %v246
      %314 = vmatprep.subr.mxu0 0.0
      %315 = vmatpush1.msra.mxu0 %v248
      %316 = vmatprep.subr.mxu0 0.0
      %317 = vmatpush1.msra.mxu0 %v252
      %318 = vmatprep.subr.mxu0 0.0
      %319 = vmatpush1.msra.mxu0 %v254
      %320 = vmatprep.subr.mxu0 0.0
      %321 = vmatpush1.msra.mxu0 %v258
      %322 = vmatprep.subr.mxu0 0.0
      %323 = vmatpush1.msra.mxu0 %v260
      %324 = vmatprep.subr.mxu0 0.0
      %325 = vmatpush1.msra.mxu0 %v264
      %326 = vmatprep.subr.mxu0 0.0
      %327 = vmatpush1.msra.mxu0 %v266
      %328 = vmatprep.subr.mxu0 0.0
      %329 = vmatpush1.msra.mxu0 %v270
      %330 = vmatprep.subr.mxu0 0.0
      %331 = vmatpush1.msra.mxu0 %v272
      %332 = vmatprep.subr.mxu0 0.0
      %333 = vmatpush1.msra.mxu0 %v276
      %334 = vmatprep.subr.mxu0 0.0
      %335 = vmatpush1.msra.mxu0 %v278
      %336 = vmatprep.subr.mxu0 0.0
      %337 = vmatpush1.msra.mxu0 0.0
      %338 = vmatprep.subr.mxu0 0.0
      %339 = vmatpush1.msra.mxu0 0.0
      %340 = vmatprep.subr.mxu0 0.0
      %341 = vmatpush1.msra.mxu0 0.0
      %342 = vmatprep.subr.mxu0 0.0
      %343 = vmatpush1.msra.mxu0 0.0
      %344 = vmatprep.subr.mxu0 0.0
      %345 = vmatpush1.msra.mxu0 0.0
      %346 = vmatprep.subr.mxu0 0.0
      %347 = vmatpush1.msra.mxu0 0.0
      %348 = vmatprep.subr.mxu0 0.0
      %349 = vmatpush1.msra.mxu0 0.0
      %350 = vmatprep.subr.mxu0 0.0
      %351 = vmatpush1.msra.mxu0 0.0
      %352 = vmatprep.subr.mxu0 0.0
      %353 = vmatpush1.msra.mxu0 0.0
      %354 = vmatprep.subr.mxu0 0.0
      %355 = vmatpush1.msra.mxu0 0.0
      %356 = vmatprep.mubr.f32.mxu0 %v287
      %357 = vmatmul.mubr.f32.gmra.mrb[0].mxu0 %v281
      %v358 = vpop.f32.mrb[0].mxu0
      %v359 = vadd.f32 0.0, %v358
      %v360 = vpop.f32.mrb[0].mxu0
      %361 = vmatprep.mubr.f32.mxu0 %v290
      %362 = vmatmul.mubr.f32.gmra.mrb[0].mxu0 %v283
      %v363 = vpop.f32.mrb[0].mxu0
      %v364 = vadd.f32 0.0, %v363
      %v365 = vpop.f32.mrb[0].mxu0
      %366 = vdwg.mxu0
      %v367 = vld [vmem:[%s2] sm:$0xff]
      %v368 = vld [vmem:[%s2 + $0x8] sm:$0xff]
      %370 = vset.pattern.permute.xlu0 0
      %371 = vperm.xlu0 %370, %v367
      %v372 = vpop.permute.xlu0 %371
      %375 = vset.pattern.permute.xlu0 0
      %376 = vperm.xlu0 %375, %v368
      %v377 = vpop.permute.xlu0 %376
      %v379 = vmul.f32 %v359, %v372
      %v380 = vmul.f32 %v364, %v377
      %v381 = vld [vmem:[%s3] sm:$0xff]
      %v382 = vld [vmem:[%s3 + $0x8] sm:$0xff]
      %384 = vset.pattern.permute.xlu0 0
      %385 = vperm.xlu0 %384, %v381
      %v386 = vpop.permute.xlu0 %385
      %389 = vset.pattern.permute.xlu0 0
      %390 = vperm.xlu0 %389, %v382
      %v391 = vpop.permute.xlu0 %390
      %v393 = vadd.f32 %v379, %v386
      %v394 = vadd.f32 %v380, %v391
      %v395 = vmul.f32 %v393, 0.1
      %v396 = vmul.f32 %v394, 0.1
      %v397 = vmax.f32 %v393, %v395
      %v398 = vmax.f32 %v394, %v396
      %vm399 = vcmask 130048
      %400 = vst.msk [vmem:[%s197] sm:$0xff] %vm399, %v397
      %401 = vst.msk [vmem:[%s197 + $0x8] sm:$0xff] %vm399, %v398
      %p402 = scmp.lt.s32.totalorder %s15, 1
      %s403 = scalar_select %p402, %s15, 1
      %s404 = smul.addr %s403, 2
      %s405 = smul.addr %s404, 8
      %s406 = scalar_lea.vmem %s4, %s405
      // Predicated region
      $region37: #{unet_forward.11} parent=35 // pred_check
        %p407 = pneg %p122
      $region38: #{unet_forward.11} parent=35 // pred_check_branch
        %409 = sbr.rel (%p407) target = $region40
      $region39: #{unet_forward.11} parent=35 // pred_region
        _
      $region40: #{unet_forward.11} parent=35 // pred_fallthru
        _
    $region36: #{unet_forward.11} parent=5 // pred_fallthru
      _
    %p410 = scmp.le.s32.totalorder 2, %s10
    // Predicated region
    $region41: #{unet_forward.11} parent=5 // pred_check
      %p411 = pneg %p410
    $region42: #{unet_forward.11} parent=5 // pred_check_branch
      %413 = sbr.rel (%p411) target = $region44
    $region43: #{unet_forward.11} parent=5 // pred_region
      %s414 = ssub.s32 %s10, 2
      // Predicated region
      $region45: #{unet_forward.11} parent=43 // pred_check
        %p415 = pneg %p128
      $region46: #{unet_forward.11} parent=43 // pred_check_branch
        %417 = sbr.rel (%p415) target = $region48
      $region47: #{unet_forward.11} parent=43 // pred_region
        %p418 = scmp.lt.s32.totalorder %s16, 1
        %s419 = scalar_select %p418, %s16, 1
        %s420 = smul.addr %s419, 2
        %s421 = smul.addr %s420, 8
        %s422 = scalar_lea.vmem %s4, %s421
      $region48: #{unet_forward.11} parent=43 // pred_fallthru
        _
    $region44: #{unet_forward.11} parent=5 // pred_fallthru
      _
  $region6: #{unet_forward.11} parent=0 // loop_footer
    %s14 = sadd.s32 1, %s10
  $region7: #{unet_forward.11} parent=0 // loop_footer_branch
    %9 = sbr.rel target = $region3
  $region8: #{unet_forward.11} parent=0 // loop_exit
    _

// kernel: unet_forward.10
$region0: #{unet_forward.10}
  #allocation0 [shape = 'u32[]', space=smem, size = 0x4, offset = 0x4, fixed_abs, tag = 'smem constant byte address 0x4 - core index']
  #allocation1 [shape = 'u32[144,128]{1,0:T(1,128)}', space=vmem, size = 0x12000, scoped, tag = 'internal scratch']
  #allocation2 [shape = 'f32[8,42]{1,0:T(8,128)}', space=vmem, size = 0x1000, scoped, tag = 'scratch operand']
  %s0 = inlined_call_operand.vmem [shape: f32[2,8,32], index: 0, kind: input, shape index: {}]
  %s1 = inlined_call_operand.vmem [shape: f32[16,88], index: 1, kind: input, shape index: {}]
  %s2 = inlined_call_operand.vmem [shape: f32[16,1], index: 2, kind: input, shape index: {}]
  %s3 = inlined_call_operand.vmem [shape: f32[16,1], index: 3, kind: input, shape index: {}]
  %s4 = inlined_call_operand.vmem [shape: f32[32,16], index: 4, kind: input, shape index: {}]
  %s5 = inlined_call_operand.vmem [shape: f32[2,16,32], index: 5, kind: output, shape index: {0}]
  %s6 = inlined_call_operand.vmem [shape: f32[2,16,16], index: 6, kind: output, shape index: {1}]
  %7 = xla_tuple %s5, %s6
  %s8 = sld [smem:[#allocation0]]
  $region61: #{unet_forward.10} parent=0
    _
  %s10 = ssub.s32 1, %s8
  %s11 = scalar_select 0, %s10, %s8
  loop: start=0, step=1, limit=4
  $region2: #{unet_forward.10} parent=0 // loop_pre_header
    _
  $region3: #{unet_forward.10} parent=0 // loop_header
    %s13 = sphi 0, %s17
    %p14 = scmp.ge.s32.totalorder %s13, 4
    %s23 = sphi 0, %s25
    %s26 = sphi 0, %s23
    %s27 = sphi 0, %s26
    %s43 = sphi 0, %s27
    %s47 = sphi 0, %s47
    %s49 = sphi 0, %s47
    %s50 = sphi 0, %s49
    %s64 = sphi 0, %s50
    %s68 = sphi 0, %s68
    %s70 = sphi 0, %s68
    %s71 = sphi 0, %s70
    %s85 = sphi 0, %s71
    %s89 = sphi 0, %s89
    %s91 = sphi 0, %s89
    %s92 = sphi 0, %s91
    %s106 = sphi 0, %s92
    %s110 = sphi 0, %s110
    %s112 = sphi 0, %s110
    %s113 = sphi 0, %s112
    %s127 = sphi 0, %s113
    %s133 = sphi 0, %s135
    %s136 = sphi 0, %s133
    %s137 = sphi 0, %s136
    %s153 = sphi 0, %s137
    %s159 = sphi 0, %s161
    %s162 = sphi 0, %s159
    %s163 = sphi 0, %s162
    %s179 = sphi 0, %s163
  $region4: #{unet_forward.10} parent=0 // loop_header_branch
    %16 = sbr.rel (%p14) target = $region8
  $region5: #{unet_forward.10} parent=0 // loop_body
    %s18 = ssub.s32 %s13, 1
    %s19 = ssub.s32 %s13, 2
    %s20 = sadd.s32 %s13, 1
    %s21 = ssub.s32 %s13, %s20
    %p22 = scmp.eq.s32.totalorder %s21, 0
    %s24 = sadd.s32 %s23, 1
    %s25 = scalar_select %p22, %s23, %s24
    %p28 = pneg %p22
    %p29 = scmp.eq.s32.totalorder %s13, 1
    %p30 = por %p28, %p29
    %p31 = scmp.ne.s32.totalorder %s23, %s26
    %p32 = scmp.eq.s32.totalorder %s13, 0
    %p33 = por %p31, %p32
    %p34 = scmp.ne.s32.totalorder %s23, %s26
    %p35 = scmp.eq.s32.totalorder %s18, 1
    %p36 = por %p34, %p35
    %p37 = scmp.ne.s32.totalorder %s26, %s27
    %p38 = scmp.eq.s32.totalorder %s18, 0
    %p39 = por %p37, %p38
    %p40 = scmp.ne.s32.totalorder %s26, %s27
    %p41 = scmp.eq.s32.totalorder %s19, 1
    %p42 = por %p40, %p41
    %p44 = scmp.ne.s32.totalorder %s27, %s43
    %p45 = scmp.eq.s32.totalorder %s19, 0
    %p46 = por %p44, %p45
    %s48 = sadd.s32 %s47, 1
    %p51 = scmp.eq.s32.totalorder %s13, 1
    %p52 = scmp.ne.s32.totalorder %s47, %s49
    %p53 = scmp.eq.s32.totalorder %s13, 0
    %p54 = por %p52, %p53
    %p55 = scmp.ne.s32.totalorder %s47, %s49
    %p56 = scmp.eq.s32.totalorder %s18, 1
    %p57 = por %p55, %p56
    %p58 = scmp.ne.s32.totalorder %s49, %s50
    %p59 = scmp.eq.s32.totalorder %s18, 0
    %p60 = por %p58, %p59
    %p61 = scmp.ne.s32.totalorder %s49, %s50
    %p62 = scmp.eq.s32.totalorder %s19, 1
    %p63 = por %p61, %p62
    %p65 = scmp.ne.s32.totalorder %s50, %s64
    %p66 = scmp.eq.s32.totalorder %s19, 0
    %p67 = por %p65, %p66
    %s69 = sadd.s32 %s68, 1
    %p72 = scmp.eq.s32.totalorder %s13, 1
    %p73 = scmp.ne.s32.totalorder %s68, %s70
    %p74 = scmp.eq.s32.totalorder %s13, 0
    %p75 = por %p73, %p74
    %p76 = scmp.ne.s32.totalorder %s68, %s70
    %p77 = scmp.eq.s32.totalorder %s18, 1
    %p78 = por %p76, %p77
    %p79 = scmp.ne.s32.totalorder %s70, %s71
    %p80 = scmp.eq.s32.totalorder %s18, 0
    %p81 = por %p79, %p80
    %p82 = scmp.ne.s32.totalorder %s70, %s71
    %p83 = scmp.eq.s32.totalorder %s19, 1
    %p84 = por %p82, %p83
    %p86 = scmp.ne.s32.totalorder %s71, %s85
    %p87 = scmp.eq.s32.totalorder %s19, 0
    %p88 = por %p86, %p87
    %s90 = sadd.s32 %s89, 1
    %p93 = scmp.eq.s32.totalorder %s13, 1
    %p94 = scmp.ne.s32.totalorder %s89, %s91
    %p95 = scmp.eq.s32.totalorder %s13, 0
    %p96 = por %p94, %p95
    %p97 = scmp.ne.s32.totalorder %s89, %s91
    %p98 = scmp.eq.s32.totalorder %s18, 1
    %p99 = por %p97, %p98
    %p100 = scmp.ne.s32.totalorder %s91, %s92
    %p101 = scmp.eq.s32.totalorder %s18, 0
    %p102 = por %p100, %p101
    %p103 = scmp.ne.s32.totalorder %s91, %s92
    %p104 = scmp.eq.s32.totalorder %s19, 1
    %p105 = por %p103, %p104
    %p107 = scmp.ne.s32.totalorder %s92, %s106
    %p108 = scmp.eq.s32.totalorder %s19, 0
    %p109 = por %p107, %p108
    %s111 = sadd.s32 %s110, 1
    %p114 = scmp.eq.s32.totalorder %s13, 1
    %p115 = scmp.ne.s32.totalorder %s110, %s112
    %p116 = scmp.eq.s32.totalorder %s13, 0
    %p117 = por %p115, %p116
    %p118 = scmp.ne.s32.totalorder %s110, %s112
    %p119 = scmp.eq.s32.totalorder %s18, 1
    %p120 = por %p118, %p119
    %p121 = scmp.ne.s32.totalorder %s112, %s113
    %p122 = scmp.eq.s32.totalorder %s18, 0
    %p123 = por %p121, %p122
    %p124 = scmp.ne.s32.totalorder %s112, %s113
    %p125 = scmp.eq.s32.totalorder %s19, 1
    %p126 = por %p124, %p125
    %p128 = scmp.ne.s32.totalorder %s113, %s127
    %p129 = scmp.eq.s32.totalorder %s19, 0
    %p130 = por %p128, %p129
    %s131 = ssub.s32 %s13, %s20
    %p132 = scmp.eq.s32.totalorder %s131, 0
    %s134 = sadd.s32 %s133, 1
    %s135 = scalar_select %p132, %s133, %s134
    %p138 = pneg %p132
    %p139 = scmp.eq.s32.totalorder %s13, 1
    %p140 = por %p138, %p139
    %p141 = scmp.ne.s32.totalorder %s133, %s136
    %p142 = scmp.eq.s32.totalorder %s13, 0
    %p143 = por %p141, %p142
    %p144 = scmp.ne.s32.totalorder %s133, %s136
    %p145 = scmp.eq.s32.totalorder %s18, 1
    %p146 = por %p144, %p145
    %p147 = scmp.ne.s32.totalorder %s136, %s137
    %p148 = scmp.eq.s32.totalorder %s18, 0
    %p149 = por %p147, %p148
    %p150 = scmp.ne.s32.totalorder %s136, %s137
    %p151 = scmp.eq.s32.totalorder %s19, 1
    %p152 = por %p150, %p151
    %p154 = scmp.ne.s32.totalorder %s137, %s153
    %p155 = scmp.eq.s32.totalorder %s19, 0
    %p156 = por %p154, %p155
    %s157 = ssub.s32 %s13, %s20
    %p158 = scmp.eq.s32.totalorder %s157, 0
    %s160 = sadd.s32 %s159, 1
    %s161 = scalar_select %p158, %s159, %s160
    %p164 = pneg %p158
    %p165 = scmp.eq.s32.totalorder %s13, 1
    %p166 = por %p164, %p165
    %p167 = scmp.ne.s32.totalorder %s159, %s162
    %p168 = scmp.eq.s32.totalorder %s13, 0
    %p169 = por %p167, %p168
    %p170 = scmp.ne.s32.totalorder %s159, %s162
    %p171 = scmp.eq.s32.totalorder %s18, 1
    %p172 = por %p170, %p171
    %p173 = scmp.ne.s32.totalorder %s162, %s163
    %p174 = scmp.eq.s32.totalorder %s18, 0
    %p175 = por %p173, %p174
    %p176 = scmp.ne.s32.totalorder %s162, %s163
    %p177 = scmp.eq.s32.totalorder %s19, 1
    %p178 = por %p176, %p177
    %p180 = scmp.ne.s32.totalorder %s163, %s179
    %p181 = scmp.eq.s32.totalorder %s19, 0
    %p182 = por %p180, %p181
    %p183 = scmp.le.s32.totalorder 1, %s13
    %p184 = scmp.lt.s32.totalorder %s13, 3
    %p185 = pnand %p183, %p184
    %p186 = pneg %p185
    // Predicated region
    $region9: #{unet_forward.10} parent=5 // pred_check
      _
    $region10: #{unet_forward.10} parent=5 // pred_check_branch
      %188 = sbr.rel (%p185) target = $region12
    $region11: #{unet_forward.10} parent=5 // pred_region
      %s189 = ssub.s32 %s13, 1
      // Predicated region
      $region13: #{unet_forward.10} parent=11 // pred_check
        %p190 = pneg %p60
      $region14: #{unet_forward.10} parent=11 // pred_check_branch
        %192 = sbr.rel (%p190) target = $region16
      $region15: #{unet_forward.10} parent=11 // pred_region
        _
      $region16: #{unet_forward.10} parent=11 // pred_fallthru
        _
      // Predicated region
      $region17: #{unet_forward.10} parent=11 // pred_check
        %p193 = pneg %p81
      $region18: #{unet_forward.10} parent=11 // pred_check_branch
        %195 = sbr.rel (%p193) target = $region20
      $region19: #{unet_forward.10} parent=11 // pred_region
        _
      $region20: #{unet_forward.10} parent=11 // pred_fallthru
        _
      // Predicated region
      $region21: #{unet_forward.10} parent=11 // pred_check
        %p196 = pneg %p102
      $region22: #{unet_forward.10} parent=11 // pred_check_branch
        %198 = sbr.rel (%p196) target = $region24
      $region23: #{unet_forward.10} parent=11 // pred_region
        _
      $region24: #{unet_forward.10} parent=11 // pred_fallthru
        _
      // Predicated region
      $region25: #{unet_forward.10} parent=11 // pred_check
        %p199 = pneg %p123
      $region26: #{unet_forward.10} parent=11 // pred_check_branch
        %201 = sbr.rel (%p199) target = $region28
      $region27: #{unet_forward.10} parent=11 // pred_region
        _
      $region28: #{unet_forward.10} parent=11 // pred_fallthru
        _
    $region12: #{unet_forward.10} parent=5 // pred_fallthru
      _
    %p202 = scmp.lt.s32.totalorder %s13, 2
    // Predicated region
    $region29: #{unet_forward.10} parent=5 // pred_check
      %p203 = pneg %p202
    $region30: #{unet_forward.10} parent=5 // pred_check_branch
      %205 = sbr.rel (%p203) target = $region32
    $region31: #{unet_forward.10} parent=5 // pred_region
      // Predicated region
      $region33: #{unet_forward.10} parent=31 // pred_check
        %p206 = pneg %p33
      $region34: #{unet_forward.10} parent=31 // pred_check_branch
        %208 = sbr.rel (%p206) target = $region36
      $region35: #{unet_forward.10} parent=31 // pred_region
        %p209 = scmp.lt.s32.totalorder %s13, 1
        %s210 = scalar_select %p209, %s13, 1
        %s211 = smul.addr %s210, 8
        %s212 = scalar_lea.vmem %s0, %s211
      $region36: #{unet_forward.10} parent=31 // pred_fallthru
        _
    $region32: #{unet_forward.10} parent=5 // pred_fallthru
      _
    %p213 = scmp.le.s32.totalorder 1, %s13
    %p214 = scmp.lt.s32.totalorder %s13, 3
    %p215 = pnand %p213, %p214
    %p216 = pneg %p215
    // Predicated region
    $region37: #{unet_forward.10} parent=5 // pred_check
      _
    $region38: #{unet_forward.10} parent=5 // pred_check_branch
      %218 = sbr.rel (%p215) target = $region40
    $region39: #{unet_forward.10} parent=5 // pred_region
      %s219 = ssub.s32 %s13, 1
      %p220 = scmp.lt.s32.totalorder %s18, 1
      %s221 = scalar_select %p220, %s18, 1
      %s222 = smul.addr %s221, 8
      %s223 = scalar_lea.vmem %s0, %s222
      %p224 = pneg %p39
      %p225 = pneg %p36
      %p226 = pneg %p60
      %p227 = pneg %p57
      %p228 = pneg %p81
      %p229 = pneg %p78
      %p230 = pneg %p102
      %p231 = pneg %p99
      %p232 = pneg %p123
      %p233 = pneg %p120
      %p234 = pneg %p149
      %p235 = pneg %p146
      %p236 = scmp.lt.s32.totalorder %s18, 1
      %s237 = scalar_select %p236, %s18, 1
      %s238 = smul.addr %s237, 2
      %s239 = smul.addr %s238, 8
      %s240 = scalar_lea.vmem %s5, %s239
      %p241 = pneg %p175
      %p242 = pneg %p172
      %p243 = scmp.lt.s32.totalorder %s18, 1
      %s244 = scalar_select %p243, %s18, 1
      %s245 = smul.addr %s244, 2
      %s246 = smul.addr %s245, 8
      %s247 = scalar_lea.vmem %s6, %s246
      %p248 = scmp.lt.s32.totalorder %s18, 1
      %s249 = scalar_select %p248, %s18, 1
      %s250 = smul.addr %s249, 8
      %s251 = scalar_lea.vmem %s0, %s250
      %p252 = scmp.lt.s32.totalorder %s18, 1
      %s253 = scalar_select %p252, %s18, 1
      %s254 = smul.addr %s253, 2
      %s255 = smul.addr %s254, 8
      %s256 = scalar_lea.vmem %s5, %s255
      %p257 = scmp.lt.s32.totalorder %s18, 1
      %s258 = scalar_select %p257, %s18, 1
      %s259 = smul.addr %s258, 2
      %s260 = smul.addr %s259, 8
      %s261 = scalar_lea.vmem %s6, %s260
      %v262 = vld [vmem:[%s251] sm:$0xff]
      %vm263 = vcmask 39936
      %264 = vst.msk [vmem:[#allocation2] sm:$0xff] %vm263, 0.0
      %vm265 = vcmask 343336
      %266 = vst.msk [vmem:[#allocation2] sm:$0xff] %vm265, 0.0
      %268 = vrot.lane.b32.xlu0 %v262, 5
      %v269 = vpop.permute.xlu0 %268
      %vm271 = vcmask 302120
      %272 = vst.msk [vmem:[#allocation2] sm:$0xff] %vm271, %v269
      %v273 = vld [vmem:[#allocation2] sm:$0xff]
      %275 = vrot.lane.b32.xlu0 %v273, 127
      %v276 = vpop.permute.xlu0 %275
      %278 = vrot.lane.b32.xlu0 %v273, 126
      %v279 = vpop.permute.xlu0 %278
      %281 = vrot.lane.b32.xlu0 %v273, 125
      %v282 = vpop.permute.xlu0 %281
      %284 = vrot.lane.b32.xlu0 %v273, 124
      %v285 = vpop.permute.xlu0 %284
      %287 = vrot.lane.b32.xlu0 %v273, 123
      %v288 = vpop.permute.xlu0 %287
      %290 = vrot.lane.b32.xlu0 %v273, 122
      %v291 = vpop.permute.xlu0 %290
      %293 = vrot.lane.b32.xlu0 %v273, 121
      %v294 = vpop.permute.xlu0 %293
      %296 = vrot.lane.b32.xlu0 %v273, 120
      %v297 = vpop.permute.xlu0 %296
      %299 = vrot.lane.b32.xlu0 %v273, 119
      %v300 = vpop.permute.xlu0 %299
      %302 = vrot.lane.b32.xlu0 %v273, 118
      %v303 = vpop.permute.xlu0 %302
      %v305 = vld [vmem:[%s1] sm:$0xff]
      %v306 = vld [vmem:[%s1 + $0x8] sm:$0xff]
      %vm307 = vcmask 719872
      %v309 = vsel %vm307, %v305, 0
      %v312 = vsel %vm307, %v306, 0
      %314 = vmatprep.subr.mxu0 0.0
      %315 = vmatpush1.msra.mxu0 %v273
      %316 = vmatprep.subr.mxu0 0.0
      %317 = vmatpush1.msra.mxu0 %v276
      %318 = vmatprep.subr.mxu0 0.0
      %319 = vmatpush1.msra.mxu0 %v279
      %320 = vmatprep.subr.mxu0 0.0
      %321 = vmatpush1.msra.mxu0 %v282
      %322 = vmatprep.subr.mxu0 0.0
      %323 = vmatpush1.msra.mxu0 %v285
      %324 = vmatprep.subr.mxu0 0.0
      %325 = vmatpush1.msra.mxu0 %v288
      %326 = vmatprep.subr.mxu0 0.0
      %327 = vmatpush1.msra.mxu0 %v291
      %328 = vmatprep.subr.mxu0 0.0
      %329 = vmatpush1.msra.mxu0 %v294
      %330 = vmatprep.subr.mxu0 0.0
      %331 = vmatpush1.msra.mxu0 %v297
      %332 = vmatprep.subr.mxu0 0.0
      %333 = vmatpush1.msra.mxu0 %v300
      %334 = vmatprep.subr.mxu0 0.0
      %335 = vmatpush1.msra.mxu0 %v303
      %336 = vmatprep.subr.mxu0 0.0
      %337 = vmatpush1.msra.mxu0 0.0
      %338 = vmatprep.subr.mxu0 0.0
      %339 = vmatpush1.msra.mxu0 0.0
      %340 = vmatprep.subr.mxu0 0.0
      %341 = vmatpush1.msra.mxu0 0.0
      %342 = vmatprep.subr.mxu0 0.0
      %343 = vmatpush1.msra.mxu0 0.0
      %344 = vmatprep.subr.mxu0 0.0
      %345 = vmatpush1.msra.mxu0 0.0
      %346 = vmatprep.subr.mxu0 0.0
      %347 = vmatpush1.msra.mxu0 0.0
      %348 = vmatprep.subr.mxu0 0.0
      %349 = vmatpush1.msra.mxu0 0.0
      %350 = vmatprep.subr.mxu0 0.0
      %351 = vmatpush1.msra.mxu0 0.0
      %352 = vmatprep.subr.mxu0 0.0
      %353 = vmatpush1.msra.mxu0 0.0
      %354 = vmatprep.subr.mxu0 0.0
      %355 = vmatpush1.msra.mxu0 0.0
      %356 = vmatprep.subr.mxu0 0.0
      %357 = vmatpush1.msra.mxu0 0.0
      %358 = vmatprep.subr.mxu0 0.0
      %359 = vmatpush1.msra.mxu0 0.0
      %360 = vmatprep.subr.mxu0 0.0
      %361 = vmatpush1.msra.mxu0 0.0
      %362 = vmatprep.subr.mxu0 0.0
      %363 = vmatpush1.msra.mxu0 0.0
      %364 = vmatprep.subr.mxu0 0.0
      %365 = vmatpush1.msra.mxu0 0.0
      %366 = vmatprep.subr.mxu0 0.0
      %367 = vmatpush1.msra.mxu0 0.0
      %368 = vmatprep.subr.mxu0 0.0
      %369 = vmatpush1.msra.mxu0 0.0
      %370 = vmatprep.subr.mxu0 0.0
      %371 = vmatpush1.msra.mxu0 0.0
      %372 = vmatprep.subr.mxu0 0.0
      %373 = vmatpush1.msra.mxu0 0.0
      %374 = vmatprep.subr.mxu0 0.0
      %375 = vmatpush1.msra.mxu0 0.0
      %376 = vmatprep.subr.mxu0 0.0
      %377 = vmatpush1.msra.mxu0 0.0
      %378 = vmatprep.mubr.f32.mxu0 0.0
      %379 = vmatmul.mubr.f32.gmra.mrb[0].mxu0 %v309
      %v380 = vpop.f32.mrb[0].mxu0
      %v381 = vadd.f32 0.0, %v380
      %v382 = vpop.f32.mrb[0].mxu0
      %383 = vmatprep.mubr.f32.mxu0 0.0
      %384 = vmatmul.mubr.f32.gmra.mrb[0].mxu0 %v312
      %v385 = vpop.f32.mrb[0].mxu0
      %v386 = vadd.f32 0.0, %v385
      %v387 = vpop.f32.mrb[0].mxu0
      %388 = vdwg.mxu0
      %v389 = vld [vmem:[%s2] sm:$0xff]
      %v390 = vld [vmem:[%s2 + $0x8] sm:$0xff]
      %392 = vset.pattern.permute.xlu0 0
      %393 = vperm.xlu0 %392, %v389
      %v394 = vpop.permute.xlu0 %393
      %397 = vset.pattern.permute.xlu0 0
      %398 = vperm.xlu0 %397, %v390
      %v399 = vpop.permute.xlu0 %398
      %v401 = vmul.f32 %v381, %v394
      %v402 = vmul.f32 %v386, %v399
      %v403 = vld [vmem:[%s3] sm:$0xff]
      %v404 = vld [vmem:[%s3 + $0x8] sm:$0xff]
      %406 = vset.pattern.permute.xlu0 0
      %407 = vperm.xlu0 %406, %v403
      %v408 = vpop.permute.xlu0 %407
      %411 = vset.pattern.permute.xlu0 0
      %412 = vperm.xlu0 %411, %v404
      %v413 = vpop.permute.xlu0 %412
      %v415 = vadd.f32 %v401, %v408
      %v416 = vadd.f32 %v402, %v413
      %v417 = vmul.f32 %v415, 0.1
      %v418 = vmul.f32 %v416, 0.1
      %v419 = vmax.f32 %v415, %v417
      %v420 = vmax.f32 %v416, %v418
      %vm421 = vcmask 261120
      %422 = vst.msk [vmem:[%s256] sm:$0xff] %vm421, %v419
      %423 = vst.msk [vmem:[%s256 + $0x8] sm:$0xff] %vm421, %v420
      %v424 = vld [vmem:[%s4] sm:$0xff]
      %v425 = vld [vmem:[%s4 + $0x8] sm:$0xff]
      %v426 = vld [vmem:[%s4 + $0x10] sm:$0xff]
      %v427 = vld [vmem:[%s4 + $0x18] sm:$0xff]
      %v429 = vsel %vm421, %v419, 0
      %v432 = vsel %vm421, %v420, 0
      %434 = vmatprep.subr.mxu0 0.0
      %435 = vmatpush1.msra.mxu0 %v424
      %436 = vmatprep.subr.mxu0 0.0
      %437 = vmatpush1.msra.mxu0 %v425
      %438 = vmatprep.subr.mxu0 0.0
      %439 = vmatpush1.msra.mxu0 %v426
      %440 = vmatprep.subr.mxu0 0.0
      %441 = vmatpush1.msra.mxu0 %v427
      %442 = vmatprep.subr.mxu0 0.0
      %443 = vmatpush1.msra.mxu0 0.0
      %444 = vmatprep.subr.mxu0 0.0
      %445 = vmatpush1.msra.mxu0 0.0
      %446 = vmatprep.subr.mxu0 0.0
      %447 = vmatpush1.msra.mxu0 0.0
      %448 = vmatprep.subr.mxu0 0.0
      %449 = vmatpush1.msra.mxu0 0.0
      %450 = vmatprep.subr.mxu0 0.0
      %451 = vmatpush1.msra.mxu0 0.0
      %452 = vmatprep.subr.mxu0 0.0
      %453 = vmatpush1.msra.mxu0 0.0
      %454 = vmatprep.subr.mxu0 0.0
      %455 = vmatpush1.msra.mxu0 0.0
      %456 = vmatprep.subr.mxu0 0.0
      %457 = vmatpush1.msra.mxu0 0.0
      %458 = vmatprep.subr.mxu0 0.0
      %459 = vmatpush1.msra.mxu0 0.0
      %460 = vmatprep.subr.mxu0 0.0
      %461 = vmatpush1.msra.mxu0 0.0
      %462 = vmatprep.subr.mxu0 0.0
      %463 = vmatpush1.msra.mxu0 0.0
      %464 = vmatprep.subr.mxu0 0.0
      %465 = vmatpush1.msra.mxu0 0.0
      %466 = vmatprep.subr.mxu0 0.0
      %467 = vmatpush1.msra.mxu0 0.0
      %468 = vmatprep.subr.mxu0 0.0
      %469 = vmatpush1.msra.mxu0 0.0
      %470 = vmatprep.subr.mxu0 0.0
      %471 = vmatpush1.msra.mxu0 0.0
      %472 = vmatprep.subr.mxu0 0.0
      %473 = vmatpush1.msra.mxu0 0.0
      %474 = vmatprep.subr.mxu0 0.0
      %475 = vmatpush1.msra.mxu0 0.0
      %476 = vmatprep.subr.mxu0 0.0
      %477 = vmatpush1.msra.mxu0 0.0
      %478 = vmatprep.subr.mxu0 0.0
      %479 = vmatpush1.msra.mxu0 0.0
      %480 = vmatprep.subr.mxu0 0.0
      %481 = vmatpush1.msra.mxu0 0.0
      %482 = vmatprep.subr.mxu0 0.0
      %483 = vmatpush1.msra.mxu0 0.0
      %484 = vmatprep.subr.mxu0 0.0
      %485 = vmatpush1.msra.mxu0 0.0
      %486 = vmatprep.subr.mxu0 0.0
      %487 = vmatpush1.msra.mxu0 0.0
      %488 = vmatprep.subr.mxu0 0.0
      %489 = vmatpush1.msra.mxu0 0.0
      %490 = vmatprep.subr.mxu0 0.0
      %491 = vmatpush1.msra.mxu0 0.0
      %492 = vmatprep.subr.mxu0 0.0
      %493 = vmatpush1.msra.mxu0 0.0
      %494 = vmatprep.subr.mxu0 0.0
      %495 = vmatpush1.msra.mxu0 0.0
      %496 = vmatprep.subr.mxu0 0.0
      %497 = vmatpush1.msra.mxu0 0.0
      %498 = vmatprep.mubr.f32.mxu0 0.0
      %499 = vmatmul.mubr.f32.gmra.mrb[0].mxu0 %v429
      %v500 = vpop.f32.mrb[0].mxu0
      %v501 = vadd.f32 0.0, %v500
      %v502 = vpop.f32.mrb[0].mxu0
      %503 = vmatprep.mubr.f32.mxu0 0.0
      %504 = vmatmul.mubr.f32.gmra.mrb[0].mxu0 %v432
      %v505 = vpop.f32.mrb[0].mxu0
      %v506 = vadd.f32 0.0, %v505
      %v507 = vpop.f32.mrb[0].mxu0
      %508 = vdwg.mxu0
      %vm509 = vcmask 130048
      %510 = vst.msk [vmem:[%s261] sm:$0xff] %vm509, %v501
      %511 = vst.msk [vmem:[%s261 + $0x8] sm:$0xff] %vm509, %v506
      %p512 = scmp.lt.s32.totalorder %s18, 1
      %s513 = scalar_select %p512, %s18, 1
      %s514 = smul.addr %s513, 2
      %s515 = smul.addr %s514, 8
      %s516 = scalar_lea.vmem %s5, %s515
      %p517 = scmp.lt.s32.totalorder %s18, 1
      %s518 = scalar_select %p517, %s18, 1
      %s519 = smul.addr %s518, 2
      %s520 = smul.addr %s519, 8
      %s521 = scalar_lea.vmem %s6, %s520
      // Predicated region
      $region41: #{unet_forward.10} parent=39 // pred_check
        %p522 = pneg %p146
      $region42: #{unet_forward.10} parent=39 // pred_check_branch
        %524 = sbr.rel (%p522) target = $region44
      $region43: #{unet_forward.10} parent=39 // pred_region
        _
      $region44: #{unet_forward.10} parent=39 // pred_fallthru
        _
      // Predicated region
      $region45: #{unet_forward.10} parent=39 // pred_check
        %p525 = pneg %p172
      $region46: #{unet_forward.10} parent=39 // pred_check_branch
        %527 = sbr.rel (%p525) target = $region48
      $region47: #{unet_forward.10} parent=39 // pred_region
        _
      $region48: #{unet_forward.10} parent=39 // pred_fallthru
        _
    $region40: #{unet_forward.10} parent=5 // pred_fallthru
      _
    %p528 = scmp.le.s32.totalorder 2, %s13
    // Predicated region
    $region49: #{unet_forward.10} parent=5 // pred_check
      %p529 = pneg %p528
    $region50: #{unet_forward.10} parent=5 // pred_check_branch
      %531 = sbr.rel (%p529) target = $region52
    $region51: #{unet_forward.10} parent=5 // pred_region
      %s532 = ssub.s32 %s13, 2
      // Predicated region
      $region53: #{unet_forward.10} parent=51 // pred_check
        %p533 = pneg %p152
      $region54: #{unet_forward.10} parent=51 // pred_check_branch
        %535 = sbr.rel (%p533) target = $region56
      $region55: #{unet_forward.10} parent=51 // pred_region
        %p536 = scmp.lt.s32.totalorder %s19, 1
        %s537 = scalar_select %p536, %s19, 1
        %s538 = smul.addr %s537, 2
        %s539 = smul.addr %s538, 8
        %s540 = scalar_lea.vmem %s5, %s539
      $region56: #{unet_forward.10} parent=51 // pred_fallthru
        _
      // Predicated region
      $region57: #{unet_forward.10} parent=51 // pred_check
        %p541 = pneg %p178
      $region58: #{unet_forward.10} parent=51 // pred_check_branch
        %543 = sbr.rel (%p541) target = $region60
      $region59: #{unet_forward.10} parent=51 // pred_region
        %p544 = scmp.lt.s32.totalorder %s19, 1
        %s545 = scalar_select %p544, %s19, 1
        %s546 = smul.addr %s545, 2
        %s547 = smul.addr %s546, 8
        %s548 = scalar_lea.vmem %s6, %s547
      $region60: #{unet_forward.10} parent=51 // pred_fallthru
        _
    $region52: #{unet_forward.10} parent=5 // pred_fallthru
      _
  $region6: #{unet_forward.10} parent=0 // loop_footer
    %s17 = sadd.s32 1, %s13
  $region7: #{unet_forward.10} parent=0 // loop_footer_branch
    %12 = sbr.rel target = $region3
  $region8: #{unet_forward.10} parent=0 // loop_exit
    _

// kernel: unet_forward.15
$region0: #{unet_forward.15}
  #allocation0 [shape = 'u32[]', space=smem, size = 0x4, offset = 0x4, fixed_abs, tag = 'smem constant byte address 0x4 - core index']
  #allocation1 [shape = 'u32[144,128]{1,0:T(1,128)}', space=vmem, size = 0x12000, scoped, tag = 'internal scratch']
  %s0 = inlined_call_operand.vmem [shape: f32[2,8,128], index: 0, kind: input, shape index: {}]
  %s1 = inlined_call_operand.vmem [shape: f32[2,8,128], index: 1, kind: input, shape index: {}]
  %s2 = inlined_call_operand.vmem [shape: f32[8,8], index: 2, kind: input, shape index: {}]
  %s3 = inlined_call_operand.vmem [shape: f32[8,8], index: 3, kind: input, shape index: {}]
  %s4 = inlined_call_operand.vmem [shape: f32[8,1], index: 4, kind: input, shape index: {}]
  %s5 = inlined_call_operand.vmem [shape: f32[2,8,128], index: 5, kind: output, shape index: {}]
  %s6 = sld [smem:[#allocation0]]
  $region53: #{unet_forward.15} parent=0
    _
  %s8 = ssub.s32 1, %s6
  %s9 = scalar_select 0, %s8, %s6
  loop: start=0, step=1, limit=4
  $region2: #{unet_forward.15} parent=0 // loop_pre_header
    _
  $region3: #{unet_forward.15} parent=0 // loop_header
    %s11 = sphi 0, %s15
    %p12 = scmp.ge.s32.totalorder %s11, 4
    %s21 = sphi 0, %s23
    %s24 = sphi 0, %s21
    %s25 = sphi 0, %s24
    %s41 = sphi 0, %s25
    %s47 = sphi 0, %s49
    %s50 = sphi 0, %s47
    %s51 = sphi 0, %s50
    %s67 = sphi 0, %s51
    %s71 = sphi 0, %s71
    %s73 = sphi 0, %s71
    %s74 = sphi 0, %s73
    %s88 = sphi 0, %s74
    %s92 = sphi 0, %s92
    %s94 = sphi 0, %s92
    %s95 = sphi 0, %s94
    %s109 = sphi 0, %s95
    %s113 = sphi 0, %s113
    %s115 = sphi 0, %s113
    %s116 = sphi 0, %s115
    %s130 = sphi 0, %s116
    %s136 = sphi 0, %s138
    %s139 = sphi 0, %s136
    %s140 = sphi 0, %s139
    %s156 = sphi 0, %s140
  $region4: #{unet_forward.15} parent=0 // loop_header_branch
    %14 = sbr.rel (%p12) target = $region8
  $region5: #{unet_forward.15} parent=0 // loop_body
    %s16 = ssub.s32 %s11, 1
    %s17 = ssub.s32 %s11, 2
    %s18 = sadd.s32 %s11, 1
    %s19 = ssub.s32 %s11, %s18
    %p20 = scmp.eq.s32.totalorder %s19, 0
    %s22 = sadd.s32 %s21, 1
    %s23 = scalar_select %p20, %s21, %s22
    %p26 = pneg %p20
    %p27 = scmp.eq.s32.totalorder %s11, 1
    %p28 = por %p26, %p27
    %p29 = scmp.ne.s32.totalorder %s21, %s24
    %p30 = scmp.eq.s32.totalorder %s11, 0
    %p31 = por %p29, %p30
    %p32 = scmp.ne.s32.totalorder %s21, %s24
    %p33 = scmp.eq.s32.totalorder %s16, 1
    %p34 = por %p32, %p33
    %p35 = scmp.ne.s32.totalorder %s24, %s25
    %p36 = scmp.eq.s32.totalorder %s16, 0
    %p37 = por %p35, %p36
    %p38 = scmp.ne.s32.totalorder %s24, %s25
    %p39 = scmp.eq.s32.totalorder %s17, 1
    %p40 = por %p38, %p39
    %p42 = scmp.ne.s32.totalorder %s25, %s41
    %p43 = scmp.eq.s32.totalorder %s17, 0
    %p44 = por %p42, %p43
    %s45 = ssub.s32 %s11, %s18
    %p46 = scmp.eq.s32.totalorder %s45, 0
    %s48 = sadd.s32 %s47, 1
    %s49 = scalar_select %p46, %s47, %s48
    %p52 = pneg %p46
    %p53 = scmp.eq.s32.totalorder %s11, 1
    %p54 = por %p52, %p53
    %p55 = scmp.ne.s32.totalorder %s47, %s50
    %p56 = scmp.eq.s32.totalorder %s11, 0
    %p57 = por %p55, %p56
    %p58 = scmp.ne.s32.totalorder %s47, %s50
    %p59 = scmp.eq.s32.totalorder %s16, 1
    %p60 = por %p58, %p59
    %p61 = scmp.ne.s32.totalorder %s50, %s51
    %p62 = scmp.eq.s32.totalorder %s16, 0
    %p63 = por %p61, %p62
    %p64 = scmp.ne.s32.totalorder %s50, %s51
    %p65 = scmp.eq.s32.totalorder %s17, 1
    %p66 = por %p64, %p65
    %p68 = scmp.ne.s32.totalorder %s51, %s67
    %p69 = scmp.eq.s32.totalorder %s17, 0
    %p70 = por %p68, %p69
    %s72 = sadd.s32 %s71, 1
    %p75 = scmp.eq.s32.totalorder %s11, 1
    %p76 = scmp.ne.s32.totalorder %s71, %s73
    %p77 = scmp.eq.s32.totalorder %s11, 0
    %p78 = por %p76, %p77
    %p79 = scmp.ne.s32.totalorder %s71, %s73
    %p80 = scmp.eq.s32.totalorder %s16, 1
    %p81 = por %p79, %p80
    %p82 = scmp.ne.s32.totalorder %s73, %s74
    %p83 = scmp.eq.s32.totalorder %s16, 0
    %p84 = por %p82, %p83
    %p85 = scmp.ne.s32.totalorder %s73, %s74
    %p86 = scmp.eq.s32.totalorder %s17, 1
    %p87 = por %p85, %p86
    %p89 = scmp.ne.s32.totalorder %s74, %s88
    %p90 = scmp.eq.s32.totalorder %s17, 0
    %p91 = por %p89, %p90
    %s93 = sadd.s32 %s92, 1
    %p96 = scmp.eq.s32.totalorder %s11, 1
    %p97 = scmp.ne.s32.totalorder %s92, %s94
    %p98 = scmp.eq.s32.totalorder %s11, 0
    %p99 = por %p97, %p98
    %p100 = scmp.ne.s32.totalorder %s92, %s94
    %p101 = scmp.eq.s32.totalorder %s16, 1
    %p102 = por %p100, %p101
    %p103 = scmp.ne.s32.totalorder %s94, %s95
    %p104 = scmp.eq.s32.totalorder %s16, 0
    %p105 = por %p103, %p104
    %p106 = scmp.ne.s32.totalorder %s94, %s95
    %p107 = scmp.eq.s32.totalorder %s17, 1
    %p108 = por %p106, %p107
    %p110 = scmp.ne.s32.totalorder %s95, %s109
    %p111 = scmp.eq.s32.totalorder %s17, 0
    %p112 = por %p110, %p111
    %s114 = sadd.s32 %s113, 1
    %p117 = scmp.eq.s32.totalorder %s11, 1
    %p118 = scmp.ne.s32.totalorder %s113, %s115
    %p119 = scmp.eq.s32.totalorder %s11, 0
    %p120 = por %p118, %p119
    %p121 = scmp.ne.s32.totalorder %s113, %s115
    %p122 = scmp.eq.s32.totalorder %s16, 1
    %p123 = por %p121, %p122
    %p124 = scmp.ne.s32.totalorder %s115, %s116
    %p125 = scmp.eq.s32.totalorder %s16, 0
    %p126 = por %p124, %p125
    %p127 = scmp.ne.s32.totalorder %s115, %s116
    %p128 = scmp.eq.s32.totalorder %s17, 1
    %p129 = por %p127, %p128
    %p131 = scmp.ne.s32.totalorder %s116, %s130
    %p132 = scmp.eq.s32.totalorder %s17, 0
    %p133 = por %p131, %p132
    %s134 = ssub.s32 %s11, %s18
    %p135 = scmp.eq.s32.totalorder %s134, 0
    %s137 = sadd.s32 %s136, 1
    %s138 = scalar_select %p135, %s136, %s137
    %p141 = pneg %p135
    %p142 = scmp.eq.s32.totalorder %s11, 1
    %p143 = por %p141, %p142
    %p144 = scmp.ne.s32.totalorder %s136, %s139
    %p145 = scmp.eq.s32.totalorder %s11, 0
    %p146 = por %p144, %p145
    %p147 = scmp.ne.s32.totalorder %s136, %s139
    %p148 = scmp.eq.s32.totalorder %s16, 1
    %p149 = por %p147, %p148
    %p150 = scmp.ne.s32.totalorder %s139, %s140
    %p151 = scmp.eq.s32.totalorder %s16, 0
    %p152 = por %p150, %p151
    %p153 = scmp.ne.s32.totalorder %s139, %s140
    %p154 = scmp.eq.s32.totalorder %s17, 1
    %p155 = por %p153, %p154
    %p157 = scmp.ne.s32.totalorder %s140, %s156
    %p158 = scmp.eq.s32.totalorder %s17, 0
    %p159 = por %p157, %p158
    %p160 = scmp.le.s32.totalorder 1, %s11
    %p161 = scmp.lt.s32.totalorder %s11, 3
    %p162 = pnand %p160, %p161
    %p163 = pneg %p162
    // Predicated region
    $region9: #{unet_forward.15} parent=5 // pred_check
      _
    $region10: #{unet_forward.15} parent=5 // pred_check_branch
      %165 = sbr.rel (%p162) target = $region12
    $region11: #{unet_forward.15} parent=5 // pred_region
      %s166 = ssub.s32 %s11, 1
      // Predicated region
      $region13: #{unet_forward.15} parent=11 // pred_check
        %p167 = pneg %p84
      $region14: #{unet_forward.15} parent=11 // pred_check_branch
        %169 = sbr.rel (%p167) target = $region16
      $region15: #{unet_forward.15} parent=11 // pred_region
        _
      $region16: #{unet_forward.15} parent=11 // pred_fallthru
        _
      // Predicated region
      $region17: #{unet_forward.15} parent=11 // pred_check
        %p170 = pneg %p105
      $region18: #{unet_forward.15} parent=11 // pred_check_branch
        %172 = sbr.rel (%p170) target = $region20
      $region19: #{unet_forward.15} parent=11 // pred_region
        _
      $region20: #{unet_forward.15} parent=11 // pred_fallthru
        _
      // Predicated region
      $region21: #{unet_forward.15} parent=11 // pred_check
        %p173 = pneg %p126
      $region22: #{unet_forward.15} parent=11 // pred_check_branch
        %175 = sbr.rel (%p173) target = $region24
      $region23: #{unet_forward.15} parent=11 // pred_region
        _
      $region24: #{unet_forward.15} parent=11 // pred_fallthru
        _
    $region12: #{unet_forward.15} parent=5 // pred_fallthru
      _
    %p176 = scmp.lt.s32.totalorder %s11, 2
    // Predicated region
    $region25: #{unet_forward.15} parent=5 // pred_check
      %p177 = pneg %p176
    $region26: #{unet_forward.15} parent=5 // pred_check_branch
      %179 = sbr.rel (%p177) target = $region28
    $region27: #{unet_forward.15} parent=5 // pred_region
      // Predicated region
      $region29: #{unet_forward.15} parent=27 // pred_check
        %p180 = pneg %p31
      $region30: #{unet_forward.15} parent=27 // pred_check_branch
        %182 = sbr.rel (%p180) target = $region32
      $region31: #{unet_forward.15} parent=27 // pred_region
        %p183 = scmp.lt.s32.totalorder %s11, 1
        %s184 = scalar_select %p183, %s11, 1
        %s185 = smul.addr %s184, 8
        %s186 = scalar_lea.vmem %s0, %s185
      $region32: #{unet_forward.15} parent=27 // pred_fallthru
        _
      // Predicated region
      $region33: #{unet_forward.15} parent=27 // pred_check
        %p187 = pneg %p57
      $region34: #{unet_forward.15} parent=27 // pred_check_branch
        %189 = sbr.rel (%p187) target = $region36
      $region35: #{unet_forward.15} parent=27 // pred_region
        %p190 = scmp.lt.s32.totalorder %s11, 1
        %s191 = scalar_select %p190, %s11, 1
        %s192 = smul.addr %s191, 8
        %s193 = scalar_lea.vmem %s1, %s192
      $region36: #{unet_forward.15} parent=27 // pred_fallthru
        _
    $region28: #{unet_forward.15} parent=5 // pred_fallthru
      _
    %p194 = scmp.le.s32.totalorder 1, %s11
    %p195 = scmp.lt.s32.totalorder %s11, 3
    %p196 = pnand %p194, %p195
    %p197 = pneg %p196
    // Predicated region
    $region37: #{unet_forward.15} parent=5 // pred_check
      _
    $region38: #{unet_forward.15} parent=5 // pred_check_branch
      %199 = sbr.rel (%p196) target = $region40
    $region39: #{unet_forward.15} parent=5 // pred_region
      %s200 = ssub.s32 %s11, 1
      %p201 = scmp.lt.s32.totalorder %s16, 1
      %s202 = scalar_select %p201, %s16, 1
      %s203 = smul.addr %s202, 8
      %s204 = scalar_lea.vmem %s0, %s203
      %p205 = pneg %p37
      %p206 = pneg %p34
      %p207 = scmp.lt.s32.totalorder %s16, 1
      %s208 = scalar_select %p207, %s16, 1
      %s209 = smul.addr %s208, 8
      %s210 = scalar_lea.vmem %s1, %s209
      %p211 = pneg %p63
      %p212 = pneg %p60
      %p213 = pneg %p84
      %p214 = pneg %p81
      %p215 = pneg %p105
      %p216 = pneg %p102
      %p217 = pneg %p126
      %p218 = pneg %p123
      %p219 = pneg %p152
      %p220 = pneg %p149
      %p221 = scmp.lt.s32.totalorder %s16, 1
      %s222 = scalar_select %p221, %s16, 1
      %s223 = smul.addr %s222, 8
      %s224 = scalar_lea.vmem %s5, %s223
      %p225 = scmp.lt.s32.totalorder %s16, 1
      %s226 = scalar_select %p225, %s16, 1
      %s227 = smul.addr %s226, 8
      %s228 = scalar_lea.vmem %s0, %s227
      %p229 = scmp.lt.s32.totalorder %s16, 1
      %s230 = scalar_select %p229, %s16, 1
      %s231 = smul.addr %s230, 8
      %s232 = scalar_lea.vmem %s1, %s231
      %p233 = scmp.lt.s32.totalorder %s16, 1
      %s234 = scalar_select %p233, %s16, 1
      %s235 = smul.addr %s234, 8
      %s236 = scalar_lea.vmem %s5, %s235
      %v237 = vld [vmem:[%s2] sm:$0xff]
      %v238 = vld [vmem:[%s228] sm:$0xff]
      %v239 = vld [vmem:[%s3] sm:$0xff]
      %v240 = vld [vmem:[%s232] sm:$0xff]
      %vm241 = vcmask 64512
      %v243 = vsel %vm241, %v239, 0
      %245 = vmatprep.subr.mxu0 0.0
      %246 = vmatpush1.msra.mxu0 %v240
      %247 = vmatprep.subr.mxu0 0.0
      %248 = vmatpush1.msra.mxu0 0.0
      %249 = vmatprep.subr.mxu0 0.0
      %250 = vmatpush1.msra.mxu0 0.0
      %251 = vmatprep.subr.mxu0 0.0
      %252 = vmatpush1.msra.mxu0 0.0
      %253 = vmatprep.subr.mxu0 0.0
      %254 = vmatpush1.msra.mxu0 0.0
      %255 = vmatprep.subr.mxu0 0.0
      %256 = vmatpush1.msra.mxu0 0.0
      %257 = vmatprep.subr.mxu0 0.0
      %258 = vmatpush1.msra.mxu0 0.0
      %259 = vmatprep.subr.mxu0 0.0
      %260 = vmatpush1.msra.mxu0 0.0
      %261 = vmatprep.subr.mxu0 0.0
      %262 = vmatpush1.msra.mxu0 0.0
      %263 = vmatprep.subr.mxu0 0.0
      %264 = vmatpush1.msra.mxu0 0.0
      %265 = vmatprep.subr.mxu0 0.0
      %266 = vmatpush1.msra.mxu0 0.0
      %267 = vmatprep.subr.mxu0 0.0
      %268 = vmatpush1.msra.mxu0 0.0
      %269 = vmatprep.subr.mxu0 0.0
      %270 = vmatpush1.msra.mxu0 0.0
      %271 = vmatprep.subr.mxu0 0.0
      %272 = vmatpush1.msra.mxu0 0.0
      %273 = vmatprep.subr.mxu0 0.0
      %274 = vmatpush1.msra.mxu0 0.0
      %275 = vmatprep.subr.mxu0 0.0
      %276 = vmatpush1.msra.mxu0 0.0
      %277 = vmatprep.subr.mxu0 0.0
      %278 = vmatpush1.msra.mxu0 0.0
      %279 = vmatprep.subr.mxu0 0.0
      %280 = vmatpush1.msra.mxu0 0.0
      %281 = vmatprep.subr.mxu0 0.0
      %282 = vmatpush1.msra.mxu0 0.0
      %283 = vmatprep.subr.mxu0 0.0
      %284 = vmatpush1.msra.mxu0 0.0
      %285 = vmatprep.subr.mxu0 0.0
      %286 = vmatpush1.msra.mxu0 0.0
      %287 = vmatprep.subr.mxu0 0.0
      %288 = vmatpush1.msra.mxu0 0.0
      %289 = vmatprep.subr.mxu0 0.0
      %290 = vmatpush1.msra.mxu0 0.0
      %291 = vmatprep.subr.mxu0 0.0
      %292 = vmatpush1.msra.mxu0 0.0
      %293 = vmatprep.subr.mxu0 0.0
      %294 = vmatpush1.msra.mxu0 0.0
      %295 = vmatprep.subr.mxu0 0.0
      %296 = vmatpush1.msra.mxu0 0.0
      %297 = vmatprep.subr.mxu0 0.0
      %298 = vmatpush1.msra.mxu0 0.0
      %299 = vmatprep.subr.mxu0 0.0
      %300 = vmatpush1.msra.mxu0 0.0
      %301 = vmatprep.subr.mxu0 0.0
      %302 = vmatpush1.msra.mxu0 0.0
      %303 = vmatprep.subr.mxu0 0.0
      %304 = vmatpush1.msra.mxu0 0.0
      %305 = vmatprep.subr.mxu0 0.0
      %306 = vmatpush1.msra.mxu0 0.0
      %307 = vmatprep.subr.mxu0 0.0
      %308 = vmatpush1.msra.mxu0 0.0
      %309 = vmatprep.mubr.f32.mxu0 0.0
      %310 = vmatmul.mubr.f32.gmra.mrb[0].mxu0 %v243
      %v311 = vpop.f32.mrb[0].mxu0
      %v312 = vadd.f32 0.0, %v311
      %v313 = vpop.f32.mrb[0].mxu0
      %314 = vdwg.mxu0
      %v316 = vsel %vm241, %v237, 0
      %318 = vmatprep.subr.mxu0 0.0
      %319 = vmatpush1.msra.mxu0 %v238
      %320 = vmatprep.subr.mxu0 0.0
      %321 = vmatpush1.msra.mxu0 0.0
      %322 = vmatprep.subr.mxu0 0.0
      %323 = vmatpush1.msra.mxu0 0.0
      %324 = vmatprep.subr.mxu0 0.0
      %325 = vmatpush1.msra.mxu0 0.0
      %326 = vmatprep.subr.mxu0 0.0
      %327 = vmatpush1.msra.mxu0 0.0
      %328 = vmatprep.subr.mxu0 0.0
      %329 = vmatpush1.msra.mxu0 0.0
      %330 = vmatprep.subr.mxu0 0.0
      %331 = vmatpush1.msra.mxu0 0.0
      %332 = vmatprep.subr.mxu0 0.0
      %333 = vmatpush1.msra.mxu0 0.0
      %334 = vmatprep.subr.mxu0 0.0
      %335 = vmatpush1.msra.mxu0 0.0
      %336 = vmatprep.subr.mxu0 0.0
      %337 = vmatpush1.msra.mxu0 0.0
      %338 = vmatprep.subr.mxu0 0.0
      %339 = vmatpush1.msra.mxu0 0.0
      %340 = vmatprep.subr.mxu0 0.0
      %341 = vmatpush1.msra.mxu0 0.0
      %342 = vmatprep.subr.mxu0 0.0
      %343 = vmatpush1.msra.mxu0 0.0
      %344 = vmatprep.subr.mxu0 0.0
      %345 = vmatpush1.msra.mxu0 0.0
      %346 = vmatprep.subr.mxu0 0.0
      %347 = vmatpush1.msra.mxu0 0.0
      %348 = vmatprep.subr.mxu0 0.0
      %349 = vmatpush1.msra.mxu0 0.0
      %350 = vmatprep.subr.mxu0 0.0
      %351 = vmatpush1.msra.mxu0 0.0
      %352 = vmatprep.subr.mxu0 0.0
      %353 = vmatpush1.msra.mxu0 0.0
      %354 = vmatprep.subr.mxu0 0.0
      %355 = vmatpush1.msra.mxu0 0.0
      %356 = vmatprep.subr.mxu0 0.0
      %357 = vmatpush1.msra.mxu0 0.0
      %358 = vmatprep.subr.mxu0 0.0
      %359 = vmatpush1.msra.mxu0 0.0
      %360 = vmatprep.subr.mxu0 0.0
      %361 = vmatpush1.msra.mxu0 0.0
      %362 = vmatprep.subr.mxu0 0.0
      %363 = vmatpush1.msra.mxu0 0.0
      %364 = vmatprep.subr.mxu0 0.0
      %365 = vmatpush1.msra.mxu0 0.0
      %366 = vmatprep.subr.mxu0 0.0
      %367 = vmatpush1.msra.mxu0 0.0
      %368 = vmatprep.subr.mxu0 0.0
      %369 = vmatpush1.msra.mxu0 0.0
      %370 = vmatprep.subr.mxu0 0.0
      %371 = vmatpush1.msra.mxu0 0.0
      %372 = vmatprep.subr.mxu0 0.0
      %373 = vmatpush1.msra.mxu0 0.0
      %374 = vmatprep.subr.mxu0 0.0
      %375 = vmatpush1.msra.mxu0 0.0
      %376 = vmatprep.subr.mxu0 0.0
      %377 = vmatpush1.msra.mxu0 0.0
      %378 = vmatprep.subr.mxu0 0.0
      %379 = vmatpush1.msra.mxu0 0.0
      %380 = vmatprep.subr.mxu0 0.0
      %381 = vmatpush1.msra.mxu0 0.0
      %382 = vmatprep.mubr.f32.mxu0 0.0
      %383 = vmatmul.mubr.f32.gmra.mrb[0].mxu0 %v316
      %v384 = vpop.f32.mrb[0].mxu0
      %v385 = vadd.f32 %v312, %v384
      %v386 = vpop.f32.mrb[0].mxu0
      %387 = vdwg.mxu0
      %v388 = vld [vmem:[%s4] sm:$0xff]
      %390 = vset.pattern.permute.xlu0 0
      %391 = vperm.xlu0 %390, %v388
      %v392 = vpop.permute.xlu0 %391
      %v394 = vadd.f32 %v385, %v392
      %v395 = vtanh.pop %v394
      %396 = vst [vmem:[%s236] sm:$0xff] %v395
      %p397 = scmp.lt.s32.totalorder %s16, 1
      %s398 = scalar_select %p397, %s16, 1
      %s399 = smul.addr %s398, 8
      %s400 = scalar_lea.vmem %s5, %s399
      // Predicated region
      $region41: #{unet_forward.15} parent=39 // pred_check
        %p401 = pneg %p149
      $region42: #{unet_forward.15} parent=39 // pred_check_branch
        %403 = sbr.rel (%p401) target = $region44
      $region43: #{unet_forward.15} parent=39 // pred_region
        _
      $region44: #{unet_forward.15} parent=39 // pred_fallthru
        _
    $region40: #{unet_forward.15} parent=5 // pred_fallthru
      _
    %p404 = scmp.le.s32.totalorder 2, %s11
    // Predicated region
    $region45: #{unet_forward.15} parent=5 // pred_check
      %p405 = pneg %p404
    $region46: #{unet_forward.15} parent=5 // pred_check_branch
      %407 = sbr.rel (%p405) target = $region48
    $region47: #{unet_forward.15} parent=5 // pred_region
      %s408 = ssub.s32 %s11, 2
      // Predicated region
      $region49: #{unet_forward.15} parent=47 // pred_check
        %p409 = pneg %p155
      $region50: #{unet_forward.15} parent=47 // pred_check_branch
        %411 = sbr.rel (%p409) target = $region52
      $region51: #{unet_forward.15} parent=47 // pred_region
        %p412 = scmp.lt.s32.totalorder %s17, 1
        %s413 = scalar_select %p412, %s17, 1
        %s414 = smul.addr %s413, 8
        %s415 = scalar_lea.vmem %s5, %s414
      $region52: #{unet_forward.15} parent=47 // pred_fallthru
        _
    $region48: #{unet_forward.15} parent=5 // pred_fallthru
      _
  $region6: #{unet_forward.15} parent=0 // loop_footer
    %s15 = sadd.s32 1, %s11
  $region7: #{unet_forward.15} parent=0 // loop_footer_branch
    %10 = sbr.rel target = $region3
  $region8: #{unet_forward.15} parent=0 // loop_exit
    _

// kernel: unet_forward.13
$region0: #{unet_forward.13}
  #allocation0 [shape = 'u32[]', space=smem, size = 0x4, offset = 0x4, fixed_abs, tag = 'smem constant byte address 0x4 - core index']
  #allocation1 [shape = 'u32[144,128]{1,0:T(1,128)}', space=vmem, size = 0x12000, scoped, tag = 'internal scratch']
  #allocation2 [shape = 'f32[16,74]{1,0:T(8,128)}', space=vmem, size = 0x2000, scoped, tag = 'scratch operand']
  #allocation3 [shape = 'f32[8,74]{1,0:T(8,128)}', space=vmem, size = 0x1000, scoped, tag = 'scratch operand']
  %s0 = inlined_call_operand.vmem [shape: f32[2,16,32], index: 0, kind: input, shape index: {}]
  %s1 = inlined_call_operand.vmem [shape: f32[2,8,64], index: 1, kind: input, shape index: {}]
  %s2 = inlined_call_operand.vmem [shape: f32[32,64], index: 2, kind: input, shape index: {}]
  %s3 = inlined_call_operand.vmem [shape: f32[8,176], index: 3, kind: input, shape index: {}]
  %s4 = inlined_call_operand.vmem [shape: f32[8,88], index: 4, kind: input, shape index: {}]
  %s5 = inlined_call_operand.vmem [shape: f32[8,1], index: 5, kind: input, shape index: {}]
  %s6 = inlined_call_operand.vmem [shape: f32[8,1], index: 6, kind: input, shape index: {}]
  %s7 = inlined_call_operand.vmem [shape: f32[2,8,64], index: 7, kind: output, shape index: {}]
  %s8 = sld [smem:[#allocation0]]
  $region61: #{unet_forward.13} parent=0
    _
  %s10 = ssub.s32 1, %s8
  %s11 = scalar_select 0, %s10, %s8
  loop: start=0, step=1, limit=4
  $region2: #{unet_forward.13} parent=0 // loop_pre_header
    _
  $region3: #{unet_forward.13} parent=0 // loop_header
    %s13 = sphi 0, %s17
    %p14 = scmp.ge.s32.totalorder %s13, 4
    %s23 = sphi 0, %s25
    %s26 = sphi 0, %s23
    %s27 = sphi 0, %s26
    %s43 = sphi 0, %s27
    %s49 = sphi 0, %s51
    %s52 = sphi 0, %s49
    %s53 = sphi 0, %s52
    %s69 = sphi 0, %s53
    %s73 = sphi 0, %s73
    %s75 = sphi 0, %s73
    %s76 = sphi 0, %s75
    %s90 = sphi 0, %s76
    %s94 = sphi 0, %s94
    %s96 = sphi 0, %s94
    %s97 = sphi 0, %s96
    %s111 = sphi 0, %s97
    %s115 = sphi 0, %s115
    %s117 = sphi 0, %s115
    %s118 = sphi 0, %s117
    %s132 = sphi 0, %s118
    %s136 = sphi 0, %s136
    %s138 = sphi 0, %s136
    %s139 = sphi 0, %s138
    %s153 = sphi 0, %s139
    %s157 = sphi 0, %s157
    %s159 = sphi 0, %s157
    %s160 = sphi 0, %s159
    %s174 = sphi 0, %s160
    %s180 = sphi 0, %s182
    %s183 = sphi 0, %s180
    %s184 = sphi 0, %s183
    %s200 = sphi 0, %s184
  $region4: #{unet_forward.13} parent=0 // loop_header_branch
    %16 = sbr.rel (%p14) target = $region8
  $region5: #{unet_forward.13} parent=0 // loop_body
    %s18 = ssub.s32 %s13, 1
    %s19 = ssub.s32 %s13, 2
    %s20 = sadd.s32 %s13, 1
    %s21 = ssub.s32 %s13, %s20
    %p22 = scmp.eq.s32.totalorder %s21, 0
    %s24 = sadd.s32 %s23, 1
    %s25 = scalar_select %p22, %s23, %s24
    %p28 = pneg %p22
    %p29 = scmp.eq.s32.totalorder %s13, 1
    %p30 = por %p28, %p29
    %p31 = scmp.ne.s32.totalorder %s23, %s26
    %p32 = scmp.eq.s32.totalorder %s13, 0
    %p33 = por %p31, %p32
    %p34 = scmp.ne.s32.totalorder %s23, %s26
    %p35 = scmp.eq.s32.totalorder %s18, 1
    %p36 = por %p34, %p35
    %p37 = scmp.ne.s32.totalorder %s26, %s27
    %p38 = scmp.eq.s32.totalorder %s18, 0
    %p39 = por %p37, %p38
    %p40 = scmp.ne.s32.totalorder %s26, %s27
    %p41 = scmp.eq.s32.totalorder %s19, 1
    %p42 = por %p40, %p41
    %p44 = scmp.ne.s32.totalorder %s27, %s43
    %p45 = scmp.eq.s32.totalorder %s19, 0
    %p46 = por %p44, %p45
    %s47 = ssub.s32 %s13, %s20
    %p48 = scmp.eq.s32.totalorder %s47, 0
    %s50 = sadd.s32 %s49, 1
    %s51 = scalar_select %p48, %s49, %s50
    %p54 = pneg %p48
    %p55 = scmp.eq.s32.totalorder %s13, 1
    %p56 = por %p54, %p55
    %p57 = scmp.ne.s32.totalorder %s49, %s52
    %p58 = scmp.eq.s32.totalorder %s13, 0
    %p59 = por %p57, %p58
    %p60 = scmp.ne.s32.totalorder %s49, %s52
    %p61 = scmp.eq.s32.totalorder %s18, 1
    %p62 = por %p60, %p61
    %p63 = scmp.ne.s32.totalorder %s52, %s53
    %p64 = scmp.eq.s32.totalorder %s18, 0
    %p65 = por %p63, %p64
    %p66 = scmp.ne.s32.totalorder %s52, %s53
    %p67 = scmp.eq.s32.totalorder %s19, 1
    %p68 = por %p66, %p67
    %p70 = scmp.ne.s32.totalorder %s53, %s69
    %p71 = scmp.eq.s32.totalorder %s19, 0
    %p72 = por %p70, %p71
    %s74 = sadd.s32 %s73, 1
    %p77 = scmp.eq.s32.totalorder %s13, 1
    %p78 = scmp.ne.s32.totalorder %s73, %s75
    %p79 = scmp.eq.s32.totalorder %s13, 0
    %p80 = por %p78, %p79
    %p81 = scmp.ne.s32.totalorder %s73, %s75
    %p82 = scmp.eq.s32.totalorder %s18, 1
    %p83 = por %p81, %p82
    %p84 = scmp.ne.s32.totalorder %s75, %s76
    %p85 = scmp.eq.s32.totalorder %s18, 0
    %p86 = por %p84, %p85
    %p87 = scmp.ne.s32.totalorder %s75, %s76
    %p88 = scmp.eq.s32.totalorder %s19, 1
    %p89 = por %p87, %p88
    %p91 = scmp.ne.s32.totalorder %s76, %s90
    %p92 = scmp.eq.s32.totalorder %s19, 0
    %p93 = por %p91, %p92
    %s95 = sadd.s32 %s94, 1
    %p98 = scmp.eq.s32.totalorder %s13, 1
    %p99 = scmp.ne.s32.totalorder %s94, %s96
    %p100 = scmp.eq.s32.totalorder %s13, 0
    %p101 = por %p99, %p100
    %p102 = scmp.ne.s32.totalorder %s94, %s96
    %p103 = scmp.eq.s32.totalorder %s18, 1
    %p104 = por %p102, %p103
    %p105 = scmp.ne.s32.totalorder %s96, %s97
    %p106 = scmp.eq.s32.totalorder %s18, 0
    %p107 = por %p105, %p106
    %p108 = scmp.ne.s32.totalorder %s96, %s97
    %p109 = scmp.eq.s32.totalorder %s19, 1
    %p110 = por %p108, %p109
    %p112 = scmp.ne.s32.totalorder %s97, %s111
    %p113 = scmp.eq.s32.totalorder %s19, 0
    %p114 = por %p112, %p113
    %s116 = sadd.s32 %s115, 1
    %p119 = scmp.eq.s32.totalorder %s13, 1
    %p120 = scmp.ne.s32.totalorder %s115, %s117
    %p121 = scmp.eq.s32.totalorder %s13, 0
    %p122 = por %p120, %p121
    %p123 = scmp.ne.s32.totalorder %s115, %s117
    %p124 = scmp.eq.s32.totalorder %s18, 1
    %p125 = por %p123, %p124
    %p126 = scmp.ne.s32.totalorder %s117, %s118
    %p127 = scmp.eq.s32.totalorder %s18, 0
    %p128 = por %p126, %p127
    %p129 = scmp.ne.s32.totalorder %s117, %s118
    %p130 = scmp.eq.s32.totalorder %s19, 1
    %p131 = por %p129, %p130
    %p133 = scmp.ne.s32.totalorder %s118, %s132
    %p134 = scmp.eq.s32.totalorder %s19, 0
    %p135 = por %p133, %p134
    %s137 = sadd.s32 %s136, 1
    %p140 = scmp.eq.s32.totalorder %s13, 1
    %p141 = scmp.ne.s32.totalorder %s136, %s138
    %p142 = scmp.eq.s32.totalorder %s13, 0
    %p143 = por %p141, %p142
    %p144 = scmp.ne.s32.totalorder %s136, %s138
    %p145 = scmp.eq.s32.totalorder %s18, 1
    %p146 = por %p144, %p145
    %p147 = scmp.ne.s32.totalorder %s138, %s139
    %p148 = scmp.eq.s32.totalorder %s18, 0
    %p149 = por %p147, %p148
    %p150 = scmp.ne.s32.totalorder %s138, %s139
    %p151 = scmp.eq.s32.totalorder %s19, 1
    %p152 = por %p150, %p151
    %p154 = scmp.ne.s32.totalorder %s139, %s153
    %p155 = scmp.eq.s32.totalorder %s19, 0
    %p156 = por %p154, %p155
    %s158 = sadd.s32 %s157, 1
    %p161 = scmp.eq.s32.totalorder %s13, 1
    %p162 = scmp.ne.s32.totalorder %s157, %s159
    %p163 = scmp.eq.s32.totalorder %s13, 0
    %p164 = por %p162, %p163
    %p165 = scmp.ne.s32.totalorder %s157, %s159
    %p166 = scmp.eq.s32.totalorder %s18, 1
    %p167 = por %p165, %p166
    %p168 = scmp.ne.s32.totalorder %s159, %s160
    %p169 = scmp.eq.s32.totalorder %s18, 0
    %p170 = por %p168, %p169
    %p171 = scmp.ne.s32.totalorder %s159, %s160
    %p172 = scmp.eq.s32.totalorder %s19, 1
    %p173 = por %p171, %p172
    %p175 = scmp.ne.s32.totalorder %s160, %s174
    %p176 = scmp.eq.s32.totalorder %s19, 0
    %p177 = por %p175, %p176
    %s178 = ssub.s32 %s13, %s20
    %p179 = scmp.eq.s32.totalorder %s178, 0
    %s181 = sadd.s32 %s180, 1
    %s182 = scalar_select %p179, %s180, %s181
    %p185 = pneg %p179
    %p186 = scmp.eq.s32.totalorder %s13, 1
    %p187 = por %p185, %p186
    %p188 = scmp.ne.s32.totalorder %s180, %s183
    %p189 = scmp.eq.s32.totalorder %s13, 0
    %p190 = por %p188, %p189
    %p191 = scmp.ne.s32.totalorder %s180, %s183
    %p192 = scmp.eq.s32.totalorder %s18, 1
    %p193 = por %p191, %p192
    %p194 = scmp.ne.s32.totalorder %s183, %s184
    %p195 = scmp.eq.s32.totalorder %s18, 0
    %p196 = por %p194, %p195
    %p197 = scmp.ne.s32.totalorder %s183, %s184
    %p198 = scmp.eq.s32.totalorder %s19, 1
    %p199 = por %p197, %p198
    %p201 = scmp.ne.s32.totalorder %s184, %s200
    %p202 = scmp.eq.s32.totalorder %s19, 0
    %p203 = por %p201, %p202
    %p204 = scmp.le.s32.totalorder 1, %s13
    %p205 = scmp.lt.s32.totalorder %s13, 3
    %p206 = pnand %p204, %p205
    %p207 = pneg %p206
    // Predicated region
    $region9: #{unet_forward.13} parent=5 // pred_check
      _
    $region10: #{unet_forward.13} parent=5 // pred_check_branch
      %209 = sbr.rel (%p206) target = $region12
    $region11: #{unet_forward.13} parent=5 // pred_region
      %s210 = ssub.s32 %s13, 1
      // Predicated region
      $region13: #{unet_forward.13} parent=11 // pred_check
        %p211 = pneg %p86
      $region14: #{unet_forward.13} parent=11 // pred_check_branch
        %213 = sbr.rel (%p211) target = $region16
      $region15: #{unet_forward.13} parent=11 // pred_region
        _
      $region16: #{unet_forward.13} parent=11 // pred_fallthru
        _
      // Predicated region
      $region17: #{unet_forward.13} parent=11 // pred_check
        %p214 = pneg %p107
      $region18: #{unet_forward.13} parent=11 // pred_check_branch
        %216 = sbr.rel (%p214) target = $region20
      $region19: #{unet_forward.13} parent=11 // pred_region
        _
      $region20: #{unet_forward.13} parent=11 // pred_fallthru
        _
      // Predicated region
      $region21: #{unet_forward.13} parent=11 // pred_check
        %p217 = pneg %p128
      $region22: #{unet_forward.13} parent=11 // pred_check_branch
        %219 = sbr.rel (%p217) target = $region24
      $region23: #{unet_forward.13} parent=11 // pred_region
        _
      $region24: #{unet_forward.13} parent=11 // pred_fallthru
        _
      // Predicated region
      $region25: #{unet_forward.13} parent=11 // pred_check
        %p220 = pneg %p149
      $region26: #{unet_forward.13} parent=11 // pred_check_branch
        %222 = sbr.rel (%p220) target = $region28
      $region27: #{unet_forward.13} parent=11 // pred_region
        _
      $region28: #{unet_forward.13} parent=11 // pred_fallthru
        _
      // Predicated region
      $region29: #{unet_forward.13} parent=11 // pred_check
        %p223 = pneg %p170
      $region30: #{unet_forward.13} parent=11 // pred_check_branch
        %225 = sbr.rel (%p223) target = $region32
      $region31: #{unet_forward.13} parent=11 // pred_region
        _
      $region32: #{unet_forward.13} parent=11 // pred_fallthru
        _
    $region12: #{unet_forward.13} parent=5 // pred_fallthru
      _
    %p226 = scmp.lt.s32.totalorder %s13, 2
    // Predicated region
    $region33: #{unet_forward.13} parent=5 // pred_check
      %p227 = pneg %p226
    $region34: #{unet_forward.13} parent=5 // pred_check_branch
      %229 = sbr.rel (%p227) target = $region36
    $region35: #{unet_forward.13} parent=5 // pred_region
      // Predicated region
      $region37: #{unet_forward.13} parent=35 // pred_check
        %p230 = pneg %p33
      $region38: #{unet_forward.13} parent=35 // pred_check_branch
        %232 = sbr.rel (%p230) target = $region40
      $region39: #{unet_forward.13} parent=35 // pred_region
        %p233 = scmp.lt.s32.totalorder %s13, 1
        %s234 = scalar_select %p233, %s13, 1
        %s235 = smul.addr %s234, 2
        %s236 = smul.addr %s235, 8
        %s237 = scalar_lea.vmem %s0, %s236
      $region40: #{unet_forward.13} parent=35 // pred_fallthru
        _
      // Predicated region
      $region41: #{unet_forward.13} parent=35 // pred_check
        %p238 = pneg %p59
      $region42: #{unet_forward.13} parent=35 // pred_check_branch
        %240 = sbr.rel (%p238) target = $region44
      $region43: #{unet_forward.13} parent=35 // pred_region
        %p241 = scmp.lt.s32.totalorder %s13, 1
        %s242 = scalar_select %p241, %s13, 1
        %s243 = smul.addr %s242, 8
        %s244 = scalar_lea.vmem %s1, %s243
      $region44: #{unet_forward.13} parent=35 // pred_fallthru
        _
    $region36: #{unet_forward.13} parent=5 // pred_fallthru
      _
    %p245 = scmp.le.s32.totalorder 1, %s13
    %p246 = scmp.lt.s32.totalorder %s13, 3
    %p247 = pnand %p245, %p246
    %p248 = pneg %p247
    // Predicated region
    $region45: #{unet_forward.13} parent=5 // pred_check
      _
    $region46: #{unet_forward.13} parent=5 // pred_check_branch
      %250 = sbr.rel (%p247) target = $region48
    $region47: #{unet_forward.13} parent=5 // pred_region
      %s251 = ssub.s32 %s13, 1
      %p252 = scmp.lt.s32.totalorder %s18, 1
      %s253 = scalar_select %p252, %s18, 1
      %s254 = smul.addr %s253, 2
      %s255 = smul.addr %s254, 8
      %s256 = scalar_lea.vmem %s0, %s255
      %p257 = pneg %p39
      %p258 = pneg %p36
      %p259 = scmp.lt.s32.totalorder %s18, 1
      %s260 = scalar_select %p259, %s18, 1
      %s261 = smul.addr %s260, 8
      %s262 = scalar_lea.vmem %s1, %s261
      %p263 = pneg %p65
      %p264 = pneg %p62
      %p265 = pneg %p86
      %p266 = pneg %p83
      %p267 = pneg %p107
      %p268 = pneg %p104
      %p269 = pneg %p128
      %p270 = pneg %p125
      %p271 = pneg %p149
      %p272 = pneg %p146
      %p273 = pneg %p170
      %p274 = pneg %p167
      %p275 = pneg %p196
      %p276 = pneg %p193
      %p277 = scmp.lt.s32.totalorder %s18, 1
      %s278 = scalar_select %p277, %s18, 1
      %s279 = smul.addr %s278, 8
      %s280 = scalar_lea.vmem %s7, %s279
      %p281 = scmp.lt.s32.totalorder %s18, 1
      %s282 = scalar_select %p281, %s18, 1
      %s283 = smul.addr %s282, 2
      %s284 = smul.addr %s283, 8
      %s285 = scalar_lea.vmem %s0, %s284
      %p286 = scmp.lt.s32.totalorder %s18, 1
      %s287 = scalar_select %p286, %s18, 1
      %s288 = smul.addr %s287, 8
      %s289 = scalar_lea.vmem %s1, %s288
      %p290 = scmp.lt.s32.totalorder %s18, 1
      %s291 = scalar_select %p290, %s18, 1
      %s292 = smul.addr %s291, 8
      %s293 = scalar_lea.vmem %s7, %s292
      %v294 = vld [vmem:[%s285] sm:$0xff]
      %v295 = vld [vmem:[%s285 + $0x8] sm:$0xff]
      %v296 = vld [vmem:[%s2] sm:$0xff]
      %v297 = vld [vmem:[%s2 + $0x8] sm:$0xff]
      %v298 = vld [vmem:[%s2 + $0x10] sm:$0xff]
      %v299 = vld [vmem:[%s2 + $0x18] sm:$0xff]
      %vm300 = vcmask 261120
      %v302 = vsel %vm300, %v294, 0
      %v305 = vsel %vm300, %v295, 0
      %307 = vmatprep.subr.mxu0 0.0
      %308 = vmatpush1.msra.mxu0 %v296
      %309 = vmatprep.subr.mxu0 0.0
      %310 = vmatpush1.msra.mxu0 %v297
      %311 = vmatprep.subr.mxu0 0.0
      %312 = vmatpush1.msra.mxu0 %v298
      %313 = vmatprep.subr.mxu0 0.0
      %314 = vmatpush1.msra.mxu0 %v299
      %315 = vmatprep.subr.mxu0 0.0
      %316 = vmatpush1.msra.mxu0 0.0
      %317 = vmatprep.subr.mxu0 0.0
      %318 = vmatpush1.msra.mxu0 0.0
      %319 = vmatprep.subr.mxu0 0.0
      %320 = vmatpush1.msra.mxu0 0.0
      %321 = vmatprep.subr.mxu0 0.0
      %322 = vmatpush1.msra.mxu0 0.0
      %323 = vmatprep.subr.mxu0 0.0
      %324 = vmatpush1.msra.mxu0 0.0
      %325 = vmatprep.subr.mxu0 0.0
      %326 = vmatpush1.msra.mxu0 0.0
      %327 = vmatprep.subr.mxu0 0.0
      %328 = vmatpush1.msra.mxu0 0.0
      %329 = vmatprep.subr.mxu0 0.0
      %330 = vmatpush1.msra.mxu0 0.0
      %331 = vmatprep.subr.mxu0 0.0
      %332 = vmatpush1.msra.mxu0 0.0
      %333 = vmatprep.subr.mxu0 0.0
      %334 = vmatpush1.msra.mxu0 0.0
      %335 = vmatprep.subr.mxu0 0.0
      %336 = vmatpush1.msra.mxu0 0.0
      %337 = vmatprep.subr.mxu0 0.0
      %338 = vmatpush1.msra.mxu0 0.0
      %339 = vmatprep.subr.mxu0 0.0
      %340 = vmatpush1.msra.mxu0 0.0
      %341 = vmatprep.subr.mxu0 0.0
      %342 = vmatpush1.msra.mxu0 0.0
      %343 = vmatprep.subr.mxu0 0.0
      %344 = vmatpush1.msra.mxu0 0.0
      %345 = vmatprep.subr.mxu0 0.0
      %346 = vmatpush1.msra.mxu0 0.0
      %347 = vmatprep.subr.mxu0 0.0
      %348 = vmatpush1.msra.mxu0 0.0
      %349 = vmatprep.subr.mxu0 0.0
      %350 = vmatpush1.msra.mxu0 0.0
      %351 = vmatprep.subr.mxu0 0.0
      %352 = vmatpush1.msra.mxu0 0.0
      %353 = vmatprep.subr.mxu0 0.0
      %354 = vmatpush1.msra.mxu0 0.0
      %355 = vmatprep.subr.mxu0 0.0
      %356 = vmatpush1.msra.mxu0 0.0
      %357 = vmatprep.subr.mxu0 0.0
      %358 = vmatpush1.msra.mxu0 0.0
      %359 = vmatprep.subr.mxu0 0.0
      %360 = vmatpush1.msra.mxu0 0.0
      %361 = vmatprep.subr.mxu0 0.0
      %362 = vmatpush1.msra.mxu0 0.0
      %363 = vmatprep.subr.mxu0 0.0
      %364 = vmatpush1.msra.mxu0 0.0
      %365 = vmatprep.subr.mxu0 0.0
      %366 = vmatpush1.msra.mxu0 0.0
      %367 = vmatprep.subr.mxu0 0.0
      %368 = vmatpush1.msra.mxu0 0.0
      %369 = vmatprep.subr.mxu0 0.0
      %370 = vmatpush1.msra.mxu0 0.0
      %371 = vmatprep.mubr.f32.mxu0 0.0
      %372 = vmatmul.mubr.f32.gmra.mrb[0].mxu0 %v302
      %v373 = vpop.f32.mrb[0].mxu0
      %v374 = vadd.f32 0.0, %v373
      %v375 = vpop.f32.mrb[0].mxu0
      %376 = vmatprep.mubr.f32.mxu0 0.0
      %377 = vmatmul.mubr.f32.gmra.mrb[0].mxu0 %v305
      %v378 = vpop.f32.mrb[0].mxu0
      %v379 = vadd.f32 0.0, %v378
      %v380 = vpop.f32.mrb[0].mxu0
      %381 = vdwg.mxu0
      %vm382 = vcmask 39936
      %383 = vst.msk [vmem:[#allocation2] sm:$0xff] %vm382, 0.0
      %384 = vst.msk [vmem:[#allocation2 + $0x8] sm:$0xff] %vm382, 0.0
      %vm385 = vcmask 605736
      %386 = vst.msk [vmem:[#allocation2] sm:$0xff] %vm385, 0.0
      %387 = vst.msk [vmem:[#allocation2 + $0x8] sm:$0xff] %vm385, 0.0
      %390 = vrot.lane.b32.xlu0 %v374, 5
      %v391 = vpop.permute.xlu0 %390
      %392 = vrot.lane.b32.xlu0 %v379, 5
      %v393 = vpop.permute.xlu0 %392
      %vm396 = vcmask 564264
      %397 = vst.msk [vmem:[#allocation2] sm:$0xff] %vm396, %v391
      %398 = vst.msk [vmem:[#allocation2 + $0x8] sm:$0xff] %vm396, %v393
      %v399 = vld [vmem:[#allocation2] sm:$0xff]
      %v400 = vld [vmem:[#allocation2 + $0x8] sm:$0xff]
      %403 = vrot.lane.b32.xlu0 %v399, 127
      %v404 = vpop.permute.xlu0 %403
      %405 = vrot.lane.b32.xlu0 %v400, 127
      %v406 = vpop.permute.xlu0 %405
      %409 = vrot.lane.b32.xlu0 %v399, 126
      %v410 = vpop.permute.xlu0 %409
      %411 = vrot.lane.b32.xlu0 %v400, 126
      %v412 = vpop.permute.xlu0 %411
      %415 = vrot.lane.b32.xlu0 %v399, 125
      %v416 = vpop.permute.xlu0 %415
      %417 = vrot.lane.b32.xlu0 %v400, 125
      %v418 = vpop.permute.xlu0 %417
      %421 = vrot.lane.b32.xlu0 %v399, 124
      %v422 = vpop.permute.xlu0 %421
      %423 = vrot.lane.b32.xlu0 %v400, 124
      %v424 = vpop.permute.xlu0 %423
      %427 = vrot.lane.b32.xlu0 %v399, 123
      %v428 = vpop.permute.xlu0 %427
      %429 = vrot.lane.b32.xlu0 %v400, 123
      %v430 = vpop.permute.xlu0 %429
      %433 = vrot.lane.b32.xlu0 %v399, 122
      %v434 = vpop.permute.xlu0 %433
      %435 = vrot.lane.b32.xlu0 %v400, 122
      %v436 = vpop.permute.xlu0 %435
      %439 = vrot.lane.b32.xlu0 %v399, 121
      %v440 = vpop.permute.xlu0 %439
      %441 = vrot.lane.b32.xlu0 %v400, 121
      %v442 = vpop.permute.xlu0 %441
      %445 = vrot.lane.b32.xlu0 %v399, 120
      %v446 = vpop.permute.xlu0 %445
      %447 = vrot.lane.b32.xlu0 %v400, 120
      %v448 = vpop.permute.xlu0 %447
      %451 = vrot.lane.b32.xlu0 %v399, 119
      %v452 = vpop.permute.xlu0 %451
      %453 = vrot.lane.b32.xlu0 %v400, 119
      %v454 = vpop.permute.xlu0 %453
      %457 = vrot.lane.b32.xlu0 %v399, 118
      %v458 = vpop.permute.xlu0 %457
      %459 = vrot.lane.b32.xlu0 %v400, 118
      %v460 = vpop.permute.xlu0 %459
      %v463 = vld [vmem:[%s3] sm:$0xff]
      %v464 = vld [vmem:[%s3 + $0x8] sm:$0xff]
      %v465 = vld [vmem:[%s289] sm:$0xff]
      %466 = vst.msk [vmem:[#allocation3] sm:$0xff] %vm382, 0.0
      %467 = vst.msk [vmem:[#allocation3] sm:$0xff] %vm385, 0.0
      %469 = vrot.lane.b32.xlu0 %v465, 5
      %v470 = vpop.permute.xlu0 %469
      %472 = vst.msk [vmem:[#allocation3] sm:$0xff] %vm396, %v470
      %v473 = vld [vmem:[#allocation3] sm:$0xff]
      %475 = vrot.lane.b32.xlu0 %v473, 127
      %v476 = vpop.permute.xlu0 %475
      %478 = vrot.lane.b32.xlu0 %v473, 126
      %v479 = vpop.permute.xlu0 %478
      %481 = vrot.lane.b32.xlu0 %v473, 125
      %v482 = vpop.permute.xlu0 %481
      %484 = vrot.lane.b32.xlu0 %v473, 124
      %v485 = vpop.permute.xlu0 %484
      %487 = vrot.lane.b32.xlu0 %v473, 123
      %v488 = vpop.permute.xlu0 %487
      %490 = vrot.lane.b32.xlu0 %v473, 122
      %v491 = vpop.permute.xlu0 %490
      %493 = vrot.lane.b32.xlu0 %v473, 121
      %v494 = vpop.permute.xlu0 %493
      %496 = vrot.lane.b32.xlu0 %v473, 120
      %v497 = vpop.permute.xlu0 %496
      %499 = vrot.lane.b32.xlu0 %v473, 119
      %v500 = vpop.permute.xlu0 %499
      %502 = vrot.lane.b32.xlu0 %v473, 118
      %v503 = vpop.permute.xlu0 %502
      %v505 = vld [vmem:[%s4] sm:$0xff]
      %vm506 = vcmask 719872
      %v508 = vsel %vm506, %v505, 0
      %510 = vmatprep.subr.mxu0 0.0
      %511 = vmatpush1.msra.mxu0 %v473
      %512 = vmatprep.subr.mxu0 0.0
      %513 = vmatpush1.msra.mxu0 %v476
      %514 = vmatprep.subr.mxu0 0.0
      %515 = vmatpush1.msra.mxu0 %v479
      %516 = vmatprep.subr.mxu0 0.0
      %517 = vmatpush1.msra.mxu0 %v482
      %518 = vmatprep.subr.mxu0 0.0
      %519 = vmatpush1.msra.mxu0 %v485
      %520 = vmatprep.subr.mxu0 0.0
      %521 = vmatpush1.msra.mxu0 %v488
      %522 = vmatprep.subr.mxu0 0.0
      %523 = vmatpush1.msra.mxu0 %v491
      %524 = vmatprep.subr.mxu0 0.0
      %525 = vmatpush1.msra.mxu0 %v494
      %526 = vmatprep.subr.mxu0 0.0
      %527 = vmatpush1.msra.mxu0 %v497
      %528 = vmatprep.subr.mxu0 0.0
      %529 = vmatpush1.msra.mxu0 %v500
      %530 = vmatprep.subr.mxu0 0.0
      %531 = vmatpush1.msra.mxu0 %v503
      %532 = vmatprep.subr.mxu0 0.0
      %533 = vmatpush1.msra.mxu0 0.0
      %534 = vmatprep.subr.mxu0 0.0
      %535 = vmatpush1.msra.mxu0 0.0
      %536 = vmatprep.subr.mxu0 0.0
      %537 = vmatpush1.msra.mxu0 0.0
      %538 = vmatprep.subr.mxu0 0.0
      %539 = vmatpush1.msra.mxu0 0.0
      %540 = vmatprep.subr.mxu0 0.0
      %541 = vmatpush1.msra.mxu0 0.0
      %542 = vmatprep.subr.mxu0 0.0
      %543 = vmatpush1.msra.mxu0 0.0
      %544 = vmatprep.subr.mxu0 0.0
      %545 = vmatpush1.msra.mxu0 0.0
      %546 = vmatprep.subr.mxu0 0.0
      %547 = vmatpush1.msra.mxu0 0.0
      %548 = vmatprep.subr.mxu0 0.0
      %549 = vmatpush1.msra.mxu0 0.0
      %550 = vmatprep.subr.mxu0 0.0
      %551 = vmatpush1.msra.mxu0 0.0
      %552 = vmatprep.subr.mxu0 0.0
      %553 = vmatpush1.msra.mxu0 0.0
      %554 = vmatprep.subr.mxu0 0.0
      %555 = vmatpush1.msra.mxu0 0.0
      %556 = vmatprep.subr.mxu0 0.0
      %557 = vmatpush1.msra.mxu0 0.0
      %558 = vmatprep.subr.mxu0 0.0
      %559 = vmatpush1.msra.mxu0 0.0
      %560 = vmatprep.subr.mxu0 0.0
      %561 = vmatpush1.msra.mxu0 0.0
      %562 = vmatprep.subr.mxu0 0.0
      %563 = vmatpush1.msra.mxu0 0.0
      %564 = vmatprep.subr.mxu0 0.0
      %565 = vmatpush1.msra.mxu0 0.0
      %566 = vmatprep.subr.mxu0 0.0
      %567 = vmatpush1.msra.mxu0 0.0
      %568 = vmatprep.subr.mxu0 0.0
      %569 = vmatpush1.msra.mxu0 0.0
      %570 = vmatprep.subr.mxu0 0.0
      %571 = vmatpush1.msra.mxu0 0.0
      %572 = vmatprep.subr.mxu0 0.0
      %573 = vmatpush1.msra.mxu0 0.0
      %574 = vmatprep.mubr.f32.mxu0 0.0
      %575 = vmatmul.mubr.f32.gmra.mrb[0].mxu0 %v508
      %v576 = vpop.f32.mrb[0].mxu0
      %v577 = vadd.f32 0.0, %v576
      %v578 = vpop.f32.mrb[0].mxu0
      %579 = vdwg.mxu0
      %vm580 = vcmask 392192
      %v582 = vsel %vm580, %v464, 0
      %584 = vmatprep.subr.mxu0 0.0
      %585 = vmatpush1.msra.mxu0 %v399
      %586 = vmatprep.subr.mxu0 0.0
      %587 = vmatpush1.msra.mxu0 %v400
      %588 = vmatprep.subr.mxu0 0.0
      %589 = vmatpush1.msra.mxu0 %v404
      %590 = vmatprep.subr.mxu0 0.0
      %591 = vmatpush1.msra.mxu0 %v406
      %592 = vmatprep.subr.mxu0 0.0
      %593 = vmatpush1.msra.mxu0 %v410
      %594 = vmatprep.subr.mxu0 0.0
      %595 = vmatpush1.msra.mxu0 %v412
      %596 = vmatprep.subr.mxu0 0.0
      %597 = vmatpush1.msra.mxu0 %v416
      %598 = vmatprep.subr.mxu0 0.0
      %599 = vmatpush1.msra.mxu0 %v418
      %600 = vmatprep.subr.mxu0 0.0
      %601 = vmatpush1.msra.mxu0 %v422
      %602 = vmatprep.subr.mxu0 0.0
      %603 = vmatpush1.msra.mxu0 %v424
      %604 = vmatprep.subr.mxu0 0.0
      %605 = vmatpush1.msra.mxu0 %v428
      %606 = vmatprep.subr.mxu0 0.0
      %607 = vmatpush1.msra.mxu0 %v430
      %608 = vmatprep.subr.mxu0 0.0
      %609 = vmatpush1.msra.mxu0 %v434
      %610 = vmatprep.subr.mxu0 0.0
      %611 = vmatpush1.msra.mxu0 %v436
      %612 = vmatprep.subr.mxu0 0.0
      %613 = vmatpush1.msra.mxu0 %v440
      %614 = vmatprep.subr.mxu0 0.0
      %615 = vmatpush1.msra.mxu0 %v442
      %616 = vmatprep.subr.mxu0 0.0
      %617 = vmatpush1.msra.mxu0 %v446
      %618 = vmatprep.subr.mxu0 0.0
      %619 = vmatpush1.msra.mxu0 %v448
      %620 = vmatprep.subr.mxu0 0.0
      %621 = vmatpush1.msra.mxu0 %v452
      %622 = vmatprep.subr.mxu0 0.0
      %623 = vmatpush1.msra.mxu0 %v454
      %624 = vmatprep.subr.mxu0 0.0
      %625 = vmatpush1.msra.mxu0 %v458
      %626 = vmatprep.subr.mxu0 0.0
      %627 = vmatpush1.msra.mxu0 %v460
      %628 = vmatprep.subr.mxu0 0.0
      %629 = vmatpush1.msra.mxu0 0.0
      %630 = vmatprep.subr.mxu0 0.0
      %631 = vmatpush1.msra.mxu0 0.0
      %632 = vmatprep.subr.mxu0 0.0
      %633 = vmatpush1.msra.mxu0 0.0
      %634 = vmatprep.subr.mxu0 0.0
      %635 = vmatpush1.msra.mxu0 0.0
      %636 = vmatprep.subr.mxu0 0.0
      %637 = vmatpush1.msra.mxu0 0.0
      %638 = vmatprep.subr.mxu0 0.0
      %639 = vmatpush1.msra.mxu0 0.0
      %640 = vmatprep.subr.mxu0 0.0
      %641 = vmatpush1.msra.mxu0 0.0
      %642 = vmatprep.subr.mxu0 0.0
      %643 = vmatpush1.msra.mxu0 0.0
      %644 = vmatprep.subr.mxu0 0.0
      %645 = vmatpush1.msra.mxu0 0.0
      %646 = vmatprep.subr.mxu0 0.0
      %647 = vmatpush1.msra.mxu0 0.0
      %648 = vmatprep.mubr.f32.mxu0 %v582
      %649 = vmatmul.mubr.f32.gmra.mrb[0].mxu0 %v463
      %v650 = vpop.f32.mrb[0].mxu0
      %v651 = vadd.f32 %v577, %v650
      %v652 = vpop.f32.mrb[0].mxu0
      %653 = vdwg.mxu0
      %v654 = vld [vmem:[%s5] sm:$0xff]
      %656 = vset.pattern.permute.xlu0 0
      %657 = vperm.xlu0 %656, %v654
      %v658 = vpop.permute.xlu0 %657
      %v660 = vmul.f32 %v651, %v658
      %v661 = vld [vmem:[%s6] sm:$0xff]
      %663 = vset.pattern.permute.xlu0 0
      %664 = vperm.xlu0 %663, %v661
      %v665 = vpop.permute.xlu0 %664
      %v667 = vadd.f32 %v660, %v665
      %v668 = vmul.f32 %v667, 0.1
      %v669 = vmax.f32 %v667, %v668
      %vm670 = vcmask 523264
      %671 = vst.msk [vmem:[%s293] sm:$0xff] %vm670, %v669
      %p672 = scmp.lt.s32.totalorder %s18, 1
      %s673 = scalar_select %p672, %s18, 1
      %s674 = smul.addr %s673, 8
      %s675 = scalar_lea.vmem %s7, %s674
      // Predicated region
      $region49: #{unet_forward.13} parent=47 // pred_check
        %p676 = pneg %p193
      $region50: #{unet_forward.13} parent=47 // pred_check_branch
        %678 = sbr.rel (%p676) target = $region52
      $region51: #{unet_forward.13} parent=47 // pred_region
        _
      $region52: #{unet_forward.13} parent=47 // pred_fallthru
        _
    $region48: #{unet_forward.13} parent=5 // pred_fallthru
      _
    %p679 = scmp.le.s32.totalorder 2, %s13
    // Predicated region
    $region53: #{unet_forward.13} parent=5 // pred_check
      %p680 = pneg %p679
    $region54: #{unet_forward.13} parent=5 // pred_check_branch
      %682 = sbr.rel (%p680) target = $region56
    $region55: #{unet_forward.13} parent=5 // pred_region
      %s683 = ssub.s32 %s13, 2
      // Predicated region
      $region57: #{unet_forward.13} parent=55 // pred_check
        %p684 = pneg %p199
      $region58: #{unet_forward.13} parent=55 // pred_check_branch
        %686 = sbr.rel (%p684) target = $region60
      $region59: #{unet_forward.13} parent=55 // pred_region
        %p687 = scmp.lt.s32.totalorder %s19, 1
        %s688 = scalar_select %p687, %s19, 1
        %s689 = smul.addr %s688, 8
        %s690 = scalar_lea.vmem %s7, %s689
      $region60: #{unet_forward.13} parent=55 // pred_fallthru
        _
    $region56: #{unet_forward.13} parent=5 // pred_fallthru
      _
  $region6: #{unet_forward.13} parent=0 // loop_footer
    %s17 = sadd.s32 1, %s13
  $region7: #{unet_forward.13} parent=0 // loop_footer_branch
    %12 = sbr.rel target = $region3
  $region8: #{unet_forward.13} parent=0 // loop_exit
    _

// kernel: unet_forward.12
$region0: #{unet_forward.12}
  #allocation0 [shape = 'u32[]', space=smem, size = 0x4, offset = 0x4, fixed_abs, tag = 'smem constant byte address 0x4 - core index']
  #allocation1 [shape = 'u32[144,128]{1,0:T(1,128)}', space=vmem, size = 0x12000, scoped, tag = 'internal scratch']
  #allocation2 [shape = 'f32[16,42]{1,0:T(8,128)}', space=vmem, size = 0x2000, scoped, tag = 'scratch operand']
  #allocation3 [shape = 'f32[16,42]{1,0:T(8,128)}', space=vmem, size = 0x2000, scoped, tag = 'scratch operand']
  %s0 = inlined_call_operand.vmem [shape: f32[2,16,16], index: 0, kind: input, shape index: {}]
  %s1 = inlined_call_operand.vmem [shape: f32[2,16,32], index: 1, kind: input, shape index: {}]
  %s2 = inlined_call_operand.vmem [shape: f32[16,32], index: 2, kind: input, shape index: {}]
  %s3 = inlined_call_operand.vmem [shape: f32[16,176], index: 3, kind: input, shape index: {}]
  %s4 = inlined_call_operand.vmem [shape: f32[16,176], index: 4, kind: input, shape index: {}]
  %s5 = inlined_call_operand.vmem [shape: f32[16,1], index: 5, kind: input, shape index: {}]
  %s6 = inlined_call_operand.vmem [shape: f32[16,1], index: 6, kind: input, shape index: {}]
  %s7 = inlined_call_operand.vmem [shape: f32[2,16,32], index: 7, kind: output, shape index: {}]
  %s8 = sld [smem:[#allocation0]]
  $region61: #{unet_forward.12} parent=0
    _
  %s10 = ssub.s32 1, %s8
  %s11 = scalar_select 0, %s10, %s8
  loop: start=0, step=1, limit=4
  $region2: #{unet_forward.12} parent=0 // loop_pre_header
    _
  $region3: #{unet_forward.12} parent=0 // loop_header
    %s13 = sphi 0, %s17
    %p14 = scmp.ge.s32.totalorder %s13, 4
    %s23 = sphi 0, %s25
    %s26 = sphi 0, %s23
    %s27 = sphi 0, %s26
    %s43 = sphi 0, %s27
    %s49 = sphi 0, %s51
    %s52 = sphi 0, %s49
    %s53 = sphi 0, %s52
    %s69 = sphi 0, %s53
    %s73 = sphi 0, %s73
    %s75 = sphi 0, %s73
    %s76 = sphi 0, %s75
    %s90 = sphi 0, %s76
    %s94 = sphi 0, %s94
    %s96 = sphi 0, %s94
    %s97 = sphi 0, %s96
    %s111 = sphi 0, %s97
    %s115 = sphi 0, %s115
    %s117 = sphi 0, %s115
    %s118 = sphi 0, %s117
    %s132 = sphi 0, %s118
    %s136 = sphi 0, %s136
    %s138 = sphi 0, %s136
    %s139 = sphi 0, %s138
    %s153 = sphi 0, %s139
    %s157 = sphi 0, %s157
    %s159 = sphi 0, %s157
    %s160 = sphi 0, %s159
    %s174 = sphi 0, %s160
    %s180 = sphi 0, %s182
    %s183 = sphi 0, %s180
    %s184 = sphi 0, %s183
    %s200 = sphi 0, %s184
  $region4: #{unet_forward.12} parent=0 // loop_header_branch
    %16 = sbr.rel (%p14) target = $region8
  $region5: #{unet_forward.12} parent=0 // loop_body
    %s18 = ssub.s32 %s13, 1
    %s19 = ssub.s32 %s13, 2
    %s20 = sadd.s32 %s13, 1
    %s21 = ssub.s32 %s13, %s20
    %p22 = scmp.eq.s32.totalorder %s21, 0
    %s24 = sadd.s32 %s23, 1
    %s25 = scalar_select %p22, %s23, %s24
    %p28 = pneg %p22
    %p29 = scmp.eq.s32.totalorder %s13, 1
    %p30 = por %p28, %p29
    %p31 = scmp.ne.s32.totalorder %s23, %s26
    %p32 = scmp.eq.s32.totalorder %s13, 0
    %p33 = por %p31, %p32
    %p34 = scmp.ne.s32.totalorder %s23, %s26
    %p35 = scmp.eq.s32.totalorder %s18, 1
    %p36 = por %p34, %p35
    %p37 = scmp.ne.s32.totalorder %s26, %s27
    %p38 = scmp.eq.s32.totalorder %s18, 0
    %p39 = por %p37, %p38
    %p40 = scmp.ne.s32.totalorder %s26, %s27
    %p41 = scmp.eq.s32.totalorder %s19, 1
    %p42 = por %p40, %p41
    %p44 = scmp.ne.s32.totalorder %s27, %s43
    %p45 = scmp.eq.s32.totalorder %s19, 0
    %p46 = por %p44, %p45
    %s47 = ssub.s32 %s13, %s20
    %p48 = scmp.eq.s32.totalorder %s47, 0
    %s50 = sadd.s32 %s49, 1
    %s51 = scalar_select %p48, %s49, %s50
    %p54 = pneg %p48
    %p55 = scmp.eq.s32.totalorder %s13, 1
    %p56 = por %p54, %p55
    %p57 = scmp.ne.s32.totalorder %s49, %s52
    %p58 = scmp.eq.s32.totalorder %s13, 0
    %p59 = por %p57, %p58
    %p60 = scmp.ne.s32.totalorder %s49, %s52
    %p61 = scmp.eq.s32.totalorder %s18, 1
    %p62 = por %p60, %p61
    %p63 = scmp.ne.s32.totalorder %s52, %s53
    %p64 = scmp.eq.s32.totalorder %s18, 0
    %p65 = por %p63, %p64
    %p66 = scmp.ne.s32.totalorder %s52, %s53
    %p67 = scmp.eq.s32.totalorder %s19, 1
    %p68 = por %p66, %p67
    %p70 = scmp.ne.s32.totalorder %s53, %s69
    %p71 = scmp.eq.s32.totalorder %s19, 0
    %p72 = por %p70, %p71
    %s74 = sadd.s32 %s73, 1
    %p77 = scmp.eq.s32.totalorder %s13, 1
    %p78 = scmp.ne.s32.totalorder %s73, %s75
    %p79 = scmp.eq.s32.totalorder %s13, 0
    %p80 = por %p78, %p79
    %p81 = scmp.ne.s32.totalorder %s73, %s75
    %p82 = scmp.eq.s32.totalorder %s18, 1
    %p83 = por %p81, %p82
    %p84 = scmp.ne.s32.totalorder %s75, %s76
    %p85 = scmp.eq.s32.totalorder %s18, 0
    %p86 = por %p84, %p85
    %p87 = scmp.ne.s32.totalorder %s75, %s76
    %p88 = scmp.eq.s32.totalorder %s19, 1
    %p89 = por %p87, %p88
    %p91 = scmp.ne.s32.totalorder %s76, %s90
    %p92 = scmp.eq.s32.totalorder %s19, 0
    %p93 = por %p91, %p92
    %s95 = sadd.s32 %s94, 1
    %p98 = scmp.eq.s32.totalorder %s13, 1
    %p99 = scmp.ne.s32.totalorder %s94, %s96
    %p100 = scmp.eq.s32.totalorder %s13, 0
    %p101 = por %p99, %p100
    %p102 = scmp.ne.s32.totalorder %s94, %s96
    %p103 = scmp.eq.s32.totalorder %s18, 1
    %p104 = por %p102, %p103
    %p105 = scmp.ne.s32.totalorder %s96, %s97
    %p106 = scmp.eq.s32.totalorder %s18, 0
    %p107 = por %p105, %p106
    %p108 = scmp.ne.s32.totalorder %s96, %s97
    %p109 = scmp.eq.s32.totalorder %s19, 1
    %p110 = por %p108, %p109
    %p112 = scmp.ne.s32.totalorder %s97, %s111
    %p113 = scmp.eq.s32.totalorder %s19, 0
    %p114 = por %p112, %p113
    %s116 = sadd.s32 %s115, 1
    %p119 = scmp.eq.s32.totalorder %s13, 1
    %p120 = scmp.ne.s32.totalorder %s115, %s117
    %p121 = scmp.eq.s32.totalorder %s13, 0
    %p122 = por %p120, %p121
    %p123 = scmp.ne.s32.totalorder %s115, %s117
    %p124 = scmp.eq.s32.totalorder %s18, 1
    %p125 = por %p123, %p124
    %p126 = scmp.ne.s32.totalorder %s117, %s118
    %p127 = scmp.eq.s32.totalorder %s18, 0
    %p128 = por %p126, %p127
    %p129 = scmp.ne.s32.totalorder %s117, %s118
    %p130 = scmp.eq.s32.totalorder %s19, 1
    %p131 = por %p129, %p130
    %p133 = scmp.ne.s32.totalorder %s118, %s132
    %p134 = scmp.eq.s32.totalorder %s19, 0
    %p135 = por %p133, %p134
    %s137 = sadd.s32 %s136, 1
    %p140 = scmp.eq.s32.totalorder %s13, 1
    %p141 = scmp.ne.s32.totalorder %s136, %s138
    %p142 = scmp.eq.s32.totalorder %s13, 0
    %p143 = por %p141, %p142
    %p144 = scmp.ne.s32.totalorder %s136, %s138
    %p145 = scmp.eq.s32.totalorder %s18, 1
    %p146 = por %p144, %p145
    %p147 = scmp.ne.s32.totalorder %s138, %s139
    %p148 = scmp.eq.s32.totalorder %s18, 0
    %p149 = por %p147, %p148
    %p150 = scmp.ne.s32.totalorder %s138, %s139
    %p151 = scmp.eq.s32.totalorder %s19, 1
    %p152 = por %p150, %p151
    %p154 = scmp.ne.s32.totalorder %s139, %s153
    %p155 = scmp.eq.s32.totalorder %s19, 0
    %p156 = por %p154, %p155
    %s158 = sadd.s32 %s157, 1
    %p161 = scmp.eq.s32.totalorder %s13, 1
    %p162 = scmp.ne.s32.totalorder %s157, %s159
    %p163 = scmp.eq.s32.totalorder %s13, 0
    %p164 = por %p162, %p163
    %p165 = scmp.ne.s32.totalorder %s157, %s159
    %p166 = scmp.eq.s32.totalorder %s18, 1
    %p167 = por %p165, %p166
    %p168 = scmp.ne.s32.totalorder %s159, %s160
    %p169 = scmp.eq.s32.totalorder %s18, 0
    %p170 = por %p168, %p169
    %p171 = scmp.ne.s32.totalorder %s159, %s160
    %p172 = scmp.eq.s32.totalorder %s19, 1
    %p173 = por %p171, %p172
    %p175 = scmp.ne.s32.totalorder %s160, %s174
    %p176 = scmp.eq.s32.totalorder %s19, 0
    %p177 = por %p175, %p176
    %s178 = ssub.s32 %s13, %s20
    %p179 = scmp.eq.s32.totalorder %s178, 0
    %s181 = sadd.s32 %s180, 1
    %s182 = scalar_select %p179, %s180, %s181
    %p185 = pneg %p179
    %p186 = scmp.eq.s32.totalorder %s13, 1
    %p187 = por %p185, %p186
    %p188 = scmp.ne.s32.totalorder %s180, %s183
    %p189 = scmp.eq.s32.totalorder %s13, 0
    %p190 = por %p188, %p189
    %p191 = scmp.ne.s32.totalorder %s180, %s183
    %p192 = scmp.eq.s32.totalorder %s18, 1
    %p193 = por %p191, %p192
    %p194 = scmp.ne.s32.totalorder %s183, %s184
    %p195 = scmp.eq.s32.totalorder %s18, 0
    %p196 = por %p194, %p195
    %p197 = scmp.ne.s32.totalorder %s183, %s184
    %p198 = scmp.eq.s32.totalorder %s19, 1
    %p199 = por %p197, %p198
    %p201 = scmp.ne.s32.totalorder %s184, %s200
    %p202 = scmp.eq.s32.totalorder %s19, 0
    %p203 = por %p201, %p202
    %p204 = scmp.le.s32.totalorder 1, %s13
    %p205 = scmp.lt.s32.totalorder %s13, 3
    %p206 = pnand %p204, %p205
    %p207 = pneg %p206
    // Predicated region
    $region9: #{unet_forward.12} parent=5 // pred_check
      _
    $region10: #{unet_forward.12} parent=5 // pred_check_branch
      %209 = sbr.rel (%p206) target = $region12
    $region11: #{unet_forward.12} parent=5 // pred_region
      %s210 = ssub.s32 %s13, 1
      // Predicated region
      $region13: #{unet_forward.12} parent=11 // pred_check
        %p211 = pneg %p86
      $region14: #{unet_forward.12} parent=11 // pred_check_branch
        %213 = sbr.rel (%p211) target = $region16
      $region15: #{unet_forward.12} parent=11 // pred_region
        _
      $region16: #{unet_forward.12} parent=11 // pred_fallthru
        _
      // Predicated region
      $region17: #{unet_forward.12} parent=11 // pred_check
        %p214 = pneg %p107
      $region18: #{unet_forward.12} parent=11 // pred_check_branch
        %216 = sbr.rel (%p214) target = $region20
      $region19: #{unet_forward.12} parent=11 // pred_region
        _
      $region20: #{unet_forward.12} parent=11 // pred_fallthru
        _
      // Predicated region
      $region21: #{unet_forward.12} parent=11 // pred_check
        %p217 = pneg %p128
      $region22: #{unet_forward.12} parent=11 // pred_check_branch
        %219 = sbr.rel (%p217) target = $region24
      $region23: #{unet_forward.12} parent=11 // pred_region
        _
      $region24: #{unet_forward.12} parent=11 // pred_fallthru
        _
      // Predicated region
      $region25: #{unet_forward.12} parent=11 // pred_check
        %p220 = pneg %p149
      $region26: #{unet_forward.12} parent=11 // pred_check_branch
        %222 = sbr.rel (%p220) target = $region28
      $region27: #{unet_forward.12} parent=11 // pred_region
        _
      $region28: #{unet_forward.12} parent=11 // pred_fallthru
        _
      // Predicated region
      $region29: #{unet_forward.12} parent=11 // pred_check
        %p223 = pneg %p170
      $region30: #{unet_forward.12} parent=11 // pred_check_branch
        %225 = sbr.rel (%p223) target = $region32
      $region31: #{unet_forward.12} parent=11 // pred_region
        _
      $region32: #{unet_forward.12} parent=11 // pred_fallthru
        _
    $region12: #{unet_forward.12} parent=5 // pred_fallthru
      _
    %p226 = scmp.lt.s32.totalorder %s13, 2
    // Predicated region
    $region33: #{unet_forward.12} parent=5 // pred_check
      %p227 = pneg %p226
    $region34: #{unet_forward.12} parent=5 // pred_check_branch
      %229 = sbr.rel (%p227) target = $region36
    $region35: #{unet_forward.12} parent=5 // pred_region
      // Predicated region
      $region37: #{unet_forward.12} parent=35 // pred_check
        %p230 = pneg %p33
      $region38: #{unet_forward.12} parent=35 // pred_check_branch
        %232 = sbr.rel (%p230) target = $region40
      $region39: #{unet_forward.12} parent=35 // pred_region
        %p233 = scmp.lt.s32.totalorder %s13, 1
        %s234 = scalar_select %p233, %s13, 1
        %s235 = smul.addr %s234, 2
        %s236 = smul.addr %s235, 8
        %s237 = scalar_lea.vmem %s0, %s236
      $region40: #{unet_forward.12} parent=35 // pred_fallthru
        _
      // Predicated region
      $region41: #{unet_forward.12} parent=35 // pred_check
        %p238 = pneg %p59
      $region42: #{unet_forward.12} parent=35 // pred_check_branch
        %240 = sbr.rel (%p238) target = $region44
      $region43: #{unet_forward.12} parent=35 // pred_region
        %p241 = scmp.lt.s32.totalorder %s13, 1
        %s242 = scalar_select %p241, %s13, 1
        %s243 = smul.addr %s242, 2
        %s244 = smul.addr %s243, 8
        %s245 = scalar_lea.vmem %s1, %s244
      $region44: #{unet_forward.12} parent=35 // pred_fallthru
        _
    $region36: #{unet_forward.12} parent=5 // pred_fallthru
      _
    %p246 = scmp.le.s32.totalorder 1, %s13
    %p247 = scmp.lt.s32.totalorder %s13, 3
    %p248 = pnand %p246, %p247
    %p249 = pneg %p248
    // Predicated region
    $region45: #{unet_forward.12} parent=5 // pred_check
      _
    $region46: #{unet_forward.12} parent=5 // pred_check_branch
      %251 = sbr.rel (%p248) target = $region48
    $region47: #{unet_forward.12} parent=5 // pred_region
      %s252 = ssub.s32 %s13, 1
      %p253 = scmp.lt.s32.totalorder %s18, 1
      %s254 = scalar_select %p253, %s18, 1
      %s255 = smul.addr %s254, 2
      %s256 = smul.addr %s255, 8
      %s257 = scalar_lea.vmem %s0, %s256
      %p258 = pneg %p39
      %p259 = pneg %p36
      %p260 = scmp.lt.s32.totalorder %s18, 1
      %s261 = scalar_select %p260, %s18, 1
      %s262 = smul.addr %s261, 2
      %s263 = smul.addr %s262, 8
      %s264 = scalar_lea.vmem %s1, %s263
      %p265 = pneg %p65
      %p266 = pneg %p62
      %p267 = pneg %p86
      %p268 = pneg %p83
      %p269 = pneg %p107
      %p270 = pneg %p104
      %p271 = pneg %p128
      %p272 = pneg %p125
      %p273 = pneg %p149
      %p274 = pneg %p146
      %p275 = pneg %p170
      %p276 = pneg %p167
      %p277 = pneg %p196
      %p278 = pneg %p193
      %p279 = scmp.lt.s32.totalorder %s18, 1
      %s280 = scalar_select %p279, %s18, 1
      %s281 = smul.addr %s280, 2
      %s282 = smul.addr %s281, 8
      %s283 = scalar_lea.vmem %s7, %s282
      %p284 = scmp.lt.s32.totalorder %s18, 1
      %s285 = scalar_select %p284, %s18, 1
      %s286 = smul.addr %s285, 2
      %s287 = smul.addr %s286, 8
      %s288 = scalar_lea.vmem %s0, %s287
      %p289 = scmp.lt.s32.totalorder %s18, 1
      %s290 = scalar_select %p289, %s18, 1
      %s291 = smul.addr %s290, 2
      %s292 = smul.addr %s291, 8
      %s293 = scalar_lea.vmem %s1, %s292
      %p294 = scmp.lt.s32.totalorder %s18, 1
      %s295 = scalar_select %p294, %s18, 1
      %s296 = smul.addr %s295, 2
      %s297 = smul.addr %s296, 8
      %s298 = scalar_lea.vmem %s7, %s297
      %v299 = vld [vmem:[%s288] sm:$0xff]
      %v300 = vld [vmem:[%s288 + $0x8] sm:$0xff]
      %v301 = vld [vmem:[%s2] sm:$0xff]
      %v302 = vld [vmem:[%s2 + $0x8] sm:$0xff]
      %vm303 = vcmask 130048
      %v305 = vsel %vm303, %v299, 0
      %v308 = vsel %vm303, %v300, 0
      %310 = vmatprep.subr.mxu0 0.0
      %311 = vmatpush1.msra.mxu0 %v301
      %312 = vmatprep.subr.mxu0 0.0
      %313 = vmatpush1.msra.mxu0 %v302
      %314 = vmatprep.subr.mxu0 0.0
      %315 = vmatpush1.msra.mxu0 0.0
      %316 = vmatprep.subr.mxu0 0.0
      %317 = vmatpush1.msra.mxu0 0.0
      %318 = vmatprep.subr.mxu0 0.0
      %319 = vmatpush1.msra.mxu0 0.0
      %320 = vmatprep.subr.mxu0 0.0
      %321 = vmatpush1.msra.mxu0 0.0
      %322 = vmatprep.subr.mxu0 0.0
      %323 = vmatpush1.msra.mxu0 0.0
      %324 = vmatprep.subr.mxu0 0.0
      %325 = vmatpush1.msra.mxu0 0.0
      %326 = vmatprep.subr.mxu0 0.0
      %327 = vmatpush1.msra.mxu0 0.0
      %328 = vmatprep.subr.mxu0 0.0
      %329 = vmatpush1.msra.mxu0 0.0
      %330 = vmatprep.subr.mxu0 0.0
      %331 = vmatpush1.msra.mxu0 0.0
      %332 = vmatprep.subr.mxu0 0.0
      %333 = vmatpush1.msra.mxu0 0.0
      %334 = vmatprep.subr.mxu0 0.0
      %335 = vmatpush1.msra.mxu0 0.0
      %336 = vmatprep.subr.mxu0 0.0
      %337 = vmatpush1.msra.mxu0 0.0
      %338 = vmatprep.subr.mxu0 0.0
      %339 = vmatpush1.msra.mxu0 0.0
      %340 = vmatprep.subr.mxu0 0.0
      %341 = vmatpush1.msra.mxu0 0.0
      %342 = vmatprep.subr.mxu0 0.0
      %343 = vmatpush1.msra.mxu0 0.0
      %344 = vmatprep.subr.mxu0 0.0
      %345 = vmatpush1.msra.mxu0 0.0
      %346 = vmatprep.subr.mxu0 0.0
      %347 = vmatpush1.msra.mxu0 0.0
      %348 = vmatprep.subr.mxu0 0.0
      %349 = vmatpush1.msra.mxu0 0.0
      %350 = vmatprep.subr.mxu0 0.0
      %351 = vmatpush1.msra.mxu0 0.0
      %352 = vmatprep.subr.mxu0 0.0
      %353 = vmatpush1.msra.mxu0 0.0
      %354 = vmatprep.subr.mxu0 0.0
      %355 = vmatpush1.msra.mxu0 0.0
      %356 = vmatprep.subr.mxu0 0.0
      %357 = vmatpush1.msra.mxu0 0.0
      %358 = vmatprep.subr.mxu0 0.0
      %359 = vmatpush1.msra.mxu0 0.0
      %360 = vmatprep.subr.mxu0 0.0
      %361 = vmatpush1.msra.mxu0 0.0
      %362 = vmatprep.subr.mxu0 0.0
      %363 = vmatpush1.msra.mxu0 0.0
      %364 = vmatprep.subr.mxu0 0.0
      %365 = vmatpush1.msra.mxu0 0.0
      %366 = vmatprep.subr.mxu0 0.0
      %367 = vmatpush1.msra.mxu0 0.0
      %368 = vmatprep.subr.mxu0 0.0
      %369 = vmatpush1.msra.mxu0 0.0
      %370 = vmatprep.subr.mxu0 0.0
      %371 = vmatpush1.msra.mxu0 0.0
      %372 = vmatprep.subr.mxu0 0.0
      %373 = vmatpush1.msra.mxu0 0.0
      %374 = vmatprep.mubr.f32.mxu0 0.0
      %375 = vmatmul.mubr.f32.gmra.mrb[0].mxu0 %v305
      %v376 = vpop.f32.mrb[0].mxu0
      %v377 = vadd.f32 0.0, %v376
      %v378 = vpop.f32.mrb[0].mxu0
      %379 = vmatprep.mubr.f32.mxu0 0.0
      %380 = vmatmul.mubr.f32.gmra.mrb[0].mxu0 %v308
      %v381 = vpop.f32.mrb[0].mxu0
      %v382 = vadd.f32 0.0, %v381
      %v383 = vpop.f32.mrb[0].mxu0
      %384 = vdwg.mxu0
      %vm385 = vcmask 39936
      %386 = vst.msk [vmem:[#allocation2] sm:$0xff] %vm385, 0.0
      %387 = vst.msk [vmem:[#allocation2 + $0x8] sm:$0xff] %vm385, 0.0
      %vm388 = vcmask 343336
      %389 = vst.msk [vmem:[#allocation2] sm:$0xff] %vm388, 0.0
      %390 = vst.msk [vmem:[#allocation2 + $0x8] sm:$0xff] %vm388, 0.0
      %393 = vrot.lane.b32.xlu0 %v377, 5
      %v394 = vpop.permute.xlu0 %393
      %395 = vrot.lane.b32.xlu0 %v382, 5
      %v396 = vpop.permute.xlu0 %395
      %vm399 = vcmask 302120
      %400 = vst.msk [vmem:[#allocation2] sm:$0xff] %vm399, %v394
      %401 = vst.msk [vmem:[#allocation2 + $0x8] sm:$0xff] %vm399, %v396
      %v402 = vld [vmem:[#allocation2] sm:$0xff]
      %v403 = vld [vmem:[#allocation2 + $0x8] sm:$0xff]
      %406 = vrot.lane.b32.xlu0 %v402, 127
      %v407 = vpop.permute.xlu0 %406
      %408 = vrot.lane.b32.xlu0 %v403, 127
      %v409 = vpop.permute.xlu0 %408
      %412 = vrot.lane.b32.xlu0 %v402, 126
      %v413 = vpop.permute.xlu0 %412
      %414 = vrot.lane.b32.xlu0 %v403, 126
      %v415 = vpop.permute.xlu0 %414
      %418 = vrot.lane.b32.xlu0 %v402, 125
      %v419 = vpop.permute.xlu0 %418
      %420 = vrot.lane.b32.xlu0 %v403, 125
      %v421 = vpop.permute.xlu0 %420
      %424 = vrot.lane.b32.xlu0 %v402, 124
      %v425 = vpop.permute.xlu0 %424
      %426 = vrot.lane.b32.xlu0 %v403, 124
      %v427 = vpop.permute.xlu0 %426
      %430 = vrot.lane.b32.xlu0 %v402, 123
      %v431 = vpop.permute.xlu0 %430
      %432 = vrot.lane.b32.xlu0 %v403, 123
      %v433 = vpop.permute.xlu0 %432
      %436 = vrot.lane.b32.xlu0 %v402, 122
      %v437 = vpop.permute.xlu0 %436
      %438 = vrot.lane.b32.xlu0 %v403, 122
      %v439 = vpop.permute.xlu0 %438
      %442 = vrot.lane.b32.xlu0 %v402, 121
      %v443 = vpop.permute.xlu0 %442
      %444 = vrot.lane.b32.xlu0 %v403, 121
      %v445 = vpop.permute.xlu0 %444
      %448 = vrot.lane.b32.xlu0 %v402, 120
      %v449 = vpop.permute.xlu0 %448
      %450 = vrot.lane.b32.xlu0 %v403, 120
      %v451 = vpop.permute.xlu0 %450
      %454 = vrot.lane.b32.xlu0 %v402, 119
      %v455 = vpop.permute.xlu0 %454
      %456 = vrot.lane.b32.xlu0 %v403, 119
      %v457 = vpop.permute.xlu0 %456
      %460 = vrot.lane.b32.xlu0 %v402, 118
      %v461 = vpop.permute.xlu0 %460
      %462 = vrot.lane.b32.xlu0 %v403, 118
      %v463 = vpop.permute.xlu0 %462
      %v466 = vld [vmem:[%s3] sm:$0xff]
      %v467 = vld [vmem:[%s3 + $0x8] sm:$0xff]
      %v468 = vld [vmem:[%s3 + $0x10] sm:$0xff]
      %v469 = vld [vmem:[%s3 + $0x18] sm:$0xff]
      %v470 = vld [vmem:[%s293] sm:$0xff]
      %v471 = vld [vmem:[%s293 + $0x8] sm:$0xff]
      %472 = vst.msk [vmem:[#allocation3] sm:$0xff] %vm385, 0.0
      %473 = vst.msk [vmem:[#allocation3 + $0x8] sm:$0xff] %vm385, 0.0
      %474 = vst.msk [vmem:[#allocation3] sm:$0xff] %vm388, 0.0
      %475 = vst.msk [vmem:[#allocation3 + $0x8] sm:$0xff] %vm388, 0.0
      %478 = vrot.lane.b32.xlu0 %v470, 5
      %v479 = vpop.permute.xlu0 %478
      %480 = vrot.lane.b32.xlu0 %v471, 5
      %v481 = vpop.permute.xlu0 %480
      %484 = vst.msk [vmem:[#allocation3] sm:$0xff] %vm399, %v479
      %485 = vst.msk [vmem:[#allocation3 + $0x8] sm:$0xff] %vm399, %v481
      %v486 = vld [vmem:[#allocation3] sm:$0xff]
      %v487 = vld [vmem:[#allocation3 + $0x8] sm:$0xff]
      %490 = vrot.lane.b32.xlu0 %v486, 127
      %v491 = vpop.permute.xlu0 %490
      %492 = vrot.lane.b32.xlu0 %v487, 127
      %v493 = vpop.permute.xlu0 %492
      %496 = vrot.lane.b32.xlu0 %v486, 126
      %v497 = vpop.permute.xlu0 %496
      %498 = vrot.lane.b32.xlu0 %v487, 126
      %v499 = vpop.permute.xlu0 %498
      %502 = vrot.lane.b32.xlu0 %v486, 125
      %v503 = vpop.permute.xlu0 %502
      %504 = vrot.lane.b32.xlu0 %v487, 125
      %v505 = vpop.permute.xlu0 %504
      %508 = vrot.lane.b32.xlu0 %v486, 124
      %v509 = vpop.permute.xlu0 %508
      %510 = vrot.lane.b32.xlu0 %v487, 124
      %v511 = vpop.permute.xlu0 %510
      %514 = vrot.lane.b32.xlu0 %v486, 123
      %v515 = vpop.permute.xlu0 %514
      %516 = vrot.lane.b32.xlu0 %v487, 123
      %v517 = vpop.permute.xlu0 %516
      %520 = vrot.lane.b32.xlu0 %v486, 122
      %v521 = vpop.permute.xlu0 %520
      %522 = vrot.lane.b32.xlu0 %v487, 122
      %v523 = vpop.permute.xlu0 %522
      %526 = vrot.lane.b32.xlu0 %v486, 121
      %v527 = vpop.permute.xlu0 %526
      %528 = vrot.lane.b32.xlu0 %v487, 121
      %v529 = vpop.permute.xlu0 %528
      %532 = vrot.lane.b32.xlu0 %v486, 120
      %v533 = vpop.permute.xlu0 %532
      %534 = vrot.lane.b32.xlu0 %v487, 120
      %v535 = vpop.permute.xlu0 %534
      %538 = vrot.lane.b32.xlu0 %v486, 119
      %v539 = vpop.permute.xlu0 %538
      %540 = vrot.lane.b32.xlu0 %v487, 119
      %v541 = vpop.permute.xlu0 %540
      %544 = vrot.lane.b32.xlu0 %v486, 118
      %v545 = vpop.permute.xlu0 %544
      %546 = vrot.lane.b32.xlu0 %v487, 118
      %v547 = vpop.permute.xlu0 %546
      %v550 = vld [vmem:[%s4] sm:$0xff]
      %v551 = vld [vmem:[%s4 + $0x8] sm:$0xff]
      %v552 = vld [vmem:[%s4 + $0x10] sm:$0xff]
      %v553 = vld [vmem:[%s4 + $0x18] sm:$0xff]
      %vm554 = vcmask 392192
      %v556 = vsel %vm554, %v551, 0
      %v559 = vsel %vm554, %v553, 0
      %561 = vmatprep.subr.mxu0 0.0
      %562 = vmatpush1.msra.mxu0 %v486
      %563 = vmatprep.subr.mxu0 0.0
      %564 = vmatpush1.msra.mxu0 %v487
      %565 = vmatprep.subr.mxu0 0.0
      %566 = vmatpush1.msra.mxu0 %v491
      %567 = vmatprep.subr.mxu0 0.0
      %568 = vmatpush1.msra.mxu0 %v493
      %569 = vmatprep.subr.mxu0 0.0
      %570 = vmatpush1.msra.mxu0 %v497
      %571 = vmatprep.subr.mxu0 0.0
      %572 = vmatpush1.msra.mxu0 %v499
      %573 = vmatprep.subr.mxu0 0.0
      %574 = vmatpush1.msra.mxu0 %v503
      %575 = vmatprep.subr.mxu0 0.0
      %576 = vmatpush1.msra.mxu0 %v505
      %577 = vmatprep.subr.mxu0 0.0
      %578 = vmatpush1.msra.mxu0 %v509
      %579 = vmatprep.subr.mxu0 0.0
      %580 = vmatpush1.msra.mxu0 %v511
      %581 = vmatprep.subr.mxu0 0.0
      %582 = vmatpush1.msra.mxu0 %v515
      %583 = vmatprep.subr.mxu0 0.0
      %584 = vmatpush1.msra.mxu0 %v517
      %585 = vmatprep.subr.mxu0 0.0
      %586 = vmatpush1.msra.mxu0 %v521
      %587 = vmatprep.subr.mxu0 0.0
      %588 = vmatpush1.msra.mxu0 %v523
      %589 = vmatprep.subr.mxu0 0.0
      %590 = vmatpush1.msra.mxu0 %v527
      %591 = vmatprep.subr.mxu0 0.0
      %592 = vmatpush1.msra.mxu0 %v529
      %593 = vmatprep.subr.mxu0 0.0
      %594 = vmatpush1.msra.mxu0 %v533
      %595 = vmatprep.subr.mxu0 0.0
      %596 = vmatpush1.msra.mxu0 %v535
      %597 = vmatprep.subr.mxu0 0.0
      %598 = vmatpush1.msra.mxu0 %v539
      %599 = vmatprep.subr.mxu0 0.0
      %600 = vmatpush1.msra.mxu0 %v541
      %601 = vmatprep.subr.mxu0 0.0
      %602 = vmatpush1.msra.mxu0 %v545
      %603 = vmatprep.subr.mxu0 0.0
      %604 = vmatpush1.msra.mxu0 %v547
      %605 = vmatprep.subr.mxu0 0.0
      %606 = vmatpush1.msra.mxu0 0.0
      %607 = vmatprep.subr.mxu0 0.0
      %608 = vmatpush1.msra.mxu0 0.0
      %609 = vmatprep.subr.mxu0 0.0
      %610 = vmatpush1.msra.mxu0 0.0
      %611 = vmatprep.subr.mxu0 0.0
      %612 = vmatpush1.msra.mxu0 0.0
      %613 = vmatprep.subr.mxu0 0.0
      %614 = vmatpush1.msra.mxu0 0.0
      %615 = vmatprep.subr.mxu0 0.0
      %616 = vmatpush1.msra.mxu0 0.0
      %617 = vmatprep.subr.mxu0 0.0
      %618 = vmatpush1.msra.mxu0 0.0
      %619 = vmatprep.subr.mxu0 0.0
      %620 = vmatpush1.msra.mxu0 0.0
      %621 = vmatprep.subr.mxu0 0.0
      %622 = vmatpush1.msra.mxu0 0.0
      %623 = vmatprep.subr.mxu0 0.0
      %624 = vmatpush1.msra.mxu0 0.0
      %625 = vmatprep.mubr.f32.mxu0 %v556
      %626 = vmatmul.mubr.f32.gmra.mrb[0].mxu0 %v550
      %v627 = vpop.f32.mrb[0].mxu0
      %v628 = vadd.f32 0.0, %v627
      %v629 = vpop.f32.mrb[0].mxu0
      %630 = vmatprep.mubr.f32.mxu0 %v559
      %631 = vmatmul.mubr.f32.gmra.mrb[0].mxu0 %v552
      %v632 = vpop.f32.mrb[0].mxu0
      %v633 = vadd.f32 0.0, %v632
      %v634 = vpop.f32.mrb[0].mxu0
      %635 = vdwg.mxu0
      %v637 = vsel %vm554, %v467, 0
      %v640 = vsel %vm554, %v469, 0
      %642 = vmatprep.subr.mxu0 0.0
      %643 = vmatpush1.msra.mxu0 %v402
      %644 = vmatprep.subr.mxu0 0.0
      %645 = vmatpush1.msra.mxu0 %v403
      %646 = vmatprep.subr.mxu0 0.0
      %647 = vmatpush1.msra.mxu0 %v407
      %648 = vmatprep.subr.mxu0 0.0
      %649 = vmatpush1.msra.mxu0 %v409
      %650 = vmatprep.subr.mxu0 0.0
      %651 = vmatpush1.msra.mxu0 %v413
      %652 = vmatprep.subr.mxu0 0.0
      %653 = vmatpush1.msra.mxu0 %v415
      %654 = vmatprep.subr.mxu0 0.0
      %655 = vmatpush1.msra.mxu0 %v419
      %656 = vmatprep.subr.mxu0 0.0
      %657 = vmatpush1.msra.mxu0 %v421
      %658 = vmatprep.subr.mxu0 0.0
      %659 = vmatpush1.msra.mxu0 %v425
      %660 = vmatprep.subr.mxu0 0.0
      %661 = vmatpush1.msra.mxu0 %v427
      %662 = vmatprep.subr.mxu0 0.0
      %663 = vmatpush1.msra.mxu0 %v431
      %664 = vmatprep.subr.mxu0 0.0
      %665 = vmatpush1.msra.mxu0 %v433
      %666 = vmatprep.subr.mxu0 0.0
      %667 = vmatpush1.msra.mxu0 %v437
      %668 = vmatprep.subr.mxu0 0.0
      %669 = vmatpush1.msra.mxu0 %v439
      %670 = vmatprep.subr.mxu0 0.0
      %671 = vmatpush1.msra.mxu0 %v443
      %672 = vmatprep.subr.mxu0 0.0
      %673 = vmatpush1.msra.mxu0 %v445
      %674 = vmatprep.subr.mxu0 0.0
      %675 = vmatpush1.msra.mxu0 %v449
      %676 = vmatprep.subr.mxu0 0.0
      %677 = vmatpush1.msra.mxu0 %v451
      %678 = vmatprep.subr.mxu0 0.0
      %679 = vmatpush1.msra.mxu0 %v455
      %680 = vmatprep.subr.mxu0 0.0
      %681 = vmatpush1.msra.mxu0 %v457
      %682 = vmatprep.subr.mxu0 0.0
      %683 = vmatpush1.msra.mxu0 %v461
      %684 = vmatprep.subr.mxu0 0.0
      %685 = vmatpush1.msra.mxu0 %v463
      %686 = vmatprep.subr.mxu0 0.0
      %687 = vmatpush1.msra.mxu0 0.0
      %688 = vmatprep.subr.mxu0 0.0
      %689 = vmatpush1.msra.mxu0 0.0
      %690 = vmatprep.subr.mxu0 0.0
      %691 = vmatpush1.msra.mxu0 0.0
      %692 = vmatprep.subr.mxu0 0.0
      %693 = vmatpush1.msra.mxu0 0.0
      %694 = vmatprep.subr.mxu0 0.0
      %695 = vmatpush1.msra.mxu0 0.0
      %696 = vmatprep.subr.mxu0 0.0
      %697 = vmatpush1.msra.mxu0 0.0
      %698 = vmatprep.subr.mxu0 0.0
      %699 = vmatpush1.msra.mxu0 0.0
      %700 = vmatprep.subr.mxu0 0.0
      %701 = vmatpush1.msra.mxu0 0.0
      %702 = vmatprep.subr.mxu0 0.0
      %703 = vmatpush1.msra.mxu0 0.0
      %704 = vmatprep.subr.mxu0 0.0
      %705 = vmatpush1.msra.mxu0 0.0
      %706 = vmatprep.mubr.f32.mxu0 %v637
      %707 = vmatmul.mubr.f32.gmra.mrb[0].mxu0 %v466
      %v708 = vpop.f32.mrb[0].mxu0
      %v709 = vadd.f32 %v628, %v708
      %v710 = vpop.f32.mrb[0].mxu0
      %711 = vmatprep.mubr.f32.mxu0 %v640
      %712 = vmatmul.mubr.f32.gmra.mrb[0].mxu0 %v468
      %v713 = vpop.f32.mrb[0].mxu0
      %v714 = vadd.f32 %v633, %v713
      %v715 = vpop.f32.mrb[0].mxu0
      %716 = vdwg.mxu0
      %v717 = vld [vmem:[%s5] sm:$0xff]
      %v718 = vld [vmem:[%s5 + $0x8] sm:$0xff]
      %720 = vset.pattern.permute.xlu0 0
      %721 = vperm.xlu0 %720, %v717
      %v722 = vpop.permute.xlu0 %721
      %725 = vset.pattern.permute.xlu0 0
      %726 = vperm.xlu0 %725, %v718
      %v727 = vpop.permute.xlu0 %726
      %v729 = vmul.f32 %v709, %v722
      %v730 = vmul.f32 %v714, %v727
      %v731 = vld [vmem:[%s6] sm:$0xff]
      %v732 = vld [vmem:[%s6 + $0x8] sm:$0xff]
      %734 = vset.pattern.permute.xlu0 0
      %735 = vperm.xlu0 %734, %v731
      %v736 = vpop.permute.xlu0 %735
      %739 = vset.pattern.permute.xlu0 0
      %740 = vperm.xlu0 %739, %v732
      %v741 = vpop.permute.xlu0 %740
      %v743 = vadd.f32 %v729, %v736
      %v744 = vadd.f32 %v730, %v741
      %v745 = vmul.f32 %v743, 0.1
      %v746 = vmul.f32 %v744, 0.1
      %v747 = vmax.f32 %v743, %v745
      %v748 = vmax.f32 %v744, %v746
      %vm749 = vcmask 261120
      %750 = vst.msk [vmem:[%s298] sm:$0xff] %vm749, %v747
      %751 = vst.msk [vmem:[%s298 + $0x8] sm:$0xff] %vm749, %v748
      %p752 = scmp.lt.s32.totalorder %s18, 1
      %s753 = scalar_select %p752, %s18, 1
      %s754 = smul.addr %s753, 2
      %s755 = smul.addr %s754, 8
      %s756 = scalar_lea.vmem %s7, %s755
      // Predicated region
      $region49: #{unet_forward.12} parent=47 // pred_check
        %p757 = pneg %p193
      $region50: #{unet_forward.12} parent=47 // pred_check_branch
        %759 = sbr.rel (%p757) target = $region52
      $region51: #{unet_forward.12} parent=47 // pred_region
        _
      $region52: #{unet_forward.12} parent=47 // pred_fallthru
        _
    $region48: #{unet_forward.12} parent=5 // pred_fallthru
      _
    %p760 = scmp.le.s32.totalorder 2, %s13
    // Predicated region
    $region53: #{unet_forward.12} parent=5 // pred_check
      %p761 = pneg %p760
    $region54: #{unet_forward.12} parent=5 // pred_check_branch
      %763 = sbr.rel (%p761) target = $region56
    $region55: #{unet_forward.12} parent=5 // pred_region
      %s764 = ssub.s32 %s13, 2
      // Predicated region
      $region57: #{unet_forward.12} parent=55 // pred_check
        %p765 = pneg %p199
      $region58: #{unet_forward.12} parent=55 // pred_check_branch
        %767 = sbr.rel (%p765) target = $region60
      $region59: #{unet_forward.12} parent=55 // pred_region
        %p768 = scmp.lt.s32.totalorder %s19, 1
        %s769 = scalar_select %p768, %s19, 1
        %s770 = smul.addr %s769, 2
        %s771 = smul.addr %s770, 8
        %s772 = scalar_lea.vmem %s7, %s771
      $region60: #{unet_forward.12} parent=55 // pred_fallthru
        _
    $region56: #{unet_forward.12} parent=5 // pred_fallthru
      _
  $region6: #{unet_forward.12} parent=0 // loop_footer
    %s17 = sadd.s32 1, %s13
  $region7: #{unet_forward.12} parent=0 // loop_footer_branch
    %12 = sbr.rel target = $region3
  $region8: #{unet_forward.12} parent=0 // loop_exit
    _

// kernel: unet_forward.14
$region0: #{unet_forward.14}
  #allocation0 [shape = 'u32[]', space=smem, size = 0x4, offset = 0x4, fixed_abs, tag = 'smem constant byte address 0x4 - core index']
  #allocation1 [shape = 'u32[144,128]{1,0:T(1,128)}', space=vmem, size = 0x12000, scoped, tag = 'internal scratch']
  #allocation2 [shape = 'f32[8,138]{1,0:T(8,128)}', space=vmem, size = 0x2000, scoped, tag = 'scratch operand']
  #allocation3 [shape = 'f32[8,138]{1,0:T(8,128)}', space=vmem, size = 0x2000, scoped, tag = 'scratch operand']
  %s0 = inlined_call_operand.vmem [shape: f32[2,8,64], index: 0, kind: input, shape index: {}]
  %s1 = inlined_call_operand.vmem [shape: f32[2,8,128], index: 1, kind: input, shape index: {}]
  %s2 = inlined_call_operand.vmem [shape: f32[64,128], index: 2, kind: input, shape index: {}]
  %s3 = inlined_call_operand.vmem [shape: f32[8,88], index: 3, kind: input, shape index: {}]
  %s4 = inlined_call_operand.vmem [shape: f32[8,88], index: 4, kind: input, shape index: {}]
  %s5 = inlined_call_operand.vmem [shape: f32[8,1], index: 5, kind: input, shape index: {}]
  %s6 = inlined_call_operand.vmem [shape: f32[8,1], index: 6, kind: input, shape index: {}]
  %s7 = inlined_call_operand.vmem [shape: f32[2,8,128], index: 7, kind: output, shape index: {}]
  %s8 = sld [smem:[#allocation0]]
  $region61: #{unet_forward.14} parent=0
    _
  %s10 = ssub.s32 1, %s8
  %s11 = scalar_select 0, %s10, %s8
  loop: start=0, step=1, limit=4
  $region2: #{unet_forward.14} parent=0 // loop_pre_header
    _
  $region3: #{unet_forward.14} parent=0 // loop_header
    %s13 = sphi 0, %s17
    %p14 = scmp.ge.s32.totalorder %s13, 4
    %s23 = sphi 0, %s25
    %s26 = sphi 0, %s23
    %s27 = sphi 0, %s26
    %s43 = sphi 0, %s27
    %s49 = sphi 0, %s51
    %s52 = sphi 0, %s49
    %s53 = sphi 0, %s52
    %s69 = sphi 0, %s53
    %s73 = sphi 0, %s73
    %s75 = sphi 0, %s73
    %s76 = sphi 0, %s75
    %s90 = sphi 0, %s76
    %s94 = sphi 0, %s94
    %s96 = sphi 0, %s94
    %s97 = sphi 0, %s96
    %s111 = sphi 0, %s97
    %s115 = sphi 0, %s115
    %s117 = sphi 0, %s115
    %s118 = sphi 0, %s117
    %s132 = sphi 0, %s118
    %s136 = sphi 0, %s136
    %s138 = sphi 0, %s136
    %s139 = sphi 0, %s138
    %s153 = sphi 0, %s139
    %s157 = sphi 0, %s157
    %s159 = sphi 0, %s157
    %s160 = sphi 0, %s159
    %s174 = sphi 0, %s160
    %s180 = sphi 0, %s182
    %s183 = sphi 0, %s180
    %s184 = sphi 0, %s183
    %s200 = sphi 0, %s184
  $region4: #{unet_forward.14} parent=0 // loop_header_branch
    %16 = sbr.rel (%p14) target = $region8
  $region5: #{unet_forward.14} parent=0 // loop_body
    %s18 = ssub.s32 %s13, 1
    %s19 = ssub.s32 %s13, 2
    %s20 = sadd.s32 %s13, 1
    %s21 = ssub.s32 %s13, %s20
    %p22 = scmp.eq.s32.totalorder %s21, 0
    %s24 = sadd.s32 %s23, 1
    %s25 = scalar_select %p22, %s23, %s24
    %p28 = pneg %p22
    %p29 = scmp.eq.s32.totalorder %s13, 1
    %p30 = por %p28, %p29
    %p31 = scmp.ne.s32.totalorder %s23, %s26
    %p32 = scmp.eq.s32.totalorder %s13, 0
    %p33 = por %p31, %p32
    %p34 = scmp.ne.s32.totalorder %s23, %s26
    %p35 = scmp.eq.s32.totalorder %s18, 1
    %p36 = por %p34, %p35
    %p37 = scmp.ne.s32.totalorder %s26, %s27
    %p38 = scmp.eq.s32.totalorder %s18, 0
    %p39 = por %p37, %p38
    %p40 = scmp.ne.s32.totalorder %s26, %s27
    %p41 = scmp.eq.s32.totalorder %s19, 1
    %p42 = por %p40, %p41
    %p44 = scmp.ne.s32.totalorder %s27, %s43
    %p45 = scmp.eq.s32.totalorder %s19, 0
    %p46 = por %p44, %p45
    %s47 = ssub.s32 %s13, %s20
    %p48 = scmp.eq.s32.totalorder %s47, 0
    %s50 = sadd.s32 %s49, 1
    %s51 = scalar_select %p48, %s49, %s50
    %p54 = pneg %p48
    %p55 = scmp.eq.s32.totalorder %s13, 1
    %p56 = por %p54, %p55
    %p57 = scmp.ne.s32.totalorder %s49, %s52
    %p58 = scmp.eq.s32.totalorder %s13, 0
    %p59 = por %p57, %p58
    %p60 = scmp.ne.s32.totalorder %s49, %s52
    %p61 = scmp.eq.s32.totalorder %s18, 1
    %p62 = por %p60, %p61
    %p63 = scmp.ne.s32.totalorder %s52, %s53
    %p64 = scmp.eq.s32.totalorder %s18, 0
    %p65 = por %p63, %p64
    %p66 = scmp.ne.s32.totalorder %s52, %s53
    %p67 = scmp.eq.s32.totalorder %s19, 1
    %p68 = por %p66, %p67
    %p70 = scmp.ne.s32.totalorder %s53, %s69
    %p71 = scmp.eq.s32.totalorder %s19, 0
    %p72 = por %p70, %p71
    %s74 = sadd.s32 %s73, 1
    %p77 = scmp.eq.s32.totalorder %s13, 1
    %p78 = scmp.ne.s32.totalorder %s73, %s75
    %p79 = scmp.eq.s32.totalorder %s13, 0
    %p80 = por %p78, %p79
    %p81 = scmp.ne.s32.totalorder %s73, %s75
    %p82 = scmp.eq.s32.totalorder %s18, 1
    %p83 = por %p81, %p82
    %p84 = scmp.ne.s32.totalorder %s75, %s76
    %p85 = scmp.eq.s32.totalorder %s18, 0
    %p86 = por %p84, %p85
    %p87 = scmp.ne.s32.totalorder %s75, %s76
    %p88 = scmp.eq.s32.totalorder %s19, 1
    %p89 = por %p87, %p88
    %p91 = scmp.ne.s32.totalorder %s76, %s90
    %p92 = scmp.eq.s32.totalorder %s19, 0
    %p93 = por %p91, %p92
    %s95 = sadd.s32 %s94, 1
    %p98 = scmp.eq.s32.totalorder %s13, 1
    %p99 = scmp.ne.s32.totalorder %s94, %s96
    %p100 = scmp.eq.s32.totalorder %s13, 0
    %p101 = por %p99, %p100
    %p102 = scmp.ne.s32.totalorder %s94, %s96
    %p103 = scmp.eq.s32.totalorder %s18, 1
    %p104 = por %p102, %p103
    %p105 = scmp.ne.s32.totalorder %s96, %s97
    %p106 = scmp.eq.s32.totalorder %s18, 0
    %p107 = por %p105, %p106
    %p108 = scmp.ne.s32.totalorder %s96, %s97
    %p109 = scmp.eq.s32.totalorder %s19, 1
    %p110 = por %p108, %p109
    %p112 = scmp.ne.s32.totalorder %s97, %s111
    %p113 = scmp.eq.s32.totalorder %s19, 0
    %p114 = por %p112, %p113
    %s116 = sadd.s32 %s115, 1
    %p119 = scmp.eq.s32.totalorder %s13, 1
    %p120 = scmp.ne.s32.totalorder %s115, %s117
    %p121 = scmp.eq.s32.totalorder %s13, 0
    %p122 = por %p120, %p121
    %p123 = scmp.ne.s32.totalorder %s115, %s117
    %p124 = scmp.eq.s32.totalorder %s18, 1
    %p125 = por %p123, %p124
    %p126 = scmp.ne.s32.totalorder %s117, %s118
    %p127 = scmp.eq.s32.totalorder %s18, 0
    %p128 = por %p126, %p127
    %p129 = scmp.ne.s32.totalorder %s117, %s118
    %p130 = scmp.eq.s32.totalorder %s19, 1
    %p131 = por %p129, %p130
    %p133 = scmp.ne.s32.totalorder %s118, %s132
    %p134 = scmp.eq.s32.totalorder %s19, 0
    %p135 = por %p133, %p134
    %s137 = sadd.s32 %s136, 1
    %p140 = scmp.eq.s32.totalorder %s13, 1
    %p141 = scmp.ne.s32.totalorder %s136, %s138
    %p142 = scmp.eq.s32.totalorder %s13, 0
    %p143 = por %p141, %p142
    %p144 = scmp.ne.s32.totalorder %s136, %s138
    %p145 = scmp.eq.s32.totalorder %s18, 1
    %p146 = por %p144, %p145
    %p147 = scmp.ne.s32.totalorder %s138, %s139
    %p148 = scmp.eq.s32.totalorder %s18, 0
    %p149 = por %p147, %p148
    %p150 = scmp.ne.s32.totalorder %s138, %s139
    %p151 = scmp.eq.s32.totalorder %s19, 1
    %p152 = por %p150, %p151
    %p154 = scmp.ne.s32.totalorder %s139, %s153
    %p155 = scmp.eq.s32.totalorder %s19, 0
    %p156 = por %p154, %p155
    %s158 = sadd.s32 %s157, 1
    %p161 = scmp.eq.s32.totalorder %s13, 1
    %p162 = scmp.ne.s32.totalorder %s157, %s159
    %p163 = scmp.eq.s32.totalorder %s13, 0
    %p164 = por %p162, %p163
    %p165 = scmp.ne.s32.totalorder %s157, %s159
    %p166 = scmp.eq.s32.totalorder %s18, 1
    %p167 = por %p165, %p166
    %p168 = scmp.ne.s32.totalorder %s159, %s160
    %p169 = scmp.eq.s32.totalorder %s18, 0
    %p170 = por %p168, %p169
    %p171 = scmp.ne.s32.totalorder %s159, %s160
    %p172 = scmp.eq.s32.totalorder %s19, 1
    %p173 = por %p171, %p172
    %p175 = scmp.ne.s32.totalorder %s160, %s174
    %p176 = scmp.eq.s32.totalorder %s19, 0
    %p177 = por %p175, %p176
    %s178 = ssub.s32 %s13, %s20
    %p179 = scmp.eq.s32.totalorder %s178, 0
    %s181 = sadd.s32 %s180, 1
    %s182 = scalar_select %p179, %s180, %s181
    %p185 = pneg %p179
    %p186 = scmp.eq.s32.totalorder %s13, 1
    %p187 = por %p185, %p186
    %p188 = scmp.ne.s32.totalorder %s180, %s183
    %p189 = scmp.eq.s32.totalorder %s13, 0
    %p190 = por %p188, %p189
    %p191 = scmp.ne.s32.totalorder %s180, %s183
    %p192 = scmp.eq.s32.totalorder %s18, 1
    %p193 = por %p191, %p192
    %p194 = scmp.ne.s32.totalorder %s183, %s184
    %p195 = scmp.eq.s32.totalorder %s18, 0
    %p196 = por %p194, %p195
    %p197 = scmp.ne.s32.totalorder %s183, %s184
    %p198 = scmp.eq.s32.totalorder %s19, 1
    %p199 = por %p197, %p198
    %p201 = scmp.ne.s32.totalorder %s184, %s200
    %p202 = scmp.eq.s32.totalorder %s19, 0
    %p203 = por %p201, %p202
    %p204 = scmp.le.s32.totalorder 1, %s13
    %p205 = scmp.lt.s32.totalorder %s13, 3
    %p206 = pnand %p204, %p205
    %p207 = pneg %p206
    // Predicated region
    $region9: #{unet_forward.14} parent=5 // pred_check
      _
    $region10: #{unet_forward.14} parent=5 // pred_check_branch
      %209 = sbr.rel (%p206) target = $region12
    $region11: #{unet_forward.14} parent=5 // pred_region
      %s210 = ssub.s32 %s13, 1
      // Predicated region
      $region13: #{unet_forward.14} parent=11 // pred_check
        %p211 = pneg %p86
      $region14: #{unet_forward.14} parent=11 // pred_check_branch
        %213 = sbr.rel (%p211) target = $region16
      $region15: #{unet_forward.14} parent=11 // pred_region
        _
      $region16: #{unet_forward.14} parent=11 // pred_fallthru
        _
      // Predicated region
      $region17: #{unet_forward.14} parent=11 // pred_check
        %p214 = pneg %p107
      $region18: #{unet_forward.14} parent=11 // pred_check_branch
        %216 = sbr.rel (%p214) target = $region20
      $region19: #{unet_forward.14} parent=11 // pred_region
        _
      $region20: #{unet_forward.14} parent=11 // pred_fallthru
        _
      // Predicated region
      $region21: #{unet_forward.14} parent=11 // pred_check
        %p217 = pneg %p128
      $region22: #{unet_forward.14} parent=11 // pred_check_branch
        %219 = sbr.rel (%p217) target = $region24
      $region23: #{unet_forward.14} parent=11 // pred_region
        _
      $region24: #{unet_forward.14} parent=11 // pred_fallthru
        _
      // Predicated region
      $region25: #{unet_forward.14} parent=11 // pred_check
        %p220 = pneg %p149
      $region26: #{unet_forward.14} parent=11 // pred_check_branch
        %222 = sbr.rel (%p220) target = $region28
      $region27: #{unet_forward.14} parent=11 // pred_region
        _
      $region28: #{unet_forward.14} parent=11 // pred_fallthru
        _
      // Predicated region
      $region29: #{unet_forward.14} parent=11 // pred_check
        %p223 = pneg %p170
      $region30: #{unet_forward.14} parent=11 // pred_check_branch
        %225 = sbr.rel (%p223) target = $region32
      $region31: #{unet_forward.14} parent=11 // pred_region
        _
      $region32: #{unet_forward.14} parent=11 // pred_fallthru
        _
    $region12: #{unet_forward.14} parent=5 // pred_fallthru
      _
    %p226 = scmp.lt.s32.totalorder %s13, 2
    // Predicated region
    $region33: #{unet_forward.14} parent=5 // pred_check
      %p227 = pneg %p226
    $region34: #{unet_forward.14} parent=5 // pred_check_branch
      %229 = sbr.rel (%p227) target = $region36
    $region35: #{unet_forward.14} parent=5 // pred_region
      // Predicated region
      $region37: #{unet_forward.14} parent=35 // pred_check
        %p230 = pneg %p33
      $region38: #{unet_forward.14} parent=35 // pred_check_branch
        %232 = sbr.rel (%p230) target = $region40
      $region39: #{unet_forward.14} parent=35 // pred_region
        %p233 = scmp.lt.s32.totalorder %s13, 1
        %s234 = scalar_select %p233, %s13, 1
        %s235 = smul.addr %s234, 8
        %s236 = scalar_lea.vmem %s0, %s235
      $region40: #{unet_forward.14} parent=35 // pred_fallthru
        _
      // Predicated region
      $region41: #{unet_forward.14} parent=35 // pred_check
        %p237 = pneg %p59
      $region42: #{unet_forward.14} parent=35 // pred_check_branch
        %239 = sbr.rel (%p237) target = $region44
      $region43: #{unet_forward.14} parent=35 // pred_region
        %p240 = scmp.lt.s32.totalorder %s13, 1
        %s241 = scalar_select %p240, %s13, 1
        %s242 = smul.addr %s241, 8
        %s243 = scalar_lea.vmem %s1, %s242
      $region44: #{unet_forward.14} parent=35 // pred_fallthru
        _
    $region36: #{unet_forward.14} parent=5 // pred_fallthru
      _
    %p244 = scmp.le.s32.totalorder 1, %s13
    %p245 = scmp.lt.s32.totalorder %s13, 3
    %p246 = pnand %p244, %p245
    %p247 = pneg %p246
    // Predicated region
    $region45: #{unet_forward.14} parent=5 // pred_check
      _
    $region46: #{unet_forward.14} parent=5 // pred_check_branch
      %249 = sbr.rel (%p246) target = $region48
    $region47: #{unet_forward.14} parent=5 // pred_region
      %s250 = ssub.s32 %s13, 1
      %p251 = scmp.lt.s32.totalorder %s18, 1
      %s252 = scalar_select %p251, %s18, 1
      %s253 = smul.addr %s252, 8
      %s254 = scalar_lea.vmem %s0, %s253
      %p255 = pneg %p39
      %p256 = pneg %p36
      %p257 = scmp.lt.s32.totalorder %s18, 1
      %s258 = scalar_select %p257, %s18, 1
      %s259 = smul.addr %s258, 8
      %s260 = scalar_lea.vmem %s1, %s259
      %p261 = pneg %p65
      %p262 = pneg %p62
      %p263 = pneg %p86
      %p264 = pneg %p83
      %p265 = pneg %p107
      %p266 = pneg %p104
      %p267 = pneg %p128
      %p268 = pneg %p125
      %p269 = pneg %p149
      %p270 = pneg %p146
      %p271 = pneg %p170
      %p272 = pneg %p167
      %p273 = pneg %p196
      %p274 = pneg %p193
      %p275 = scmp.lt.s32.totalorder %s18, 1
      %s276 = scalar_select %p275, %s18, 1
      %s277 = smul.addr %s276, 8
      %s278 = scalar_lea.vmem %s7, %s277
      %p279 = scmp.lt.s32.totalorder %s18, 1
      %s280 = scalar_select %p279, %s18, 1
      %s281 = smul.addr %s280, 8
      %s282 = scalar_lea.vmem %s0, %s281
      %p283 = scmp.lt.s32.totalorder %s18, 1
      %s284 = scalar_select %p283, %s18, 1
      %s285 = smul.addr %s284, 8
      %s286 = scalar_lea.vmem %s1, %s285
      %p287 = scmp.lt.s32.totalorder %s18, 1
      %s288 = scalar_select %p287, %s18, 1
      %s289 = smul.addr %s288, 8
      %s290 = scalar_lea.vmem %s7, %s289
      %v291 = vld [vmem:[%s282] sm:$0xff]
      %v292 = vld [vmem:[%s2] sm:$0xff]
      %v293 = vld [vmem:[%s2 + $0x8] sm:$0xff]
      %v294 = vld [vmem:[%s2 + $0x10] sm:$0xff]
      %v295 = vld [vmem:[%s2 + $0x18] sm:$0xff]
      %v296 = vld [vmem:[%s2 + $0x20] sm:$0xff]
      %v297 = vld [vmem:[%s2 + $0x28] sm:$0xff]
      %v298 = vld [vmem:[%s2 + $0x30] sm:$0xff]
      %v299 = vld [vmem:[%s2 + $0x38] sm:$0xff]
      %vm300 = vcmask 523264
      %v302 = vsel %vm300, %v291, 0
      %304 = vmatprep.subr.mxu0 0.0
      %305 = vmatpush1.msra.mxu0 %v292
      %306 = vmatprep.subr.mxu0 0.0
      %307 = vmatpush1.msra.mxu0 %v293
      %308 = vmatprep.subr.mxu0 0.0
      %309 = vmatpush1.msra.mxu0 %v294
      %310 = vmatprep.subr.mxu0 0.0
      %311 = vmatpush1.msra.mxu0 %v295
      %312 = vmatprep.subr.mxu0 0.0
      %313 = vmatpush1.msra.mxu0 %v296
      %314 = vmatprep.subr.mxu0 0.0
      %315 = vmatpush1.msra.mxu0 %v297
      %316 = vmatprep.subr.mxu0 0.0
      %317 = vmatpush1.msra.mxu0 %v298
      %318 = vmatprep.subr.mxu0 0.0
      %319 = vmatpush1.msra.mxu0 %v299
      %320 = vmatprep.subr.mxu0 0.0
      %321 = vmatpush1.msra.mxu0 0.0
      %322 = vmatprep.subr.mxu0 0.0
      %323 = vmatpush1.msra.mxu0 0.0
      %324 = vmatprep.subr.mxu0 0.0
      %325 = vmatpush1.msra.mxu0 0.0
      %326 = vmatprep.subr.mxu0 0.0
      %327 = vmatpush1.msra.mxu0 0.0
      %328 = vmatprep.subr.mxu0 0.0
      %329 = vmatpush1.msra.mxu0 0.0
      %330 = vmatprep.subr.mxu0 0.0
      %331 = vmatpush1.msra.mxu0 0.0
      %332 = vmatprep.subr.mxu0 0.0
      %333 = vmatpush1.msra.mxu0 0.0
      %334 = vmatprep.subr.mxu0 0.0
      %335 = vmatpush1.msra.mxu0 0.0
      %336 = vmatprep.subr.mxu0 0.0
      %337 = vmatpush1.msra.mxu0 0.0
      %338 = vmatprep.subr.mxu0 0.0
      %339 = vmatpush1.msra.mxu0 0.0
      %340 = vmatprep.subr.mxu0 0.0
      %341 = vmatpush1.msra.mxu0 0.0
      %342 = vmatprep.subr.mxu0 0.0
      %343 = vmatpush1.msra.mxu0 0.0
      %344 = vmatprep.subr.mxu0 0.0
      %345 = vmatpush1.msra.mxu0 0.0
      %346 = vmatprep.subr.mxu0 0.0
      %347 = vmatpush1.msra.mxu0 0.0
      %348 = vmatprep.subr.mxu0 0.0
      %349 = vmatpush1.msra.mxu0 0.0
      %350 = vmatprep.subr.mxu0 0.0
      %351 = vmatpush1.msra.mxu0 0.0
      %352 = vmatprep.subr.mxu0 0.0
      %353 = vmatpush1.msra.mxu0 0.0
      %354 = vmatprep.subr.mxu0 0.0
      %355 = vmatpush1.msra.mxu0 0.0
      %356 = vmatprep.subr.mxu0 0.0
      %357 = vmatpush1.msra.mxu0 0.0
      %358 = vmatprep.subr.mxu0 0.0
      %359 = vmatpush1.msra.mxu0 0.0
      %360 = vmatprep.subr.mxu0 0.0
      %361 = vmatpush1.msra.mxu0 0.0
      %362 = vmatprep.subr.mxu0 0.0
      %363 = vmatpush1.msra.mxu0 0.0
      %364 = vmatprep.subr.mxu0 0.0
      %365 = vmatpush1.msra.mxu0 0.0
      %366 = vmatprep.subr.mxu0 0.0
      %367 = vmatpush1.msra.mxu0 0.0
      %368 = vmatprep.mubr.f32.mxu0 0.0
      %369 = vmatmul.mubr.f32.gmra.mrb[0].mxu0 %v302
      %v370 = vpop.f32.mrb[0].mxu0
      %v371 = vadd.f32 0.0, %v370
      %v372 = vpop.f32.mrb[0].mxu0
      %373 = vdwg.mxu0
      %vm374 = vcmask 39936
      %375 = vst.msk [vmem:[#allocation2] sm:$0xff] %vm374, 0.0
      %vm376 = vcmask 80936
      %377 = vst.msk [vmem:[#allocation2 + $0x8] sm:$0xff] %vm376, 0.0
      %379 = vrot.lane.b32.xlu0 %v371, 5
      %v380 = vpop.permute.xlu0 %379
      %vm382 = vcmask 1047592
      %383 = vst.msk [vmem:[#allocation2] sm:$0xff] %vm382, %v380
      %384 = vst.msk [vmem:[#allocation2 + $0x8] sm:$0xff] %vm374, %v380
      %v385 = vld [vmem:[#allocation2] sm:$0xff]
      %v386 = vld [vmem:[#allocation2 + $0x8] sm:$0xff]
      %389 = vrot.lane.b32.xlu0 %v385, 127
      %v390 = vpop.permute.xlu0 %389
      %391 = vrot.lane.b32.xlu0 %v386, 127
      %v392 = vpop.permute.xlu0 %391
      %vm393 = vcmask 1039360
      %v394 = vsel %vm393, %v390, %v392
      %396 = vrot.lane.b32.xlu0 %v385, 126
      %v397 = vpop.permute.xlu0 %396
      %398 = vrot.lane.b32.xlu0 %v386, 126
      %v399 = vpop.permute.xlu0 %398
      %vm400 = vcmask 1031168
      %v401 = vsel %vm400, %v397, %v399
      %403 = vrot.lane.b32.xlu0 %v385, 125
      %v404 = vpop.permute.xlu0 %403
      %405 = vrot.lane.b32.xlu0 %v386, 125
      %v406 = vpop.permute.xlu0 %405
      %vm407 = vcmask 1022976
      %v408 = vsel %vm407, %v404, %v406
      %410 = vrot.lane.b32.xlu0 %v385, 124
      %v411 = vpop.permute.xlu0 %410
      %412 = vrot.lane.b32.xlu0 %v386, 124
      %v413 = vpop.permute.xlu0 %412
      %vm414 = vcmask 1014784
      %v415 = vsel %vm414, %v411, %v413
      %417 = vrot.lane.b32.xlu0 %v385, 123
      %v418 = vpop.permute.xlu0 %417
      %419 = vrot.lane.b32.xlu0 %v386, 123
      %v420 = vpop.permute.xlu0 %419
      %vm421 = vcmask 1006592
      %v422 = vsel %vm421, %v418, %v420
      %424 = vrot.lane.b32.xlu0 %v385, 122
      %v425 = vpop.permute.xlu0 %424
      %426 = vrot.lane.b32.xlu0 %v386, 122
      %v427 = vpop.permute.xlu0 %426
      %vm428 = vcmask 998400
      %v429 = vsel %vm428, %v425, %v427
      %431 = vrot.lane.b32.xlu0 %v385, 121
      %v432 = vpop.permute.xlu0 %431
      %433 = vrot.lane.b32.xlu0 %v386, 121
      %v434 = vpop.permute.xlu0 %433
      %vm435 = vcmask 990208
      %v436 = vsel %vm435, %v432, %v434
      %438 = vrot.lane.b32.xlu0 %v385, 120
      %v439 = vpop.permute.xlu0 %438
      %440 = vrot.lane.b32.xlu0 %v386, 120
      %v441 = vpop.permute.xlu0 %440
      %vm442 = vcmask 982016
      %v443 = vsel %vm442, %v439, %v441
      %445 = vrot.lane.b32.xlu0 %v385, 119
      %v446 = vpop.permute.xlu0 %445
      %447 = vrot.lane.b32.xlu0 %v386, 119
      %v448 = vpop.permute.xlu0 %447
      %vm449 = vcmask 973824
      %v450 = vsel %vm449, %v446, %v448
      %452 = vrot.lane.b32.xlu0 %v385, 118
      %v453 = vpop.permute.xlu0 %452
      %454 = vrot.lane.b32.xlu0 %v386, 118
      %v455 = vpop.permute.xlu0 %454
      %vm456 = vcmask 965632
      %v457 = vsel %vm456, %v453, %v455
      %v459 = vld [vmem:[%s3] sm:$0xff]
      %v460 = vld [vmem:[%s286] sm:$0xff]
      %461 = vst.msk [vmem:[#allocation3] sm:$0xff] %vm374, 0.0
      %462 = vst.msk [vmem:[#allocation3 + $0x8] sm:$0xff] %vm376, 0.0
      %464 = vrot.lane.b32.xlu0 %v460, 5
      %v465 = vpop.permute.xlu0 %464
      %467 = vst.msk [vmem:[#allocation3] sm:$0xff] %vm382, %v465
      %468 = vst.msk [vmem:[#allocation3 + $0x8] sm:$0xff] %vm374, %v465
      %v469 = vld [vmem:[#allocation3] sm:$0xff]
      %v470 = vld [vmem:[#allocation3 + $0x8] sm:$0xff]
      %473 = vrot.lane.b32.xlu0 %v469, 127
      %v474 = vpop.permute.xlu0 %473
      %475 = vrot.lane.b32.xlu0 %v470, 127
      %v476 = vpop.permute.xlu0 %475
      %v477 = vsel %vm393, %v474, %v476
      %479 = vrot.lane.b32.xlu0 %v469, 126
      %v480 = vpop.permute.xlu0 %479
      %481 = vrot.lane.b32.xlu0 %v470, 126
      %v482 = vpop.permute.xlu0 %481
      %v483 = vsel %vm400, %v480, %v482
      %485 = vrot.lane.b32.xlu0 %v469, 125
      %v486 = vpop.permute.xlu0 %485
      %487 = vrot.lane.b32.xlu0 %v470, 125
      %v488 = vpop.permute.xlu0 %487
      %v489 = vsel %vm407, %v486, %v488
      %491 = vrot.lane.b32.xlu0 %v469, 124
      %v492 = vpop.permute.xlu0 %491
      %493 = vrot.lane.b32.xlu0 %v470, 124
      %v494 = vpop.permute.xlu0 %493
      %v495 = vsel %vm414, %v492, %v494
      %497 = vrot.lane.b32.xlu0 %v469, 123
      %v498 = vpop.permute.xlu0 %497
      %499 = vrot.lane.b32.xlu0 %v470, 123
      %v500 = vpop.permute.xlu0 %499
      %v501 = vsel %vm421, %v498, %v500
      %503 = vrot.lane.b32.xlu0 %v469, 122
      %v504 = vpop.permute.xlu0 %503
      %505 = vrot.lane.b32.xlu0 %v470, 122
      %v506 = vpop.permute.xlu0 %505
      %v507 = vsel %vm428, %v504, %v506
      %509 = vrot.lane.b32.xlu0 %v469, 121
      %v510 = vpop.permute.xlu0 %509
      %511 = vrot.lane.b32.xlu0 %v470, 121
      %v512 = vpop.permute.xlu0 %511
      %v513 = vsel %vm435, %v510, %v512
      %515 = vrot.lane.b32.xlu0 %v469, 120
      %v516 = vpop.permute.xlu0 %515
      %517 = vrot.lane.b32.xlu0 %v470, 120
      %v518 = vpop.permute.xlu0 %517
      %v519 = vsel %vm442, %v516, %v518
      %521 = vrot.lane.b32.xlu0 %v469, 119
      %v522 = vpop.permute.xlu0 %521
      %523 = vrot.lane.b32.xlu0 %v470, 119
      %v524 = vpop.permute.xlu0 %523
      %v525 = vsel %vm449, %v522, %v524
      %527 = vrot.lane.b32.xlu0 %v469, 118
      %v528 = vpop.permute.xlu0 %527
      %529 = vrot.lane.b32.xlu0 %v470, 118
      %v530 = vpop.permute.xlu0 %529
      %v531 = vsel %vm456, %v528, %v530
      %v533 = vld [vmem:[%s4] sm:$0xff]
      %vm534 = vcmask 719872
      %v536 = vsel %vm534, %v533, 0
      %538 = vmatprep.subr.mxu0 0.0
      %539 = vmatpush1.msra.mxu0 %v469
      %540 = vmatprep.subr.mxu0 0.0
      %541 = vmatpush1.msra.mxu0 %v477
      %542 = vmatprep.subr.mxu0 0.0
      %543 = vmatpush1.msra.mxu0 %v483
      %544 = vmatprep.subr.mxu0 0.0
      %545 = vmatpush1.msra.mxu0 %v489
      %546 = vmatprep.subr.mxu0 0.0
      %547 = vmatpush1.msra.mxu0 %v495
      %548 = vmatprep.subr.mxu0 0.0
      %549 = vmatpush1.msra.mxu0 %v501
      %550 = vmatprep.subr.mxu0 0.0
      %551 = vmatpush1.msra.mxu0 %v507
      %552 = vmatprep.subr.mxu0 0.0
      %553 = vmatpush1.msra.mxu0 %v513
      %554 = vmatprep.subr.mxu0 0.0
      %555 = vmatpush1.msra.mxu0 %v519
      %556 = vmatprep.subr.mxu0 0.0
      %557 = vmatpush1.msra.mxu0 %v525
      %558 = vmatprep.subr.mxu0 0.0
      %559 = vmatpush1.msra.mxu0 %v531
      %560 = vmatprep.subr.mxu0 0.0
      %561 = vmatpush1.msra.mxu0 0.0
      %562 = vmatprep.subr.mxu0 0.0
      %563 = vmatpush1.msra.mxu0 0.0
      %564 = vmatprep.subr.mxu0 0.0
      %565 = vmatpush1.msra.mxu0 0.0
      %566 = vmatprep.subr.mxu0 0.0
      %567 = vmatpush1.msra.mxu0 0.0
      %568 = vmatprep.subr.mxu0 0.0
      %569 = vmatpush1.msra.mxu0 0.0
      %570 = vmatprep.subr.mxu0 0.0
      %571 = vmatpush1.msra.mxu0 0.0
      %572 = vmatprep.subr.mxu0 0.0
      %573 = vmatpush1.msra.mxu0 0.0
      %574 = vmatprep.subr.mxu0 0.0
      %575 = vmatpush1.msra.mxu0 0.0
      %576 = vmatprep.subr.mxu0 0.0
      %577 = vmatpush1.msra.mxu0 0.0
      %578 = vmatprep.subr.mxu0 0.0
      %579 = vmatpush1.msra.mxu0 0.0
      %580 = vmatprep.subr.mxu0 0.0
      %581 = vmatpush1.msra.mxu0 0.0
      %582 = vmatprep.subr.mxu0 0.0
      %583 = vmatpush1.msra.mxu0 0.0
      %584 = vmatprep.subr.mxu0 0.0
      %585 = vmatpush1.msra.mxu0 0.0
      %586 = vmatprep.subr.mxu0 0.0
      %587 = vmatpush1.msra.mxu0 0.0
      %588 = vmatprep.subr.mxu0 0.0
      %589 = vmatpush1.msra.mxu0 0.0
      %590 = vmatprep.subr.mxu0 0.0
      %591 = vmatpush1.msra.mxu0 0.0
      %592 = vmatprep.subr.mxu0 0.0
      %593 = vmatpush1.msra.mxu0 0.0
      %594 = vmatprep.subr.mxu0 0.0
      %595 = vmatpush1.msra.mxu0 0.0
      %596 = vmatprep.subr.mxu0 0.0
      %597 = vmatpush1.msra.mxu0 0.0
      %598 = vmatprep.subr.mxu0 0.0
      %599 = vmatpush1.msra.mxu0 0.0
      %600 = vmatprep.subr.mxu0 0.0
      %601 = vmatpush1.msra.mxu0 0.0
      %602 = vmatprep.mubr.f32.mxu0 0.0
      %603 = vmatmul.mubr.f32.gmra.mrb[0].mxu0 %v536
      %v604 = vpop.f32.mrb[0].mxu0
      %v605 = vadd.f32 0.0, %v604
      %v606 = vpop.f32.mrb[0].mxu0
      %607 = vdwg.mxu0
      %v609 = vsel %vm534, %v459, 0
      %611 = vmatprep.subr.mxu0 0.0
      %612 = vmatpush1.msra.mxu0 %v385
      %613 = vmatprep.subr.mxu0 0.0
      %614 = vmatpush1.msra.mxu0 %v394
      %615 = vmatprep.subr.mxu0 0.0
      %616 = vmatpush1.msra.mxu0 %v401
      %617 = vmatprep.subr.mxu0 0.0
      %618 = vmatpush1.msra.mxu0 %v408
      %619 = vmatprep.subr.mxu0 0.0
      %620 = vmatpush1.msra.mxu0 %v415
      %621 = vmatprep.subr.mxu0 0.0
      %622 = vmatpush1.msra.mxu0 %v422
      %623 = vmatprep.subr.mxu0 0.0
      %624 = vmatpush1.msra.mxu0 %v429
      %625 = vmatprep.subr.mxu0 0.0
      %626 = vmatpush1.msra.mxu0 %v436
      %627 = vmatprep.subr.mxu0 0.0
      %628 = vmatpush1.msra.mxu0 %v443
      %629 = vmatprep.subr.mxu0 0.0
      %630 = vmatpush1.msra.mxu0 %v450
      %631 = vmatprep.subr.mxu0 0.0
      %632 = vmatpush1.msra.mxu0 %v457
      %633 = vmatprep.subr.mxu0 0.0
      %634 = vmatpush1.msra.mxu0 0.0
      %635 = vmatprep.subr.mxu0 0.0
      %636 = vmatpush1.msra.mxu0 0.0
      %637 = vmatprep.subr.mxu0 0.0
      %638 = vmatpush1.msra.mxu0 0.0
      %639 = vmatprep.subr.mxu0 0.0
      %640 = vmatpush1.msra.mxu0 0.0
      %641 = vmatprep.subr.mxu0 0.0
      %642 = vmatpush1.msra.mxu0 0.0
      %643 = vmatprep.subr.mxu0 0.0
      %644 = vmatpush1.msra.mxu0 0.0
      %645 = vmatprep.subr.mxu0 0.0
      %646 = vmatpush1.msra.mxu0 0.0
      %647 = vmatprep.subr.mxu0 0.0
      %648 = vmatpush1.msra.mxu0 0.0
      %649 = vmatprep.subr.mxu0 0.0
      %650 = vmatpush1.msra.mxu0 0.0
      %651 = vmatprep.subr.mxu0 0.0
      %652 = vmatpush1.msra.mxu0 0.0
      %653 = vmatprep.subr.mxu0 0.0
      %654 = vmatpush1.msra.mxu0 0.0
      %655 = vmatprep.subr.mxu0 0.0
      %656 = vmatpush1.msra.mxu0 0.0
      %657 = vmatprep.subr.mxu0 0.0
      %658 = vmatpush1.msra.mxu0 0.0
      %659 = vmatprep.subr.mxu0 0.0
      %660 = vmatpush1.msra.mxu0 0.0
      %661 = vmatprep.subr.mxu0 0.0
      %662 = vmatpush1.msra.mxu0 0.0
      %663 = vmatprep.subr.mxu0 0.0
      %664 = vmatpush1.msra.mxu0 0.0
      %665 = vmatprep.subr.mxu0 0.0
      %666 = vmatpush1.msra.mxu0 0.0
      %667 = vmatprep.subr.mxu0 0.0
      %668 = vmatpush1.msra.mxu0 0.0
      %669 = vmatprep.subr.mxu0 0.0
      %670 = vmatpush1.msra.mxu0 0.0
      %671 = vmatprep.subr.mxu0 0.0
      %672 = vmatpush1.msra.mxu0 0.0
      %673 = vmatprep.subr.mxu0 0.0
      %674 = vmatpush1.msra.mxu0 0.0
      %675 = vmatprep.mubr.f32.mxu0 0.0
      %676 = vmatmul.mubr.f32.gmra.mrb[0].mxu0 %v609
      %v677 = vpop.f32.mrb[0].mxu0
      %v678 = vadd.f32 %v605, %v677
      %v679 = vpop.f32.mrb[0].mxu0
      %680 = vdwg.mxu0
      %v681 = vld [vmem:[%s5] sm:$0xff]
      %683 = vset.pattern.permute.xlu0 0
      %684 = vperm.xlu0 %683, %v681
      %v685 = vpop.permute.xlu0 %684
      %v687 = vmul.f32 %v678, %v685
      %v688 = vld [vmem:[%s6] sm:$0xff]
      %690 = vset.pattern.permute.xlu0 0
      %691 = vperm.xlu0 %690, %v688
      %v692 = vpop.permute.xlu0 %691
      %v694 = vadd.f32 %v687, %v692
      %v695 = vmul.f32 %v694, 0.1
      %v696 = vmax.f32 %v694, %v695
      %697 = vst [vmem:[%s290] sm:$0xff] %v696
      %p698 = scmp.lt.s32.totalorder %s18, 1
      %s699 = scalar_select %p698, %s18, 1
      %s700 = smul.addr %s699, 8
      %s701 = scalar_lea.vmem %s7, %s700
      // Predicated region
      $region49: #{unet_forward.14} parent=47 // pred_check
        %p702 = pneg %p193
      $region50: #{unet_forward.14} parent=47 // pred_check_branch
        %704 = sbr.rel (%p702) target = $region52
      $region51: #{unet_forward.14} parent=47 // pred_region
        _
      $region52: #{unet_forward.14} parent=47 // pred_fallthru
        _
    $region48: #{unet_forward.14} parent=5 // pred_fallthru
      _
    %p705 = scmp.le.s32.totalorder 2, %s13
    // Predicated region
    $region53: #{unet_forward.14} parent=5 // pred_check
      %p706 = pneg %p705
    $region54: #{unet_forward.14} parent=5 // pred_check_branch
      %708 = sbr.rel (%p706) target = $region56
    $region55: #{unet_forward.14} parent=5 // pred_region
      %s709 = ssub.s32 %s13, 2
      // Predicated region
      $region57: #{unet_forward.14} parent=55 // pred_check
        %p710 = pneg %p199
      $region58: #{unet_forward.14} parent=55 // pred_check_branch
        %712 = sbr.rel (%p710) target = $region60
      $region59: #{unet_forward.14} parent=55 // pred_region
        %p713 = scmp.lt.s32.totalorder %s19, 1
        %s714 = scalar_select %p713, %s19, 1
        %s715 = smul.addr %s714, 8
        %s716 = scalar_lea.vmem %s7, %s715
      $region60: #{unet_forward.14} parent=55 // pred_fallthru
        _
    $region56: #{unet_forward.14} parent=5 // pred_fallthru
      _
  $region6: #{unet_forward.14} parent=0 // loop_footer
    %s17 = sadd.s32 1, %s13
  $region7: #{unet_forward.14} parent=0 // loop_footer_branch
    %12 = sbr.rel target = $region3
  $region8: #{unet_forward.14} parent=0 // loop_exit
    _

</llo_original>
